<compile_context>
chip_gen: v7x
topology: tpu7x:2x2x1
jax: 0.10.0
libtpu: 0.0.40
codegen_flags: <defaults>
</compile_context>

<pallas_src>
import functools

import jax
import jax.numpy as jnp
from jax.experimental import pallas as pl
from jax.experimental.pallas import tpu as pltpu


# ------------------------------ model definition -----------------------------

# (cin, cout, kernel_size, stride, padding, residual) — all activations ReLU.
LAYER_CFG = [
    (768, 128, 3, 1, 1, False),
    (128, 128, 3, 2, 1, False),
    (128, 128, 3, 1, 1, True),
    (128, 128, 3, 1, 1, True),
    (128, 128, 3, 2, 1, False),
    (128, 128, 3, 1, 1, True),
    (128, 128, 3, 1, 1, True),
    (128, 128, 3, 1, 1, True),
    (128, 128, 3, 1, 0, False),
]
N_LAYERS = len(LAYER_CFG)


def _round_up(x, m):
    return ((x + m - 1) // m) * m


def _layer_geometry(T0, G, seg0):
    """Static per-layer geometry for the flat batch-packed layout."""
    geo = []
    t_in = T0
    for idx, (cin, cout, k, s, p, res) in enumerate(LAYER_CFG):
        t_pad = t_in + 2 * p
        if idx == 0:
            seg = seg0
        else:
            # Phase-align the per-element segment length with the stride so a
            # single strided read covers every batch element at once.
            seg = _round_up(t_pad, s)
        assert seg % s == 0 and seg >= t_pad
        t_out = (t_pad - k) // s + 1
        out_seg = seg // s                    # output-row stride per element
        m_rows = (G - 1) * out_seg + t_out    # matmul M: covers all valid rows
        geo.append(dict(cin=cin, cout=cout, k=k, stride=s, pad=p, residual=res,
                        seg=seg, t_out=t_out, out_seg=out_seg, m_rows=m_rows))
        t_in = t_out
    for idx in range(N_LAYERS - 1):           # staging info for the next layer
        geo[idx]["seg_next"] = geo[idx + 1]["seg"]
        geo[idx]["pad_next"] = geo[idx + 1]["pad"]
    return geo, t_in


# ------------------------------ fused Pallas kernel ---------------------------

def _fused_kernel(x_ref, *args, geo, G):
    """Runs the whole conv stack for G packed batch elements, all in VMEM."""
    n = N_LAYERS
    w_refs = args[0:n]                 # (K, Cin, Cout) bf16, BN scale folded
    b_refs = args[n:2 * n]             # (1, Cout) f32, conv bias + BN shift
    out_ref = args[2 * n]              # (G, T_final, Cout)
    bufs = (args[2 * n + 1], args[2 * n + 2])   # f32 ping-pong staging buffers

    for l, lc in enumerate(geo):
        k, stride, pad = lc["k"], lc["stride"], lc["pad"]
        m_rows, out_seg, t_out = lc["m_rows"], lc["out_seg"], lc["t_out"]

        # Layer 0 reads the pre-padded input block directly (no staging copy).
        src = x_ref if l == 0 else bufs[(l - 1) % 2]

        # K-tap accumulation on the MXU (bf16 operands, f32 accumulation).
        acc = None
        for j in range(k):
            if stride == 1:
                tap = src[j:j + m_rows, :]
            else:
                # Strided sublane read: only the needed output rows are computed.
                tap = src[pl.ds(j, m_rows, stride=stride), :]
            part = jnp.dot(tap.astype(jnp.bfloat16), w_refs[l][j],
                           preferred_element_type=jnp.float32)
            acc = part if acc is None else acc + part

        y = acc + b_refs[l][...]                       # folded bias + BN shift
        if lc["residual"]:
            # Residual layers are stride-1 'same' convs: the addend is the
            # layer input shifted by `pad` rows in the flat buffer.
            y = y + src[pad:pad + m_rows, :].astype(jnp.float32)
        act = jnp.maximum(y, 0.0)

        if l == n - 1:
            for g in range(G):
                out_ref[g] = act[g * out_seg:g * out_seg + t_out, :].astype(
                    out_ref.dtype)
        else:
            # Stage the next layer's zero-padded input (per-element segments).
            dst = bufs[l % 2]
            seg_n, pad_n = lc["seg_next"], lc["pad_next"]
            used = G * seg_n
            dst[0:used, :] = jnp.zeros((used, dst.shape[1]), dst.dtype)
            for g in range(G):
                dst[g * seg_n + pad_n:g * seg_n + pad_n + t_out, :] = (
                    act[g * out_seg:g * out_seg + t_out, :].astype(dst.dtype))


# ------------------------------ wrapper ---------------------------------------

def audio_encoder_w2v_impl(x, params):
    """x: (B, 768, T) float32 (NCT) -> (B, 128, T_final)."""
    B, C0, T0 = x.shape
    assert C0 == LAYER_CFG[0][0]
    for (cin, cout, k, s, p, res) in LAYER_CFG:
        if res:
            assert s == 1 and cin == cout and k == 2 * p + 1, "residual needs 'same' conv"

    p0 = LAYER_CFG[0][4]

    # Batch packing: G elements per grid step so the matmul M is ~G*T rows
    # (targets ~256 rows to fill the MXU on v6e/v7x).
    G = max(1, min(B, -(-256 // max(T0 + 2 * p0, 1))))
    # Keep the (double-buffered) layer-0 input block comfortably inside VMEM.
    blk_bytes = (T0 + 2 * p0 + 16) * C0 * 2
    G = max(1, min(G, (24 << 20) // max(2 * blk_bytes, 1)))
    Bp = _round_up(B, G)
    n_groups = Bp // G
    # NOTE: for tiny B this collapses to a single grid step (one v7x TC idle);
    # the time-tiling TODO above is the clean way to restore grid >= 2.

    seg0 = T0 + 2 * p0
    if n_groups > 1:
        seg0 = _round_up(seg0, 16)   # non-full input blocks must tile cleanly

    geo, T_final = _layer_geometry(T0, G, seg0)
    C_final = LAYER_CFG[-1][1]
    seg_scratch = max(lc["seg"] for lc in geo[1:])

    # Fold eval-mode BatchNorm + conv bias in f32; cast folded weights to bf16.
    eps = 1e-5
    w_list, b_list = [], []
    for (w, b, gamma, beta, rmean, rvar), (cin, cout, k, s, p, res) in zip(params, LAYER_CFG):
        scale = gamma / jnp.sqrt(rvar + eps)                                  # (Cout,)
        w_fold = jnp.transpose(w, (2, 1, 0)).astype(jnp.float32) * scale[None, None, :]
        bias_eff = ((b - rmean) * scale + beta).reshape(1, cout)              # (1, Cout)
        w_list.append(w_fold.astype(jnp.bfloat16))                            # (K, Cin, Cout)
        b_list.append(bias_eff.astype(jnp.float32))

    # NCT -> NTC once, pre-pad time (layer-0 halo + segment alignment), flatten
    # batch segments into rows, cast to bf16 for the MXU / HBM read.
    x_ntc = jnp.transpose(x, (0, 2, 1))                                       # (B, T0, C0)
    x_pad = jnp.pad(x_ntc, ((0, Bp - B), (p0, seg0 - T0 - p0), (0, 0)))
    x_flat = x_pad.reshape(Bp * seg0, C0).astype(jnp.bfloat16)                # (Bp*seg0, C0)

    def const_spec(shape):
        nd = len(shape)
        return pl.BlockSpec(shape, lambda g, _nd=nd: (0,) * _nd)

    in_specs = [pl.BlockSpec((G * seg0, C0), lambda g: (g, 0))]
    in_specs += [const_spec(w.shape) for w in w_list]
    in_specs += [const_spec(bb.shape) for bb in b_list]

    out = pl.pallas_call(
        functools.partial(_fused_kernel, geo=geo, G=G),
        out_shape=jax.ShapeDtypeStruct((Bp, T_final, C_final), jnp.float32),
        grid=(n_groups,),
        in_specs=in_specs,
        out_specs=pl.BlockSpec((G, T_final, C_final), lambda g: (g, 0, 0)),
        scratch_shapes=[
            pltpu.VMEM((G * seg_scratch, 128), jnp.float32),   # ping
            pltpu.VMEM((G * seg_scratch, 128), jnp.float32),   # pong
        ],
        compiler_params=pltpu.CompilerParams(
            dimension_semantics=("parallel",)),
    )(x_flat, *w_list, *b_list)

    out = out[:B]                             # drop batch padding
    return jnp.transpose(out, (0, 2, 1))      # NTC -> NCT


audio_encoder_w2v = jax.jit(audio_encoder_w2v_impl)


# ------------------------------ reference (pure JAX) ---------------------------

def _reference(x, params):
    eps = 1e-5
    out = x
    for (w, b, gamma, beta, rmean, rvar), (cin, cout, k, s, p, res) in zip(params, LAYER_CFG):
        y = jax.lax.conv_general_dilated(
            out, w, window_strides=(s,), padding=[(p, p)],
            dimension_numbers=("NCH", "OIH", "NCH"))
        y = y + b[None, :, None]
        y = (y - rmean[None, :, None]) / jnp.sqrt(rvar[None, :, None] + eps)
        y = y * gamma[None, :, None] + beta[None, :, None]
        if res:
            y = y + out
        out = jnp.maximum(y, 0.0)
    return out


# ------------------------------ params / main ----------------------------------

def init_params(key):
    params = []
    for (cin, cout, k, _, _, _) in LAYER_CFG:
        key, kw, kb, kg, kbeta, km, kv = jax.random.split(key, 7)
        w = 0.05 * jax.random.normal(kw, (cout, cin, k), dtype=jnp.float32)
        b = 0.05 * jax.random.normal(kb, (cout,), dtype=jnp.float32)
        gamma = 1.0 + 0.1 * jax.random.normal(kg, (cout,), dtype=jnp.float32)
        beta = 0.1 * jax.random.normal(kbeta, (cout,), dtype=jnp.float32)
        rmean = 0.1 * jax.random.normal(km, (cout,), dtype=jnp.float32)
        rvar = jnp.abs(jax.random.normal(kv, (cout,), dtype=jnp.float32)) + 0.5
        params.append((w, b, gamma, beta, rmean, rvar))
    return params


if __name__ == "__main__":
    key = jax.random.PRNGKey(0)
    kx, kp = jax.random.split(key)

    B, C, T = 2, 768, 16
    x = jax.random.normal(kx, (B, C, T), dtype=jnp.float32)
    params = init_params(kp)

    out = jax.block_until_ready(audio_encoder_w2v(x, params))

    # Expected time evolution: 16 -> 16 -> 8 -> 8 -> 8 -> 4 -> 4 -> 4 -> 4 -> 2
    assert out.shape == (B, 128, 2), out.shape

    ref = jax.block_until_ready(_reference(x, params))
    max_err = float(jnp.max(jnp.abs(out - ref)))
    # bf16 MXU operands (f32 accumulation): allow a bf16-appropriate tolerance.
    tol = 2e-2 + 2e-2 * float(jnp.max(jnp.abs(ref)))
    assert max_err < tol, f"mismatch vs reference: max abs err {max_err} (tol {tol})"

    print("KERNEL_OK")
</pallas_src>

<mosaic_0001>
module attributes {stable_mosaic.version = 11 : i64} {
  func.func @_fused_kernel(%arg0: i32, %arg1: memref<36x768xbf16, #tpu.memory_space<vmem>>, %arg2: memref<3x768x128xbf16, #tpu.memory_space<vmem>>, %arg3: memref<3x128x128xbf16, #tpu.memory_space<vmem>>, %arg4: memref<3x128x128xbf16, #tpu.memory_space<vmem>>, %arg5: memref<3x128x128xbf16, #tpu.memory_space<vmem>>, %arg6: memref<3x128x128xbf16, #tpu.memory_space<vmem>>, %arg7: memref<3x128x128xbf16, #tpu.memory_space<vmem>>, %arg8: memref<3x128x128xbf16, #tpu.memory_space<vmem>>, %arg9: memref<3x128x128xbf16, #tpu.memory_space<vmem>>, %arg10: memref<3x128x128xbf16, #tpu.memory_space<vmem>>, %arg11: memref<1x128xf32, #tpu.memory_space<vmem>>, %arg12: memref<1x128xf32, #tpu.memory_space<vmem>>, %arg13: memref<1x128xf32, #tpu.memory_space<vmem>>, %arg14: memref<1x128xf32, #tpu.memory_space<vmem>>, %arg15: memref<1x128xf32, #tpu.memory_space<vmem>>, %arg16: memref<1x128xf32, #tpu.memory_space<vmem>>, %arg17: memref<1x128xf32, #tpu.memory_space<vmem>>, %arg18: memref<1x128xf32, #tpu.memory_space<vmem>>, %arg19: memref<1x128xf32, #tpu.memory_space<vmem>>, %arg20: memref<2x2x128xf32, #tpu.memory_space<vmem>>, %arg21: memref<36x128xf32, #tpu.memory_space<vmem>>, %arg22: memref<36x128xf32, #tpu.memory_space<vmem>>) attributes {dimension_semantics = [#tpu.dimension_semantics<parallel>], iteration_bounds = array<i64: 1>, scalar_prefetch = 0 : i64, scratch_operands = 2 : i64, tpu.core_type = #tpu.core_type<tc>, window_params = [{transform_indices = @transform_0, window_bounds = array<i64: 36, 768>}, {pipeline_mode = #tpu.pipeline_mode<synchronous>, transform_indices = @transform_1, window_bounds = array<i64: 3, 768, 128>}, {pipeline_mode = #tpu.pipeline_mode<synchronous>, transform_indices = @transform_2, window_bounds = array<i64: 3, 128, 128>}, {pipeline_mode = #tpu.pipeline_mode<synchronous>, transform_indices = @transform_3, window_bounds = array<i64: 3, 128, 128>}, {pipeline_mode = #tpu.pipeline_mode<synchronous>, transform_indices = @transform_4, window_bounds = array<i64: 3, 128, 128>}, {pipeline_mode = #tpu.pipeline_mode<synchronous>, transform_indices = @transform_5, window_bounds = array<i64: 3, 128, 128>}, {pipeline_mode = #tpu.pipeline_mode<synchronous>, transform_indices = @transform_6, window_bounds = array<i64: 3, 128, 128>}, {pipeline_mode = #tpu.pipeline_mode<synchronous>, transform_indices = @transform_7, window_bounds = array<i64: 3, 128, 128>}, {pipeline_mode = #tpu.pipeline_mode<synchronous>, transform_indices = @transform_8, window_bounds = array<i64: 3, 128, 128>}, {pipeline_mode = #tpu.pipeline_mode<synchronous>, transform_indices = @transform_9, window_bounds = array<i64: 3, 128, 128>}, {pipeline_mode = #tpu.pipeline_mode<synchronous>, transform_indices = @transform_10, window_bounds = array<i64: 1, 128>}, {pipeline_mode = #tpu.pipeline_mode<synchronous>, transform_indices = @transform_11, window_bounds = array<i64: 1, 128>}, {pipeline_mode = #tpu.pipeline_mode<synchronous>, transform_indices = @transform_12, window_bounds = array<i64: 1, 128>}, {pipeline_mode = #tpu.pipeline_mode<synchronous>, transform_indices = @transform_13, window_bounds = array<i64: 1, 128>}, {pipeline_mode = #tpu.pipeline_mode<synchronous>, transform_indices = @transform_14, window_bounds = array<i64: 1, 128>}, {pipeline_mode = #tpu.pipeline_mode<synchronous>, transform_indices = @transform_15, window_bounds = array<i64: 1, 128>}, {pipeline_mode = #tpu.pipeline_mode<synchronous>, transform_indices = @transform_16, window_bounds = array<i64: 1, 128>}, {pipeline_mode = #tpu.pipeline_mode<synchronous>, transform_indices = @transform_17, window_bounds = array<i64: 1, 128>}, {pipeline_mode = #tpu.pipeline_mode<synchronous>, transform_indices = @transform_18, window_bounds = array<i64: 1, 128>}, {transform_indices = @transform_19, window_bounds = array<i64: 2, 2, 128>}]} {
    %c0 = arith.constant 0 : index
    %c0_0 = arith.constant 0 : index
    %0 = vector.load %arg1[%c0, %c0_0] : memref<36x768xbf16, #tpu.memory_space<vmem>>, vector<34x768xbf16>
    %c0_1 = arith.constant 0 : index
    %c0_2 = arith.constant 0 : index
    %c0_3 = arith.constant 0 : index
    %1 = vector.load %arg2[%c0_1, %c0_2, %c0_3] : memref<3x768x128xbf16, #tpu.memory_space<vmem>>, vector<1x768x128xbf16>
    %2 = vector.shape_cast %1 : vector<1x768x128xbf16> to vector<768x128xbf16>
    %cst = arith.constant dense<0.000000e+00> : vector<34x128xf32>
    %3 = tpu.matmul %0, %2, %cst {dimension_numbers = #tpu.dot_dimension_numbers<[1], [0], [0], [1], [0, 0, 1, 1], [], []>} : vector<34x768xbf16>, vector<768x128xbf16>, vector<34x128xf32> -> vector<34x128xf32>
    %c1 = arith.constant 1 : index
    %c0_4 = arith.constant 0 : index
    %4 = vector.load %arg1[%c1, %c0_4] : memref<36x768xbf16, #tpu.memory_space<vmem>>, vector<34x768xbf16>
    %c1_5 = arith.constant 1 : index
    %c0_6 = arith.constant 0 : index
    %c0_7 = arith.constant 0 : index
    %5 = vector.load %arg2[%c1_5, %c0_6, %c0_7] : memref<3x768x128xbf16, #tpu.memory_space<vmem>>, vector<1x768x128xbf16>
    %6 = vector.shape_cast %5 : vector<1x768x128xbf16> to vector<768x128xbf16>
    %cst_8 = arith.constant dense<0.000000e+00> : vector<34x128xf32>
    %7 = tpu.matmul %4, %6, %cst_8 {dimension_numbers = #tpu.dot_dimension_numbers<[1], [0], [0], [1], [0, 0, 1, 1], [], []>} : vector<34x768xbf16>, vector<768x128xbf16>, vector<34x128xf32> -> vector<34x128xf32>
    %8 = arith.addf %3, %7 : vector<34x128xf32>
    %c2 = arith.constant 2 : index
    %c0_9 = arith.constant 0 : index
    %9 = vector.load %arg1[%c2, %c0_9] : memref<36x768xbf16, #tpu.memory_space<vmem>>, vector<34x768xbf16>
    %c2_10 = arith.constant 2 : index
    %c0_11 = arith.constant 0 : index
    %c0_12 = arith.constant 0 : index
    %10 = vector.load %arg2[%c2_10, %c0_11, %c0_12] : memref<3x768x128xbf16, #tpu.memory_space<vmem>>, vector<1x768x128xbf16>
    %11 = vector.shape_cast %10 : vector<1x768x128xbf16> to vector<768x128xbf16>
    %cst_13 = arith.constant dense<0.000000e+00> : vector<34x128xf32>
    %12 = tpu.matmul %9, %11, %cst_13 {dimension_numbers = #tpu.dot_dimension_numbers<[1], [0], [0], [1], [0, 0, 1, 1], [], []>} : vector<34x768xbf16>, vector<768x128xbf16>, vector<34x128xf32> -> vector<34x128xf32>
    %13 = arith.addf %8, %12 : vector<34x128xf32>
    %c0_14 = arith.constant 0 : index
    %c0_15 = arith.constant 0 : index
    %14 = vector.load %arg11[%c0_14, %c0_15] : memref<1x128xf32, #tpu.memory_space<vmem>>, vector<1x128xf32>
    %15 = vector.broadcast %14 : vector<1x128xf32> to vector<34x128xf32>
    %16 = arith.addf %13, %15 : vector<34x128xf32>
    %cst_16 = arith.constant 0.000000e+00 : f32
    %17 = vector.broadcast %cst_16 : f32 to vector<34x128xf32>
    %18 = arith.maximumf %16, %17 : vector<34x128xf32>
    %cst_17 = arith.constant 0.000000e+00 : f32
    %19 = vector.broadcast %cst_17 : f32 to vector<36x128xf32>
    %c0_18 = arith.constant 0 : index
    %c0_19 = arith.constant 0 : index
    %20 = vector.load %arg21[%c0_18, %c0_19] : memref<36x128xf32, #tpu.memory_space<vmem>>, vector<36x128xf32>
    tpu.vector_store %arg21[%c0_18, %c0_19], %19 {strides = array<i32>} : memref<36x128xf32, #tpu.memory_space<vmem>>, vector<36x128xf32>,
    %21 = vector.extract_strided_slice %18 {offsets = [0, 0], sizes = [16, 128], strides = [1, 1]} : vector<34x128xf32> to vector<16x128xf32>
    %c1_20 = arith.constant 1 : index
    %c0_21 = arith.constant 0 : index
    %22 = vector.load %arg21[%c1_20, %c0_21] : memref<36x128xf32, #tpu.memory_space<vmem>>, vector<16x128xf32>
    tpu.vector_store %arg21[%c1_20, %c0_21], %21 {strides = array<i32>} : memref<36x128xf32, #tpu.memory_space<vmem>>, vector<16x128xf32>,
    %23 = vector.extract_strided_slice %18 {offsets = [18, 0], sizes = [16, 128], strides = [1, 1]} : vector<34x128xf32> to vector<16x128xf32>
    %c19 = arith.constant 19 : index
    %c0_22 = arith.constant 0 : index
    %24 = vector.load %arg21[%c19, %c0_22] : memref<36x128xf32, #tpu.memory_space<vmem>>, vector<16x128xf32>
    tpu.vector_store %arg21[%c19, %c0_22], %23 {strides = array<i32>} : memref<36x128xf32, #tpu.memory_space<vmem>>, vector<16x128xf32>,
    %c0_23 = arith.constant 0 : index
    %c0_24 = arith.constant 0 : index
    %25 = tpu.strided_load %arg21[%c0_23, %c0_24] {strides = array<i32: 2, 1>} : memref<36x128xf32, #tpu.memory_space<vmem>>, vector<17x128xf32>
    %26 = arith.truncf %25 : vector<17x128xf32> to vector<17x128xbf16>
    %c0_25 = arith.constant 0 : index
    %c0_26 = arith.constant 0 : index
    %c0_27 = arith.constant 0 : index
    %27 = vector.load %arg3[%c0_25, %c0_26, %c0_27] : memref<3x128x128xbf16, #tpu.memory_space<vmem>>, vector<1x128x128xbf16>
    %28 = vector.shape_cast %27 : vector<1x128x128xbf16> to vector<128x128xbf16>
    %cst_28 = arith.constant dense<0.000000e+00> : vector<17x128xf32>
    %29 = tpu.matmul %26, %28, %cst_28 {dimension_numbers = #tpu.dot_dimension_numbers<[1], [0], [0], [1], [0, 0, 1, 1], [], []>} : vector<17x128xbf16>, vector<128x128xbf16>, vector<17x128xf32> -> vector<17x128xf32>
    %c1_29 = arith.constant 1 : index
    %c0_30 = arith.constant 0 : index
    %30 = tpu.strided_load %arg21[%c1_29, %c0_30] {strides = array<i32: 2, 1>} : memref<36x128xf32, #tpu.memory_space<vmem>>, vector<17x128xf32>
    %31 = arith.truncf %30 : vector<17x128xf32> to vector<17x128xbf16>
    %c1_31 = arith.constant 1 : index
    %c0_32 = arith.constant 0 : index
    %c0_33 = arith.constant 0 : index
    %32 = vector.load %arg3[%c1_31, %c0_32, %c0_33] : memref<3x128x128xbf16, #tpu.memory_space<vmem>>, vector<1x128x128xbf16>
    %33 = vector.shape_cast %32 : vector<1x128x128xbf16> to vector<128x128xbf16>
    %cst_34 = arith.constant dense<0.000000e+00> : vector<17x128xf32>
    %34 = tpu.matmul %31, %33, %cst_34 {dimension_numbers = #tpu.dot_dimension_numbers<[1], [0], [0], [1], [0, 0, 1, 1], [], []>} : vector<17x128xbf16>, vector<128x128xbf16>, vector<17x128xf32> -> vector<17x128xf32>
    %35 = arith.addf %29, %34 : vector<17x128xf32>
    %c2_35 = arith.constant 2 : index
    %c0_36 = arith.constant 0 : index
    %36 = tpu.strided_load %arg21[%c2_35, %c0_36] {strides = array<i32: 2, 1>} : memref<36x128xf32, #tpu.memory_space<vmem>>, vector<17x128xf32>
    %37 = arith.truncf %36 : vector<17x128xf32> to vector<17x128xbf16>
    %c2_37 = arith.constant 2 : index
    %c0_38 = arith.constant 0 : index
    %c0_39 = arith.constant 0 : index
    %38 = vector.load %arg3[%c2_37, %c0_38, %c0_39] : memref<3x128x128xbf16, #tpu.memory_space<vmem>>, vector<1x128x128xbf16>
    %39 = vector.shape_cast %38 : vector<1x128x128xbf16> to vector<128x128xbf16>
    %cst_40 = arith.constant dense<0.000000e+00> : vector<17x128xf32>
    %40 = tpu.matmul %37, %39, %cst_40 {dimension_numbers = #tpu.dot_dimension_numbers<[1], [0], [0], [1], [0, 0, 1, 1], [], []>} : vector<17x128xbf16>, vector<128x128xbf16>, vector<17x128xf32> -> vector<17x128xf32>
    %41 = arith.addf %35, %40 : vector<17x128xf32>
    %c0_41 = arith.constant 0 : index
    %c0_42 = arith.constant 0 : index
    %42 = vector.load %arg12[%c0_41, %c0_42] : memref<1x128xf32, #tpu.memory_space<vmem>>, vector<1x128xf32>
    %43 = vector.broadcast %42 : vector<1x128xf32> to vector<17x128xf32>
    %44 = arith.addf %41, %43 : vector<17x128xf32>
    %cst_43 = arith.constant 0.000000e+00 : f32
    %45 = vector.broadcast %cst_43 : f32 to vector<17x128xf32>
    %46 = arith.maximumf %44, %45 : vector<17x128xf32>
    %cst_44 = arith.constant 0.000000e+00 : f32
    %47 = vector.broadcast %cst_44 : f32 to vector<20x128xf32>
    %c0_45 = arith.constant 0 : index
    %c0_46 = arith.constant 0 : index
    %48 = vector.load %arg22[%c0_45, %c0_46] : memref<36x128xf32, #tpu.memory_space<vmem>>, vector<20x128xf32>
    tpu.vector_store %arg22[%c0_45, %c0_46], %47 {strides = array<i32>} : memref<36x128xf32, #tpu.memory_space<vmem>>, vector<20x128xf32>,
    %49 = vector.extract_strided_slice %46 {offsets = [0, 0], sizes = [8, 128], strides = [1, 1]} : vector<17x128xf32> to vector<8x128xf32>
    %c1_47 = arith.constant 1 : index
    %c0_48 = arith.constant 0 : index
    %50 = vector.load %arg22[%c1_47, %c0_48] : memref<36x128xf32, #tpu.memory_space<vmem>>, vector<8x128xf32>
    tpu.vector_store %arg22[%c1_47, %c0_48], %49 {strides = array<i32>} : memref<36x128xf32, #tpu.memory_space<vmem>>, vector<8x128xf32>,
    %51 = vector.extract_strided_slice %46 {offsets = [9, 0], sizes = [8, 128], strides = [1, 1]} : vector<17x128xf32> to vector<8x128xf32>
    %c11 = arith.constant 11 : index
    %c0_49 = arith.constant 0 : index
    %52 = vector.load %arg22[%c11, %c0_49] : memref<36x128xf32, #tpu.memory_space<vmem>>, vector<8x128xf32>
    tpu.vector_store %arg22[%c11, %c0_49], %51 {strides = array<i32>} : memref<36x128xf32, #tpu.memory_space<vmem>>, vector<8x128xf32>,
    %c0_50 = arith.constant 0 : index
    %c0_51 = arith.constant 0 : index
    %53 = vector.load %arg22[%c0_50, %c0_51] : memref<36x128xf32, #tpu.memory_space<vmem>>, vector<18x128xf32>
    %54 = arith.truncf %53 : vector<18x128xf32> to vector<18x128xbf16>
    %c0_52 = arith.constant 0 : index
    %c0_53 = arith.constant 0 : index
    %c0_54 = arith.constant 0 : index
    %55 = vector.load %arg4[%c0_52, %c0_53, %c0_54] : memref<3x128x128xbf16, #tpu.memory_space<vmem>>, vector<1x128x128xbf16>
    %56 = vector.shape_cast %55 : vector<1x128x128xbf16> to vector<128x128xbf16>
    %cst_55 = arith.constant dense<0.000000e+00> : vector<18x128xf32>
    %57 = tpu.matmul %54, %56, %cst_55 {dimension_numbers = #tpu.dot_dimension_numbers<[1], [0], [0], [1], [0, 0, 1, 1], [], []>} : vector<18x128xbf16>, vector<128x128xbf16>, vector<18x128xf32> -> vector<18x128xf32>
    %c1_56 = arith.constant 1 : index
    %c0_57 = arith.constant 0 : index
    %58 = vector.load %arg22[%c1_56, %c0_57] : memref<36x128xf32, #tpu.memory_space<vmem>>, vector<18x128xf32>
    %59 = arith.truncf %58 : vector<18x128xf32> to vector<18x128xbf16>
    %c1_58 = arith.constant 1 : index
    %c0_59 = arith.constant 0 : index
    %c0_60 = arith.constant 0 : index
    %60 = vector.load %arg4[%c1_58, %c0_59, %c0_60] : memref<3x128x128xbf16, #tpu.memory_space<vmem>>, vector<1x128x128xbf16>
    %61 = vector.shape_cast %60 : vector<1x128x128xbf16> to vector<128x128xbf16>
    %cst_61 = arith.constant dense<0.000000e+00> : vector<18x128xf32>
    %62 = tpu.matmul %59, %61, %cst_61 {dimension_numbers = #tpu.dot_dimension_numbers<[1], [0], [0], [1], [0, 0, 1, 1], [], []>} : vector<18x128xbf16>, vector<128x128xbf16>, vector<18x128xf32> -> vector<18x128xf32>
    %63 = arith.addf %57, %62 : vector<18x128xf32>
    %c2_62 = arith.constant 2 : index
    %c0_63 = arith.constant 0 : index
    %64 = vector.load %arg22[%c2_62, %c0_63] : memref<36x128xf32, #tpu.memory_space<vmem>>, vector<18x128xf32>
    %65 = arith.truncf %64 : vector<18x128xf32> to vector<18x128xbf16>
    %c2_64 = arith.constant 2 : index
    %c0_65 = arith.constant 0 : index
    %c0_66 = arith.constant 0 : index
    %66 = vector.load %arg4[%c2_64, %c0_65, %c0_66] : memref<3x128x128xbf16, #tpu.memory_space<vmem>>, vector<1x128x128xbf16>
    %67 = vector.shape_cast %66 : vector<1x128x128xbf16> to vector<128x128xbf16>
    %cst_67 = arith.constant dense<0.000000e+00> : vector<18x128xf32>
    %68 = tpu.matmul %65, %67, %cst_67 {dimension_numbers = #tpu.dot_dimension_numbers<[1], [0], [0], [1], [0, 0, 1, 1], [], []>} : vector<18x128xbf16>, vector<128x128xbf16>, vector<18x128xf32> -> vector<18x128xf32>
    %69 = arith.addf %63, %68 : vector<18x128xf32>
    %c0_68 = arith.constant 0 : index
    %c0_69 = arith.constant 0 : index
    %70 = vector.load %arg13[%c0_68, %c0_69] : memref<1x128xf32, #tpu.memory_space<vmem>>, vector<1x128xf32>
    %71 = vector.broadcast %70 : vector<1x128xf32> to vector<18x128xf32>
    %72 = arith.addf %69, %71 : vector<18x128xf32>
    %c1_70 = arith.constant 1 : index
    %c0_71 = arith.constant 0 : index
    %73 = vector.load %arg22[%c1_70, %c0_71] : memref<36x128xf32, #tpu.memory_space<vmem>>, vector<18x128xf32>
    %74 = arith.addf %72, %73 : vector<18x128xf32>
    %cst_72 = arith.constant 0.000000e+00 : f32
    %75 = vector.broadcast %cst_72 : f32 to vector<18x128xf32>
    %76 = arith.maximumf %74, %75 : vector<18x128xf32>
    %cst_73 = arith.constant 0.000000e+00 : f32
    %77 = vector.broadcast %cst_73 : f32 to vector<20x128xf32>
    %c0_74 = arith.constant 0 : index
    %c0_75 = arith.constant 0 : index
    %78 = vector.load %arg21[%c0_74, %c0_75] : memref<36x128xf32, #tpu.memory_space<vmem>>, vector<20x128xf32>
    tpu.vector_store %arg21[%c0_74, %c0_75], %77 {strides = array<i32>} : memref<36x128xf32, #tpu.memory_space<vmem>>, vector<20x128xf32>,
    %79 = vector.extract_strided_slice %76 {offsets = [0, 0], sizes = [8, 128], strides = [1, 1]} : vector<18x128xf32> to vector<8x128xf32>
    %c1_76 = arith.constant 1 : index
    %c0_77 = arith.constant 0 : index
    %80 = vector.load %arg21[%c1_76, %c0_77] : memref<36x128xf32, #tpu.memory_space<vmem>>, vector<8x128xf32>
    tpu.vector_store %arg21[%c1_76, %c0_77], %79 {strides = array<i32>} : memref<36x128xf32, #tpu.memory_space<vmem>>, vector<8x128xf32>,
    %81 = vector.extract_strided_slice %76 {offsets = [10, 0], sizes = [8, 128], strides = [1, 1]} : vector<18x128xf32> to vector<8x128xf32>
    %c11_78 = arith.constant 11 : index
    %c0_79 = arith.constant 0 : index
    %82 = vector.load %arg21[%c11_78, %c0_79] : memref<36x128xf32, #tpu.memory_space<vmem>>, vector<8x128xf32>
    tpu.vector_store %arg21[%c11_78, %c0_79], %81 {strides = array<i32>} : memref<36x128xf32, #tpu.memory_space<vmem>>, vector<8x128xf32>,
    %c0_80 = arith.constant 0 : index
    %c0_81 = arith.constant 0 : index
    %83 = vector.load %arg21[%c0_80, %c0_81] : memref<36x128xf32, #tpu.memory_space<vmem>>, vector<18x128xf32>
    %84 = arith.truncf %83 : vector<18x128xf32> to vector<18x128xbf16>
    %c0_82 = arith.constant 0 : index
    %c0_83 = arith.constant 0 : index
    %c0_84 = arith.constant 0 : index
    %85 = vector.load %arg5[%c0_82, %c0_83, %c0_84] : memref<3x128x128xbf16, #tpu.memory_space<vmem>>, vector<1x128x128xbf16>
    %86 = vector.shape_cast %85 : vector<1x128x128xbf16> to vector<128x128xbf16>
    %cst_85 = arith.constant dense<0.000000e+00> : vector<18x128xf32>
    %87 = tpu.matmul %84, %86, %cst_85 {dimension_numbers = #tpu.dot_dimension_numbers<[1], [0], [0], [1], [0, 0, 1, 1], [], []>} : vector<18x128xbf16>, vector<128x128xbf16>, vector<18x128xf32> -> vector<18x128xf32>
    %c1_86 = arith.constant 1 : index
    %c0_87 = arith.constant 0 : index
    %88 = vector.load %arg21[%c1_86, %c0_87] : memref<36x128xf32, #tpu.memory_space<vmem>>, vector<18x128xf32>
    %89 = arith.truncf %88 : vector<18x128xf32> to vector<18x128xbf16>
    %c1_88 = arith.constant 1 : index
    %c0_89 = arith.constant 0 : index
    %c0_90 = arith.constant 0 : index
    %90 = vector.load %arg5[%c1_88, %c0_89, %c0_90] : memref<3x128x128xbf16, #tpu.memory_space<vmem>>, vector<1x128x128xbf16>
    %91 = vector.shape_cast %90 : vector<1x128x128xbf16> to vector<128x128xbf16>
    %cst_91 = arith.constant dense<0.000000e+00> : vector<18x128xf32>
    %92 = tpu.matmul %89, %91, %cst_91 {dimension_numbers = #tpu.dot_dimension_numbers<[1], [0], [0], [1], [0, 0, 1, 1], [], []>} : vector<18x128xbf16>, vector<128x128xbf16>, vector<18x128xf32> -> vector<18x128xf32>
    %93 = arith.addf %87, %92 : vector<18x128xf32>
    %c2_92 = arith.constant 2 : index
    %c0_93 = arith.constant 0 : index
    %94 = vector.load %arg21[%c2_92, %c0_93] : memref<36x128xf32, #tpu.memory_space<vmem>>, vector<18x128xf32>
    %95 = arith.truncf %94 : vector<18x128xf32> to vector<18x128xbf16>
    %c2_94 = arith.constant 2 : index
    %c0_95 = arith.constant 0 : index
    %c0_96 = arith.constant 0 : index
    %96 = vector.load %arg5[%c2_94, %c0_95, %c0_96] : memref<3x128x128xbf16, #tpu.memory_space<vmem>>, vector<1x128x128xbf16>
    %97 = vector.shape_cast %96 : vector<1x128x128xbf16> to vector<128x128xbf16>
    %cst_97 = arith.constant dense<0.000000e+00> : vector<18x128xf32>
    %98 = tpu.matmul %95, %97, %cst_97 {dimension_numbers = #tpu.dot_dimension_numbers<[1], [0], [0], [1], [0, 0, 1, 1], [], []>} : vector<18x128xbf16>, vector<128x128xbf16>, vector<18x128xf32> -> vector<18x128xf32>
    %99 = arith.addf %93, %98 : vector<18x128xf32>
    %c0_98 = arith.constant 0 : index
    %c0_99 = arith.constant 0 : index
    %100 = vector.load %arg14[%c0_98, %c0_99] : memref<1x128xf32, #tpu.memory_space<vmem>>, vector<1x128xf32>
    %101 = vector.broadcast %100 : vector<1x128xf32> to vector<18x128xf32>
    %102 = arith.addf %99, %101 : vector<18x128xf32>
    %c1_100 = arith.constant 1 : index
    %c0_101 = arith.constant 0 : index
    %103 = vector.load %arg21[%c1_100, %c0_101] : memref<36x128xf32, #tpu.memory_space<vmem>>, vector<18x128xf32>
    %104 = arith.addf %102, %103 : vector<18x128xf32>
    %cst_102 = arith.constant 0.000000e+00 : f32
    %105 = vector.broadcast %cst_102 : f32 to vector<18x128xf32>
    %106 = arith.maximumf %104, %105 : vector<18x128xf32>
    %cst_103 = arith.constant 0.000000e+00 : f32
    %107 = vector.broadcast %cst_103 : f32 to vector<20x128xf32>
    %c0_104 = arith.constant 0 : index
    %c0_105 = arith.constant 0 : index
    %108 = vector.load %arg22[%c0_104, %c0_105] : memref<36x128xf32, #tpu.memory_space<vmem>>, vector<20x128xf32>
    tpu.vector_store %arg22[%c0_104, %c0_105], %107 {strides = array<i32>} : memref<36x128xf32, #tpu.memory_space<vmem>>, vector<20x128xf32>,
    %109 = vector.extract_strided_slice %106 {offsets = [0, 0], sizes = [8, 128], strides = [1, 1]} : vector<18x128xf32> to vector<8x128xf32>
    %c1_106 = arith.constant 1 : index
    %c0_107 = arith.constant 0 : index
    %110 = vector.load %arg22[%c1_106, %c0_107] : memref<36x128xf32, #tpu.memory_space<vmem>>, vector<8x128xf32>
    tpu.vector_store %arg22[%c1_106, %c0_107], %109 {strides = array<i32>} : memref<36x128xf32, #tpu.memory_space<vmem>>, vector<8x128xf32>,
    %111 = vector.extract_strided_slice %106 {offsets = [10, 0], sizes = [8, 128], strides = [1, 1]} : vector<18x128xf32> to vector<8x128xf32>
    %c11_108 = arith.constant 11 : index
    %c0_109 = arith.constant 0 : index
    %112 = vector.load %arg22[%c11_108, %c0_109] : memref<36x128xf32, #tpu.memory_space<vmem>>, vector<8x128xf32>
    tpu.vector_store %arg22[%c11_108, %c0_109], %111 {strides = array<i32>} : memref<36x128xf32, #tpu.memory_space<vmem>>, vector<8x128xf32>,
    %c0_110 = arith.constant 0 : index
    %c0_111 = arith.constant 0 : index
    %113 = tpu.strided_load %arg22[%c0_110, %c0_111] {strides = array<i32: 2, 1>} : memref<36x128xf32, #tpu.memory_space<vmem>>, vector<9x128xf32>
    %114 = arith.truncf %113 : vector<9x128xf32> to vector<9x128xbf16>
    %c0_112 = arith.constant 0 : index
    %c0_113 = arith.constant 0 : index
    %c0_114 = arith.constant 0 : index
    %115 = vector.load %arg6[%c0_112, %c0_113, %c0_114] : memref<3x128x128xbf16, #tpu.memory_space<vmem>>, vector<1x128x128xbf16>
    %116 = vector.shape_cast %115 : vector<1x128x128xbf16> to vector<128x128xbf16>
    %cst_115 = arith.constant dense<0.000000e+00> : vector<9x128xf32>
    %117 = tpu.matmul %114, %116, %cst_115 {dimension_numbers = #tpu.dot_dimension_numbers<[1], [0], [0], [1], [0, 0, 1, 1], [], []>} : vector<9x128xbf16>, vector<128x128xbf16>, vector<9x128xf32> -> vector<9x128xf32>
    %c1_116 = arith.constant 1 : index
    %c0_117 = arith.constant 0 : index
    %118 = tpu.strided_load %arg22[%c1_116, %c0_117] {strides = array<i32: 2, 1>} : memref<36x128xf32, #tpu.memory_space<vmem>>, vector<9x128xf32>
    %119 = arith.truncf %118 : vector<9x128xf32> to vector<9x128xbf16>
    %c1_118 = arith.constant 1 : index
    %c0_119 = arith.constant 0 : index
    %c0_120 = arith.constant 0 : index
    %120 = vector.load %arg6[%c1_118, %c0_119, %c0_120] : memref<3x128x128xbf16, #tpu.memory_space<vmem>>, vector<1x128x128xbf16>
    %121 = vector.shape_cast %120 : vector<1x128x128xbf16> to vector<128x128xbf16>
    %cst_121 = arith.constant dense<0.000000e+00> : vector<9x128xf32>
    %122 = tpu.matmul %119, %121, %cst_121 {dimension_numbers = #tpu.dot_dimension_numbers<[1], [0], [0], [1], [0, 0, 1, 1], [], []>} : vector<9x128xbf16>, vector<128x128xbf16>, vector<9x128xf32> -> vector<9x128xf32>
    %123 = arith.addf %117, %122 : vector<9x128xf32>
    %c2_122 = arith.constant 2 : index
    %c0_123 = arith.constant 0 : index
    %124 = tpu.strided_load %arg22[%c2_122, %c0_123] {strides = array<i32: 2, 1>} : memref<36x128xf32, #tpu.memory_space<vmem>>, vector<9x128xf32>
    %125 = arith.truncf %124 : vector<9x128xf32> to vector<9x128xbf16>
    %c2_124 = arith.constant 2 : index
    %c0_125 = arith.constant 0 : index
    %c0_126 = arith.constant 0 : index
    %126 = vector.load %arg6[%c2_124, %c0_125, %c0_126] : memref<3x128x128xbf16, #tpu.memory_space<vmem>>, vector<1x128x128xbf16>
    %127 = vector.shape_cast %126 : vector<1x128x128xbf16> to vector<128x128xbf16>
    %cst_127 = arith.constant dense<0.000000e+00> : vector<9x128xf32>
    %128 = tpu.matmul %125, %127, %cst_127 {dimension_numbers = #tpu.dot_dimension_numbers<[1], [0], [0], [1], [0, 0, 1, 1], [], []>} : vector<9x128xbf16>, vector<128x128xbf16>, vector<9x128xf32> -> vector<9x128xf32>
    %129 = arith.addf %123, %128 : vector<9x128xf32>
    %c0_128 = arith.constant 0 : index
    %c0_129 = arith.constant 0 : index
    %130 = vector.load %arg15[%c0_128, %c0_129] : memref<1x128xf32, #tpu.memory_space<vmem>>, vector<1x128xf32>
    %131 = vector.broadcast %130 : vector<1x128xf32> to vector<9x128xf32>
    %132 = arith.addf %129, %131 : vector<9x128xf32>
    %cst_130 = arith.constant 0.000000e+00 : f32
    %133 = vector.broadcast %cst_130 : f32 to vector<9x128xf32>
    %134 = arith.maximumf %132, %133 : vector<9x128xf32>
    %cst_131 = arith.constant 0.000000e+00 : f32
    %135 = vector.broadcast %cst_131 : f32 to vector<12x128xf32>
    %c0_132 = arith.constant 0 : index
    %c0_133 = arith.constant 0 : index
    %136 = vector.load %arg21[%c0_132, %c0_133] : memref<36x128xf32, #tpu.memory_space<vmem>>, vector<12x128xf32>
    tpu.vector_store %arg21[%c0_132, %c0_133], %135 {strides = array<i32>} : memref<36x128xf32, #tpu.memory_space<vmem>>, vector<12x128xf32>,
    %137 = vector.extract_strided_slice %134 {offsets = [0, 0], sizes = [4, 128], strides = [1, 1]} : vector<9x128xf32> to vector<4x128xf32>
    %c1_134 = arith.constant 1 : index
    %c0_135 = arith.constant 0 : index
    %138 = vector.load %arg21[%c1_134, %c0_135] : memref<36x128xf32, #tpu.memory_space<vmem>>, vector<4x128xf32>
    tpu.vector_store %arg21[%c1_134, %c0_135], %137 {strides = array<i32>} : memref<36x128xf32, #tpu.memory_space<vmem>>, vector<4x128xf32>,
    %139 = vector.extract_strided_slice %134 {offsets = [5, 0], sizes = [4, 128], strides = [1, 1]} : vector<9x128xf32> to vector<4x128xf32>
    %c7 = arith.constant 7 : index
    %c0_136 = arith.constant 0 : index
    %140 = vector.load %arg21[%c7, %c0_136] : memref<36x128xf32, #tpu.memory_space<vmem>>, vector<4x128xf32>
    tpu.vector_store %arg21[%c7, %c0_136], %139 {strides = array<i32>} : memref<36x128xf32, #tpu.memory_space<vmem>>, vector<4x128xf32>,
    %c0_137 = arith.constant 0 : index
    %c0_138 = arith.constant 0 : index
    %141 = vector.load %arg21[%c0_137, %c0_138] : memref<36x128xf32, #tpu.memory_space<vmem>>, vector<10x128xf32>
    %142 = arith.truncf %141 : vector<10x128xf32> to vector<10x128xbf16>
    %c0_139 = arith.constant 0 : index
    %c0_140 = arith.constant 0 : index
    %c0_141 = arith.constant 0 : index
    %143 = vector.load %arg7[%c0_139, %c0_140, %c0_141] : memref<3x128x128xbf16, #tpu.memory_space<vmem>>, vector<1x128x128xbf16>
    %144 = vector.shape_cast %143 : vector<1x128x128xbf16> to vector<128x128xbf16>
    %cst_142 = arith.constant dense<0.000000e+00> : vector<10x128xf32>
    %145 = tpu.matmul %142, %144, %cst_142 {dimension_numbers = #tpu.dot_dimension_numbers<[1], [0], [0], [1], [0, 0, 1, 1], [], []>} : vector<10x128xbf16>, vector<128x128xbf16>, vector<10x128xf32> -> vector<10x128xf32>
    %c1_143 = arith.constant 1 : index
    %c0_144 = arith.constant 0 : index
    %146 = vector.load %arg21[%c1_143, %c0_144] : memref<36x128xf32, #tpu.memory_space<vmem>>, vector<10x128xf32>
    %147 = arith.truncf %146 : vector<10x128xf32> to vector<10x128xbf16>
    %c1_145 = arith.constant 1 : index
    %c0_146 = arith.constant 0 : index
    %c0_147 = arith.constant 0 : index
    %148 = vector.load %arg7[%c1_145, %c0_146, %c0_147] : memref<3x128x128xbf16, #tpu.memory_space<vmem>>, vector<1x128x128xbf16>
    %149 = vector.shape_cast %148 : vector<1x128x128xbf16> to vector<128x128xbf16>
    %cst_148 = arith.constant dense<0.000000e+00> : vector<10x128xf32>
    %150 = tpu.matmul %147, %149, %cst_148 {dimension_numbers = #tpu.dot_dimension_numbers<[1], [0], [0], [1], [0, 0, 1, 1], [], []>} : vector<10x128xbf16>, vector<128x128xbf16>, vector<10x128xf32> -> vector<10x128xf32>
    %151 = arith.addf %145, %150 : vector<10x128xf32>
    %c2_149 = arith.constant 2 : index
    %c0_150 = arith.constant 0 : index
    %152 = vector.load %arg21[%c2_149, %c0_150] : memref<36x128xf32, #tpu.memory_space<vmem>>, vector<10x128xf32>
    %153 = arith.truncf %152 : vector<10x128xf32> to vector<10x128xbf16>
    %c2_151 = arith.constant 2 : index
    %c0_152 = arith.constant 0 : index
    %c0_153 = arith.constant 0 : index
    %154 = vector.load %arg7[%c2_151, %c0_152, %c0_153] : memref<3x128x128xbf16, #tpu.memory_space<vmem>>, vector<1x128x128xbf16>
    %155 = vector.shape_cast %154 : vector<1x128x128xbf16> to vector<128x128xbf16>
    %cst_154 = arith.constant dense<0.000000e+00> : vector<10x128xf32>
    %156 = tpu.matmul %153, %155, %cst_154 {dimension_numbers = #tpu.dot_dimension_numbers<[1], [0], [0], [1], [0, 0, 1, 1], [], []>} : vector<10x128xbf16>, vector<128x128xbf16>, vector<10x128xf32> -> vector<10x128xf32>
    %157 = arith.addf %151, %156 : vector<10x128xf32>
    %c0_155 = arith.constant 0 : index
    %c0_156 = arith.constant 0 : index
    %158 = vector.load %arg16[%c0_155, %c0_156] : memref<1x128xf32, #tpu.memory_space<vmem>>, vector<1x128xf32>
    %159 = vector.broadcast %158 : vector<1x128xf32> to vector<10x128xf32>
    %160 = arith.addf %157, %159 : vector<10x128xf32>
    %c1_157 = arith.constant 1 : index
    %c0_158 = arith.constant 0 : index
    %161 = vector.load %arg21[%c1_157, %c0_158] : memref<36x128xf32, #tpu.memory_space<vmem>>, vector<10x128xf32>
    %162 = arith.addf %160, %161 : vector<10x128xf32>
    %cst_159 = arith.constant 0.000000e+00 : f32
    %163 = vector.broadcast %cst_159 : f32 to vector<10x128xf32>
    %164 = arith.maximumf %162, %163 : vector<10x128xf32>
    %cst_160 = arith.constant 0.000000e+00 : f32
    %165 = vector.broadcast %cst_160 : f32 to vector<12x128xf32>
    %c0_161 = arith.constant 0 : index
    %c0_162 = arith.constant 0 : index
    %166 = vector.load %arg22[%c0_161, %c0_162] : memref<36x128xf32, #tpu.memory_space<vmem>>, vector<12x128xf32>
    tpu.vector_store %arg22[%c0_161, %c0_162], %165 {strides = array<i32>} : memref<36x128xf32, #tpu.memory_space<vmem>>, vector<12x128xf32>,
    %167 = vector.extract_strided_slice %164 {offsets = [0, 0], sizes = [4, 128], strides = [1, 1]} : vector<10x128xf32> to vector<4x128xf32>
    %c1_163 = arith.constant 1 : index
    %c0_164 = arith.constant 0 : index
    %168 = vector.load %arg22[%c1_163, %c0_164] : memref<36x128xf32, #tpu.memory_space<vmem>>, vector<4x128xf32>
    tpu.vector_store %arg22[%c1_163, %c0_164], %167 {strides = array<i32>} : memref<36x128xf32, #tpu.memory_space<vmem>>, vector<4x128xf32>,
    %169 = vector.extract_strided_slice %164 {offsets = [6, 0], sizes = [4, 128], strides = [1, 1]} : vector<10x128xf32> to vector<4x128xf32>
    %c7_165 = arith.constant 7 : index
    %c0_166 = arith.constant 0 : index
    %170 = vector.load %arg22[%c7_165, %c0_166] : memref<36x128xf32, #tpu.memory_space<vmem>>, vector<4x128xf32>
    tpu.vector_store %arg22[%c7_165, %c0_166], %169 {strides = array<i32>} : memref<36x128xf32, #tpu.memory_space<vmem>>, vector<4x128xf32>,
    %c0_167 = arith.constant 0 : index
    %c0_168 = arith.constant 0 : index
    %171 = vector.load %arg22[%c0_167, %c0_168] : memref<36x128xf32, #tpu.memory_space<vmem>>, vector<10x128xf32>
    %172 = arith.truncf %171 : vector<10x128xf32> to vector<10x128xbf16>
    %c0_169 = arith.constant 0 : index
    %c0_170 = arith.constant 0 : index
    %c0_171 = arith.constant 0 : index
    %173 = vector.load %arg8[%c0_169, %c0_170, %c0_171] : memref<3x128x128xbf16, #tpu.memory_space<vmem>>, vector<1x128x128xbf16>
    %174 = vector.shape_cast %173 : vector<1x128x128xbf16> to vector<128x128xbf16>
    %cst_172 = arith.constant dense<0.000000e+00> : vector<10x128xf32>
    %175 = tpu.matmul %172, %174, %cst_172 {dimension_numbers = #tpu.dot_dimension_numbers<[1], [0], [0], [1], [0, 0, 1, 1], [], []>} : vector<10x128xbf16>, vector<128x128xbf16>, vector<10x128xf32> -> vector<10x128xf32>
    %c1_173 = arith.constant 1 : index
    %c0_174 = arith.constant 0 : index
    %176 = vector.load %arg22[%c1_173, %c0_174] : memref<36x128xf32, #tpu.memory_space<vmem>>, vector<10x128xf32>
    %177 = arith.truncf %176 : vector<10x128xf32> to vector<10x128xbf16>
    %c1_175 = arith.constant 1 : index
    %c0_176 = arith.constant 0 : index
    %c0_177 = arith.constant 0 : index
    %178 = vector.load %arg8[%c1_175, %c0_176, %c0_177] : memref<3x128x128xbf16, #tpu.memory_space<vmem>>, vector<1x128x128xbf16>
    %179 = vector.shape_cast %178 : vector<1x128x128xbf16> to vector<128x128xbf16>
    %cst_178 = arith.constant dense<0.000000e+00> : vector<10x128xf32>
    %180 = tpu.matmul %177, %179, %cst_178 {dimension_numbers = #tpu.dot_dimension_numbers<[1], [0], [0], [1], [0, 0, 1, 1], [], []>} : vector<10x128xbf16>, vector<128x128xbf16>, vector<10x128xf32> -> vector<10x128xf32>
    %181 = arith.addf %175, %180 : vector<10x128xf32>
    %c2_179 = arith.constant 2 : index
    %c0_180 = arith.constant 0 : index
    %182 = vector.load %arg22[%c2_179, %c0_180] : memref<36x128xf32, #tpu.memory_space<vmem>>, vector<10x128xf32>
    %183 = arith.truncf %182 : vector<10x128xf32> to vector<10x128xbf16>
    %c2_181 = arith.constant 2 : index
    %c0_182 = arith.constant 0 : index
    %c0_183 = arith.constant 0 : index
    %184 = vector.load %arg8[%c2_181, %c0_182, %c0_183] : memref<3x128x128xbf16, #tpu.memory_space<vmem>>, vector<1x128x128xbf16>
    %185 = vector.shape_cast %184 : vector<1x128x128xbf16> to vector<128x128xbf16>
    %cst_184 = arith.constant dense<0.000000e+00> : vector<10x128xf32>
    %186 = tpu.matmul %183, %185, %cst_184 {dimension_numbers = #tpu.dot_dimension_numbers<[1], [0], [0], [1], [0, 0, 1, 1], [], []>} : vector<10x128xbf16>, vector<128x128xbf16>, vector<10x128xf32> -> vector<10x128xf32>
    %187 = arith.addf %181, %186 : vector<10x128xf32>
    %c0_185 = arith.constant 0 : index
    %c0_186 = arith.constant 0 : index
    %188 = vector.load %arg17[%c0_185, %c0_186] : memref<1x128xf32, #tpu.memory_space<vmem>>, vector<1x128xf32>
    %189 = vector.broadcast %188 : vector<1x128xf32> to vector<10x128xf32>
    %190 = arith.addf %187, %189 : vector<10x128xf32>
    %c1_187 = arith.constant 1 : index
    %c0_188 = arith.constant 0 : index
    %191 = vector.load %arg22[%c1_187, %c0_188] : memref<36x128xf32, #tpu.memory_space<vmem>>, vector<10x128xf32>
    %192 = arith.addf %190, %191 : vector<10x128xf32>
    %cst_189 = arith.constant 0.000000e+00 : f32
    %193 = vector.broadcast %cst_189 : f32 to vector<10x128xf32>
    %194 = arith.maximumf %192, %193 : vector<10x128xf32>
    %cst_190 = arith.constant 0.000000e+00 : f32
    %195 = vector.broadcast %cst_190 : f32 to vector<12x128xf32>
    %c0_191 = arith.constant 0 : index
    %c0_192 = arith.constant 0 : index
    %196 = vector.load %arg21[%c0_191, %c0_192] : memref<36x128xf32, #tpu.memory_space<vmem>>, vector<12x128xf32>
    tpu.vector_store %arg21[%c0_191, %c0_192], %195 {strides = array<i32>} : memref<36x128xf32, #tpu.memory_space<vmem>>, vector<12x128xf32>,
    %197 = vector.extract_strided_slice %194 {offsets = [0, 0], sizes = [4, 128], strides = [1, 1]} : vector<10x128xf32> to vector<4x128xf32>
    %c1_193 = arith.constant 1 : index
    %c0_194 = arith.constant 0 : index
    %198 = vector.load %arg21[%c1_193, %c0_194] : memref<36x128xf32, #tpu.memory_space<vmem>>, vector<4x128xf32>
    tpu.vector_store %arg21[%c1_193, %c0_194], %197 {strides = array<i32>} : memref<36x128xf32, #tpu.memory_space<vmem>>, vector<4x128xf32>,
    %199 = vector.extract_strided_slice %194 {offsets = [6, 0], sizes = [4, 128], strides = [1, 1]} : vector<10x128xf32> to vector<4x128xf32>
    %c7_195 = arith.constant 7 : index
    %c0_196 = arith.constant 0 : index
    %200 = vector.load %arg21[%c7_195, %c0_196] : memref<36x128xf32, #tpu.memory_space<vmem>>, vector<4x128xf32>
    tpu.vector_store %arg21[%c7_195, %c0_196], %199 {strides = array<i32>} : memref<36x128xf32, #tpu.memory_space<vmem>>, vector<4x128xf32>,
    %c0_197 = arith.constant 0 : index
    %c0_198 = arith.constant 0 : index
    %201 = vector.load %arg21[%c0_197, %c0_198] : memref<36x128xf32, #tpu.memory_space<vmem>>, vector<10x128xf32>
    %202 = arith.truncf %201 : vector<10x128xf32> to vector<10x128xbf16>
    %c0_199 = arith.constant 0 : index
    %c0_200 = arith.constant 0 : index
    %c0_201 = arith.constant 0 : index
    %203 = vector.load %arg9[%c0_199, %c0_200, %c0_201] : memref<3x128x128xbf16, #tpu.memory_space<vmem>>, vector<1x128x128xbf16>
    %204 = vector.shape_cast %203 : vector<1x128x128xbf16> to vector<128x128xbf16>
    %cst_202 = arith.constant dense<0.000000e+00> : vector<10x128xf32>
    %205 = tpu.matmul %202, %204, %cst_202 {dimension_numbers = #tpu.dot_dimension_numbers<[1], [0], [0], [1], [0, 0, 1, 1], [], []>} : vector<10x128xbf16>, vector<128x128xbf16>, vector<10x128xf32> -> vector<10x128xf32>
    %c1_203 = arith.constant 1 : index
    %c0_204 = arith.constant 0 : index
    %206 = vector.load %arg21[%c1_203, %c0_204] : memref<36x128xf32, #tpu.memory_space<vmem>>, vector<10x128xf32>
    %207 = arith.truncf %206 : vector<10x128xf32> to vector<10x128xbf16>
    %c1_205 = arith.constant 1 : index
    %c0_206 = arith.constant 0 : index
    %c0_207 = arith.constant 0 : index
    %208 = vector.load %arg9[%c1_205, %c0_206, %c0_207] : memref<3x128x128xbf16, #tpu.memory_space<vmem>>, vector<1x128x128xbf16>
    %209 = vector.shape_cast %208 : vector<1x128x128xbf16> to vector<128x128xbf16>
    %cst_208 = arith.constant dense<0.000000e+00> : vector<10x128xf32>
    %210 = tpu.matmul %207, %209, %cst_208 {dimension_numbers = #tpu.dot_dimension_numbers<[1], [0], [0], [1], [0, 0, 1, 1], [], []>} : vector<10x128xbf16>, vector<128x128xbf16>, vector<10x128xf32> -> vector<10x128xf32>
    %211 = arith.addf %205, %210 : vector<10x128xf32>
    %c2_209 = arith.constant 2 : index
    %c0_210 = arith.constant 0 : index
    %212 = vector.load %arg21[%c2_209, %c0_210] : memref<36x128xf32, #tpu.memory_space<vmem>>, vector<10x128xf32>
    %213 = arith.truncf %212 : vector<10x128xf32> to vector<10x128xbf16>
    %c2_211 = arith.constant 2 : index
    %c0_212 = arith.constant 0 : index
    %c0_213 = arith.constant 0 : index
    %214 = vector.load %arg9[%c2_211, %c0_212, %c0_213] : memref<3x128x128xbf16, #tpu.memory_space<vmem>>, vector<1x128x128xbf16>
    %215 = vector.shape_cast %214 : vector<1x128x128xbf16> to vector<128x128xbf16>
    %cst_214 = arith.constant dense<0.000000e+00> : vector<10x128xf32>
    %216 = tpu.matmul %213, %215, %cst_214 {dimension_numbers = #tpu.dot_dimension_numbers<[1], [0], [0], [1], [0, 0, 1, 1], [], []>} : vector<10x128xbf16>, vector<128x128xbf16>, vector<10x128xf32> -> vector<10x128xf32>
    %217 = arith.addf %211, %216 : vector<10x128xf32>
    %c0_215 = arith.constant 0 : index
    %c0_216 = arith.constant 0 : index
    %218 = vector.load %arg18[%c0_215, %c0_216] : memref<1x128xf32, #tpu.memory_space<vmem>>, vector<1x128xf32>
    %219 = vector.broadcast %218 : vector<1x128xf32> to vector<10x128xf32>
    %220 = arith.addf %217, %219 : vector<10x128xf32>
    %c1_217 = arith.constant 1 : index
    %c0_218 = arith.constant 0 : index
    %221 = vector.load %arg21[%c1_217, %c0_218] : memref<36x128xf32, #tpu.memory_space<vmem>>, vector<10x128xf32>
    %222 = arith.addf %220, %221 : vector<10x128xf32>
    %cst_219 = arith.constant 0.000000e+00 : f32
    %223 = vector.broadcast %cst_219 : f32 to vector<10x128xf32>
    %224 = arith.maximumf %222, %223 : vector<10x128xf32>
    %cst_220 = arith.constant 0.000000e+00 : f32
    %225 = vector.broadcast %cst_220 : f32 to vector<8x128xf32>
    %c0_221 = arith.constant 0 : index
    %c0_222 = arith.constant 0 : index
    %226 = vector.load %arg22[%c0_221, %c0_222] : memref<36x128xf32, #tpu.memory_space<vmem>>, vector<8x128xf32>
    tpu.vector_store %arg22[%c0_221, %c0_222], %225 {strides = array<i32>} : memref<36x128xf32, #tpu.memory_space<vmem>>, vector<8x128xf32>,
    %227 = vector.extract_strided_slice %224 {offsets = [0, 0], sizes = [4, 128], strides = [1, 1]} : vector<10x128xf32> to vector<4x128xf32>
    %c0_223 = arith.constant 0 : index
    %c0_224 = arith.constant 0 : index
    %228 = vector.load %arg22[%c0_223, %c0_224] : memref<36x128xf32, #tpu.memory_space<vmem>>, vector<4x128xf32>
    tpu.vector_store %arg22[%c0_223, %c0_224], %227 {strides = array<i32>} : memref<36x128xf32, #tpu.memory_space<vmem>>, vector<4x128xf32>,
    %229 = vector.extract_strided_slice %224 {offsets = [6, 0], sizes = [4, 128], strides = [1, 1]} : vector<10x128xf32> to vector<4x128xf32>
    %c4 = arith.constant 4 : index
    %c0_225 = arith.constant 0 : index
    %230 = vector.load %arg22[%c4, %c0_225] : memref<36x128xf32, #tpu.memory_space<vmem>>, vector<4x128xf32>
    tpu.vector_store %arg22[%c4, %c0_225], %229 {strides = array<i32>} : memref<36x128xf32, #tpu.memory_space<vmem>>, vector<4x128xf32>,
    %c0_226 = arith.constant 0 : index
    %c0_227 = arith.constant 0 : index
    %231 = vector.load %arg22[%c0_226, %c0_227] : memref<36x128xf32, #tpu.memory_space<vmem>>, vector<6x128xf32>
    %232 = arith.truncf %231 : vector<6x128xf32> to vector<6x128xbf16>
    %c0_228 = arith.constant 0 : index
    %c0_229 = arith.constant 0 : index
    %c0_230 = arith.constant 0 : index
    %233 = vector.load %arg10[%c0_228, %c0_229, %c0_230] : memref<3x128x128xbf16, #tpu.memory_space<vmem>>, vector<1x128x128xbf16>
    %234 = vector.shape_cast %233 : vector<1x128x128xbf16> to vector<128x128xbf16>
    %cst_231 = arith.constant dense<0.000000e+00> : vector<6x128xf32>
    %235 = tpu.matmul %232, %234, %cst_231 {dimension_numbers = #tpu.dot_dimension_numbers<[1], [0], [0], [1], [0, 0, 1, 1], [], []>} : vector<6x128xbf16>, vector<128x128xbf16>, vector<6x128xf32> -> vector<6x128xf32>
    %c1_232 = arith.constant 1 : index
    %c0_233 = arith.constant 0 : index
    %236 = vector.load %arg22[%c1_232, %c0_233] : memref<36x128xf32, #tpu.memory_space<vmem>>, vector<6x128xf32>
    %237 = arith.truncf %236 : vector<6x128xf32> to vector<6x128xbf16>
    %c1_234 = arith.constant 1 : index
    %c0_235 = arith.constant 0 : index
    %c0_236 = arith.constant 0 : index
    %238 = vector.load %arg10[%c1_234, %c0_235, %c0_236] : memref<3x128x128xbf16, #tpu.memory_space<vmem>>, vector<1x128x128xbf16>
    %239 = vector.shape_cast %238 : vector<1x128x128xbf16> to vector<128x128xbf16>
    %cst_237 = arith.constant dense<0.000000e+00> : vector<6x128xf32>
    %240 = tpu.matmul %237, %239, %cst_237 {dimension_numbers = #tpu.dot_dimension_numbers<[1], [0], [0], [1], [0, 0, 1, 1], [], []>} : vector<6x128xbf16>, vector<128x128xbf16>, vector<6x128xf32> -> vector<6x128xf32>
    %241 = arith.addf %235, %240 : vector<6x128xf32>
    %c2_238 = arith.constant 2 : index
    %c0_239 = arith.constant 0 : index
    %242 = vector.load %arg22[%c2_238, %c0_239] : memref<36x128xf32, #tpu.memory_space<vmem>>, vector<6x128xf32>
    %243 = arith.truncf %242 : vector<6x128xf32> to vector<6x128xbf16>
    %c2_240 = arith.constant 2 : index
    %c0_241 = arith.constant 0 : index
    %c0_242 = arith.constant 0 : index
    %244 = vector.load %arg10[%c2_240, %c0_241, %c0_242] : memref<3x128x128xbf16, #tpu.memory_space<vmem>>, vector<1x128x128xbf16>
    %245 = vector.shape_cast %244 : vector<1x128x128xbf16> to vector<128x128xbf16>
    %cst_243 = arith.constant dense<0.000000e+00> : vector<6x128xf32>
    %246 = tpu.matmul %243, %245, %cst_243 {dimension_numbers = #tpu.dot_dimension_numbers<[1], [0], [0], [1], [0, 0, 1, 1], [], []>} : vector<6x128xbf16>, vector<128x128xbf16>, vector<6x128xf32> -> vector<6x128xf32>
    %247 = arith.addf %241, %246 : vector<6x128xf32>
    %c0_244 = arith.constant 0 : index
    %c0_245 = arith.constant 0 : index
    %248 = vector.load %arg19[%c0_244, %c0_245] : memref<1x128xf32, #tpu.memory_space<vmem>>, vector<1x128xf32>
    %249 = vector.broadcast %248 : vector<1x128xf32> to vector<6x128xf32>
    %250 = arith.addf %247, %249 : vector<6x128xf32>
    %cst_246 = arith.constant 0.000000e+00 : f32
    %251 = vector.broadcast %cst_246 : f32 to vector<6x128xf32>
    %252 = arith.maximumf %250, %251 : vector<6x128xf32>
    %253 = vector.extract_strided_slice %252 {offsets = [0, 0], sizes = [2, 128], strides = [1, 1]} : vector<6x128xf32> to vector<2x128xf32>
    %c0_247 = arith.constant 0 : index
    %c0_248 = arith.constant 0 : index
    %c0_249 = arith.constant 0 : index
    %254 = vector.load %arg20[%c0_247, %c0_248, %c0_249] : memref<2x2x128xf32, #tpu.memory_space<vmem>>, vector<1x2x128xf32>
    %255 = vector.shape_cast %254 : vector<1x2x128xf32> to vector<2x128xf32>
    %256 = vector.shape_cast %253 : vector<2x128xf32> to vector<1x2x128xf32>
    tpu.vector_store %arg20[%c0_247, %c0_248, %c0_249], %256 {strides = array<i32>} : memref<2x2x128xf32, #tpu.memory_space<vmem>>, vector<1x2x128xf32>,
    %257 = vector.extract_strided_slice %252 {offsets = [4, 0], sizes = [2, 128], strides = [1, 1]} : vector<6x128xf32> to vector<2x128xf32>
    %c1_250 = arith.constant 1 : index
    %c0_251 = arith.constant 0 : index
    %c0_252 = arith.constant 0 : index
    %258 = vector.load %arg20[%c1_250, %c0_251, %c0_252] : memref<2x2x128xf32, #tpu.memory_space<vmem>>, vector<1x2x128xf32>
    %259 = vector.shape_cast %258 : vector<1x2x128xf32> to vector<2x128xf32>
    %260 = vector.shape_cast %257 : vector<2x128xf32> to vector<1x2x128xf32>
    tpu.vector_store %arg20[%c1_250, %c0_251, %c0_252], %260 {strides = array<i32>} : memref<2x2x128xf32, #tpu.memory_space<vmem>>, vector<1x2x128xf32>,
    return
  }
  func.func @transform_0(%arg0: i32) -> (i32, i32) {
    %c0_i32 = arith.constant 0 : i32
    %c0_i32_0 = arith.constant 0 : i32
    return %arg0, %c0_i32 : i32, i32
  }
  func.func @transform_1(%arg0: i32) -> (i32, i32, i32) {
    %c0_i32 = arith.constant 0 : i32
    %c0_i32_0 = arith.constant 0 : i32
    %c0_i32_1 = arith.constant 0 : i32
    %c0_i32_2 = arith.constant 0 : i32
    return %c0_i32, %c0_i32_0, %c0_i32_1 : i32, i32, i32
  }
  func.func @transform_2(%arg0: i32) -> (i32, i32, i32) {
    %c0_i32 = arith.constant 0 : i32
    %c0_i32_0 = arith.constant 0 : i32
    %c0_i32_1 = arith.constant 0 : i32
    %c0_i32_2 = arith.constant 0 : i32
    return %c0_i32, %c0_i32_0, %c0_i32_1 : i32, i32, i32
  }
  func.func @transform_3(%arg0: i32) -> (i32, i32, i32) {
    %c0_i32 = arith.constant 0 : i32
    %c0_i32_0 = arith.constant 0 : i32
    %c0_i32_1 = arith.constant 0 : i32
    %c0_i32_2 = arith.constant 0 : i32
    return %c0_i32, %c0_i32_0, %c0_i32_1 : i32, i32, i32
  }
  func.func @transform_4(%arg0: i32) -> (i32, i32, i32) {
    %c0_i32 = arith.constant 0 : i32
    %c0_i32_0 = arith.constant 0 : i32
    %c0_i32_1 = arith.constant 0 : i32
    %c0_i32_2 = arith.constant 0 : i32
    return %c0_i32, %c0_i32_0, %c0_i32_1 : i32, i32, i32
  }
  func.func @transform_5(%arg0: i32) -> (i32, i32, i32) {
    %c0_i32 = arith.constant 0 : i32
    %c0_i32_0 = arith.constant 0 : i32
    %c0_i32_1 = arith.constant 0 : i32
    %c0_i32_2 = arith.constant 0 : i32
    return %c0_i32, %c0_i32_0, %c0_i32_1 : i32, i32, i32
  }
  func.func @transform_6(%arg0: i32) -> (i32, i32, i32) {
    %c0_i32 = arith.constant 0 : i32
    %c0_i32_0 = arith.constant 0 : i32
    %c0_i32_1 = arith.constant 0 : i32
    %c0_i32_2 = arith.constant 0 : i32
    return %c0_i32, %c0_i32_0, %c0_i32_1 : i32, i32, i32
  }
  func.func @transform_7(%arg0: i32) -> (i32, i32, i32) {
    %c0_i32 = arith.constant 0 : i32
    %c0_i32_0 = arith.constant 0 : i32
    %c0_i32_1 = arith.constant 0 : i32
    %c0_i32_2 = arith.constant 0 : i32
    return %c0_i32, %c0_i32_0, %c0_i32_1 : i32, i32, i32
  }
  func.func @transform_8(%arg0: i32) -> (i32, i32, i32) {
    %c0_i32 = arith.constant 0 : i32
    %c0_i32_0 = arith.constant 0 : i32
    %c0_i32_1 = arith.constant 0 : i32
    %c0_i32_2 = arith.constant 0 : i32
    return %c0_i32, %c0_i32_0, %c0_i32_1 : i32, i32, i32
  }
  func.func @transform_9(%arg0: i32) -> (i32, i32, i32) {
    %c0_i32 = arith.constant 0 : i32
    %c0_i32_0 = arith.constant 0 : i32
    %c0_i32_1 = arith.constant 0 : i32
    %c0_i32_2 = arith.constant 0 : i32
    return %c0_i32, %c0_i32_0, %c0_i32_1 : i32, i32, i32
  }
  func.func @transform_10(%arg0: i32) -> (i32, i32) {
    %c0_i32 = arith.constant 0 : i32
    %c0_i32_0 = arith.constant 0 : i32
    %c0_i32_1 = arith.constant 0 : i32
    return %c0_i32, %c0_i32_0 : i32, i32
  }
  func.func @transform_11(%arg0: i32) -> (i32, i32) {
    %c0_i32 = arith.constant 0 : i32
    %c0_i32_0 = arith.constant 0 : i32
    %c0_i32_1 = arith.constant 0 : i32
    return %c0_i32, %c0_i32_0 : i32, i32
  }
  func.func @transform_12(%arg0: i32) -> (i32, i32) {
    %c0_i32 = arith.constant 0 : i32
    %c0_i32_0 = arith.constant 0 : i32
    %c0_i32_1 = arith.constant 0 : i32
    return %c0_i32, %c0_i32_0 : i32, i32
  }
  func.func @transform_13(%arg0: i32) -> (i32, i32) {
    %c0_i32 = arith.constant 0 : i32
    %c0_i32_0 = arith.constant 0 : i32
    %c0_i32_1 = arith.constant 0 : i32
    return %c0_i32, %c0_i32_0 : i32, i32
  }
  func.func @transform_14(%arg0: i32) -> (i32, i32) {
    %c0_i32 = arith.constant 0 : i32
    %c0_i32_0 = arith.constant 0 : i32
    %c0_i32_1 = arith.constant 0 : i32
    return %c0_i32, %c0_i32_0 : i32, i32
  }
  func.func @transform_15(%arg0: i32) -> (i32, i32) {
    %c0_i32 = arith.constant 0 : i32
    %c0_i32_0 = arith.constant 0 : i32
    %c0_i32_1 = arith.constant 0 : i32
    return %c0_i32, %c0_i32_0 : i32, i32
  }
  func.func @transform_16(%arg0: i32) -> (i32, i32) {
    %c0_i32 = arith.constant 0 : i32
    %c0_i32_0 = arith.constant 0 : i32
    %c0_i32_1 = arith.constant 0 : i32
    return %c0_i32, %c0_i32_0 : i32, i32
  }
  func.func @transform_17(%arg0: i32) -> (i32, i32) {
    %c0_i32 = arith.constant 0 : i32
    %c0_i32_0 = arith.constant 0 : i32
    %c0_i32_1 = arith.constant 0 : i32
    return %c0_i32, %c0_i32_0 : i32, i32
  }
  func.func @transform_18(%arg0: i32) -> (i32, i32) {
    %c0_i32 = arith.constant 0 : i32
    %c0_i32_0 = arith.constant 0 : i32
    %c0_i32_1 = arith.constant 0 : i32
    return %c0_i32, %c0_i32_0 : i32, i32
  }
  func.func @transform_19(%arg0: i32) -> (i32, i32, i32) {
    %c0_i32 = arith.constant 0 : i32
    %c0_i32_0 = arith.constant 0 : i32
    %c0_i32_1 = arith.constant 0 : i32
    return %arg0, %c0_i32, %c0_i32_0 : i32, i32, i32
  }
}

</mosaic_0001>

<llo_original>
// kernel: audio_encoder_w2v_impl.1
$region0: #{audio_encoder_w2v_impl.1}
  #allocation0 [shape = 'u32[]', space=smem, size = 0x4, offset = 0x4, fixed_abs, tag = 'smem constant byte address 0x4 - core index']
  #allocation1 [shape = 'u32[144,128]{1,0:T(1,128)}', space=vmem, size = 0x12000, scoped, tag = 'internal scratch']
  #allocation2 [shape = 'f32[36,128]{1,0:T(8,128)}', space=vmem, size = 0x5000, scoped, tag = 'scratch operand']
  #allocation3 [shape = 'f32[36,128]{1,0:T(8,128)}', space=vmem, size = 0x5000, scoped, tag = 'scratch operand']
  %s0 = inlined_call_operand.vmem [shape: bf16[36,768], index: 0, kind: input, shape index: {}]
  %s1 = inlined_call_operand.vmem [shape: bf16[3,768,128], index: 1, kind: input, shape index: {}]
  %s2 = inlined_call_operand.vmem [shape: bf16[3,128,128], index: 2, kind: input, shape index: {}]
  %s3 = inlined_call_operand.vmem [shape: bf16[3,128,128], index: 3, kind: input, shape index: {}]
  %s4 = inlined_call_operand.vmem [shape: bf16[3,128,128], index: 4, kind: input, shape index: {}]
  %s5 = inlined_call_operand.vmem [shape: bf16[3,128,128], index: 5, kind: input, shape index: {}]
  %s6 = inlined_call_operand.vmem [shape: bf16[3,128,128], index: 6, kind: input, shape index: {}]
  %s7 = inlined_call_operand.vmem [shape: bf16[3,128,128], index: 7, kind: input, shape index: {}]
  %s8 = inlined_call_operand.vmem [shape: bf16[3,128,128], index: 8, kind: input, shape index: {}]
  %s9 = inlined_call_operand.vmem [shape: bf16[3,128,128], index: 9, kind: input, shape index: {}]
  %s10 = inlined_call_operand.vmem [shape: f32[1,128], index: 10, kind: input, shape index: {}]
  %s11 = inlined_call_operand.vmem [shape: f32[1,128], index: 11, kind: input, shape index: {}]
  %s12 = inlined_call_operand.vmem [shape: f32[1,128], index: 12, kind: input, shape index: {}]
  %s13 = inlined_call_operand.vmem [shape: f32[1,128], index: 13, kind: input, shape index: {}]
  %s14 = inlined_call_operand.vmem [shape: f32[1,128], index: 14, kind: input, shape index: {}]
  %s15 = inlined_call_operand.vmem [shape: f32[1,128], index: 15, kind: input, shape index: {}]
  %s16 = inlined_call_operand.vmem [shape: f32[1,128], index: 16, kind: input, shape index: {}]
  %s17 = inlined_call_operand.vmem [shape: f32[1,128], index: 17, kind: input, shape index: {}]
  %s18 = inlined_call_operand.vmem [shape: f32[1,128], index: 18, kind: input, shape index: {}]
  %s19 = inlined_call_operand.hbm [shape: f32[2,2,128], index: 19, kind: output, shape index: {}]
  %s20 = sld [smem:[#allocation0]]
  $region86: #{audio_encoder_w2v_impl.1} parent=0
    _
  %s22 = ssub.s32 1, %s20
  %s23 = scalar_select 0, %s22, %s20
  $region1: #{audio_encoder_w2v_impl.1} parent=0
    #allocation4 [shape = 'u8[2048]{0}', space=vmem, size = 0x800, scoped, tag = 'output window, operand 0, single buffered']
    #allocation5 [shape = 's32[1]{0}', space=sflag, size = 0x4, scoped, tag = 'scoped memory for audio_encoder_w2v_impl.1']
    %24 = vsyncpa [#allocation5], 0
    // Predicated region
    $region2: #{audio_encoder_w2v_impl.1} parent=1 // pred_check
      _
    $region3: #{audio_encoder_w2v_impl.1} parent=1 // pred_check_branch
      %26 = sbr.rel (0) target = $region5
    $region4: #{audio_encoder_w2v_impl.1} parent=1 // pred_region
      _
    $region5: #{audio_encoder_w2v_impl.1} parent=1 // pred_fallthru
      _
    // Predicated region
    $region6: #{audio_encoder_w2v_impl.1} parent=1 // pred_check
      _
    $region7: #{audio_encoder_w2v_impl.1} parent=1 // pred_check_branch
      %28 = sbr.rel (0) target = $region9
    $region8: #{audio_encoder_w2v_impl.1} parent=1 // pred_region
      _
    $region9: #{audio_encoder_w2v_impl.1} parent=1 // pred_fallthru
      _
    // Predicated region
    $region10: #{audio_encoder_w2v_impl.1} parent=1 // pred_check
      _
    $region11: #{audio_encoder_w2v_impl.1} parent=1 // pred_check_branch
      %30 = sbr.rel (0) target = $region13
    $region12: #{audio_encoder_w2v_impl.1} parent=1 // pred_region
      _
    $region13: #{audio_encoder_w2v_impl.1} parent=1 // pred_fallthru
      _
    // Predicated region
    $region14: #{audio_encoder_w2v_impl.1} parent=1 // pred_check
      _
    $region15: #{audio_encoder_w2v_impl.1} parent=1 // pred_check_branch
      %32 = sbr.rel (0) target = $region17
    $region16: #{audio_encoder_w2v_impl.1} parent=1 // pred_region
      _
    $region17: #{audio_encoder_w2v_impl.1} parent=1 // pred_fallthru
      _
    // Predicated region
    $region18: #{audio_encoder_w2v_impl.1} parent=1 // pred_check
      _
    $region19: #{audio_encoder_w2v_impl.1} parent=1 // pred_check_branch
      %34 = sbr.rel (0) target = $region21
    $region20: #{audio_encoder_w2v_impl.1} parent=1 // pred_region
      _
    $region21: #{audio_encoder_w2v_impl.1} parent=1 // pred_fallthru
      _
    // Predicated region
    $region22: #{audio_encoder_w2v_impl.1} parent=1 // pred_check
      _
    $region23: #{audio_encoder_w2v_impl.1} parent=1 // pred_check_branch
      %36 = sbr.rel (0) target = $region25
    $region24: #{audio_encoder_w2v_impl.1} parent=1 // pred_region
      _
    $region25: #{audio_encoder_w2v_impl.1} parent=1 // pred_fallthru
      _
    // Predicated region
    $region26: #{audio_encoder_w2v_impl.1} parent=1 // pred_check
      _
    $region27: #{audio_encoder_w2v_impl.1} parent=1 // pred_check_branch
      %38 = sbr.rel (0) target = $region29
    $region28: #{audio_encoder_w2v_impl.1} parent=1 // pred_region
      _
    $region29: #{audio_encoder_w2v_impl.1} parent=1 // pred_fallthru
      _
    // Predicated region
    $region30: #{audio_encoder_w2v_impl.1} parent=1 // pred_check
      _
    $region31: #{audio_encoder_w2v_impl.1} parent=1 // pred_check_branch
      %40 = sbr.rel (0) target = $region33
    $region32: #{audio_encoder_w2v_impl.1} parent=1 // pred_region
      _
    $region33: #{audio_encoder_w2v_impl.1} parent=1 // pred_fallthru
      _
    // Predicated region
    $region34: #{audio_encoder_w2v_impl.1} parent=1 // pred_check
      _
    $region35: #{audio_encoder_w2v_impl.1} parent=1 // pred_check_branch
      %42 = sbr.rel (0) target = $region37
    $region36: #{audio_encoder_w2v_impl.1} parent=1 // pred_region
      _
    $region37: #{audio_encoder_w2v_impl.1} parent=1 // pred_fallthru
      _
    // Predicated region
    $region38: #{audio_encoder_w2v_impl.1} parent=1 // pred_check
      _
    $region39: #{audio_encoder_w2v_impl.1} parent=1 // pred_check_branch
      %44 = sbr.rel (0) target = $region41
    $region40: #{audio_encoder_w2v_impl.1} parent=1 // pred_region
      _
    $region41: #{audio_encoder_w2v_impl.1} parent=1 // pred_fallthru
      _
    // Predicated region
    $region42: #{audio_encoder_w2v_impl.1} parent=1 // pred_check
      _
    $region43: #{audio_encoder_w2v_impl.1} parent=1 // pred_check_branch
      %46 = sbr.rel (0) target = $region45
    $region44: #{audio_encoder_w2v_impl.1} parent=1 // pred_region
      _
    $region45: #{audio_encoder_w2v_impl.1} parent=1 // pred_fallthru
      _
    // Predicated region
    $region46: #{audio_encoder_w2v_impl.1} parent=1 // pred_check
      _
    $region47: #{audio_encoder_w2v_impl.1} parent=1 // pred_check_branch
      %48 = sbr.rel (0) target = $region49
    $region48: #{audio_encoder_w2v_impl.1} parent=1 // pred_region
      _
    $region49: #{audio_encoder_w2v_impl.1} parent=1 // pred_fallthru
      _
    // Predicated region
    $region50: #{audio_encoder_w2v_impl.1} parent=1 // pred_check
      _
    $region51: #{audio_encoder_w2v_impl.1} parent=1 // pred_check_branch
      %50 = sbr.rel (0) target = $region53
    $region52: #{audio_encoder_w2v_impl.1} parent=1 // pred_region
      _
    $region53: #{audio_encoder_w2v_impl.1} parent=1 // pred_fallthru
      _
    // Predicated region
    $region54: #{audio_encoder_w2v_impl.1} parent=1 // pred_check
      _
    $region55: #{audio_encoder_w2v_impl.1} parent=1 // pred_check_branch
      %52 = sbr.rel (0) target = $region57
    $region56: #{audio_encoder_w2v_impl.1} parent=1 // pred_region
      _
    $region57: #{audio_encoder_w2v_impl.1} parent=1 // pred_fallthru
      _
    // Predicated region
    $region58: #{audio_encoder_w2v_impl.1} parent=1 // pred_check
      _
    $region59: #{audio_encoder_w2v_impl.1} parent=1 // pred_check_branch
      %54 = sbr.rel (0) target = $region61
    $region60: #{audio_encoder_w2v_impl.1} parent=1 // pred_region
      _
    $region61: #{audio_encoder_w2v_impl.1} parent=1 // pred_fallthru
      _
    // Predicated region
    $region62: #{audio_encoder_w2v_impl.1} parent=1 // pred_check
      _
    $region63: #{audio_encoder_w2v_impl.1} parent=1 // pred_check_branch
      %56 = sbr.rel (0) target = $region65
    $region64: #{audio_encoder_w2v_impl.1} parent=1 // pred_region
      _
    $region65: #{audio_encoder_w2v_impl.1} parent=1 // pred_fallthru
      _
    // Predicated region
    $region66: #{audio_encoder_w2v_impl.1} parent=1 // pred_check
      _
    $region67: #{audio_encoder_w2v_impl.1} parent=1 // pred_check_branch
      %58 = sbr.rel (0) target = $region69
    $region68: #{audio_encoder_w2v_impl.1} parent=1 // pred_region
      _
    $region69: #{audio_encoder_w2v_impl.1} parent=1 // pred_fallthru
      _
    // Predicated region
    $region70: #{audio_encoder_w2v_impl.1} parent=1 // pred_check
      _
    $region71: #{audio_encoder_w2v_impl.1} parent=1 // pred_check_branch
      %60 = sbr.rel (0) target = $region73
    $region72: #{audio_encoder_w2v_impl.1} parent=1 // pred_region
      _
    $region73: #{audio_encoder_w2v_impl.1} parent=1 // pred_fallthru
      _
    // Predicated region
    $region74: #{audio_encoder_w2v_impl.1} parent=1 // pred_check
      _
    $region75: #{audio_encoder_w2v_impl.1} parent=1 // pred_check_branch
      %62 = sbr.rel (0) target = $region77
    $region76: #{audio_encoder_w2v_impl.1} parent=1 // pred_region
      _
    $region77: #{audio_encoder_w2v_impl.1} parent=1 // pred_fallthru
      _
    %v64 = vld [vmem:[%s0] sm:$0xff]
    %v65 = vld [vmem:[%s0 + $0x8] sm:$0xff]
    %v66 = vld [vmem:[%s0 + $0x10] sm:$0xff]
    %v67 = vld [vmem:[%s0 + $0x18] sm:$0xff]
    %v68 = vld [vmem:[%s0 + $0x20] sm:$0xff]
    %v69 = vld [vmem:[%s0 + $0x28] sm:$0xff]
    %v70 = vld [vmem:[%s0 + $0x30] sm:$0xff]
    %v71 = vld [vmem:[%s0 + $0x38] sm:$0xff]
    %v72 = vld [vmem:[%s0 + $0x40] sm:$0xff]
    %v73 = vld [vmem:[%s0 + $0x48] sm:$0xff]
    %v74 = vld [vmem:[%s0 + $0x50] sm:$0xff]
    %v75 = vld [vmem:[%s0 + $0x58] sm:$0xff]
    %v76 = vld [vmem:[%s0 + $0x60] sm:$0x11]
    %v77 = vld [vmem:[%s0 + $0x68] sm:$0x11]
    %v78 = vld [vmem:[%s0 + $0x70] sm:$0x11]
    %v79 = vld [vmem:[%s1] sm:$0xf]
    %v80 = vld [vmem:[%s1 + $0x4] sm:$0xf]
    %v81 = vld [vmem:[%s1 + $0x8] sm:$0xf]
    %v82 = vld [vmem:[%s1 + $0xc] sm:$0xf]
    %v83 = vld [vmem:[%s1 + $0x10] sm:$0xf]
    %v84 = vld [vmem:[%s1 + $0x14] sm:$0xf]
    %v85 = vld [vmem:[%s1 + $0x18] sm:$0xf]
    %v86 = vld [vmem:[%s1 + $0x1c] sm:$0xf]
    %v87 = vld [vmem:[%s1 + $0x20] sm:$0xf]
    %v88 = vld [vmem:[%s1 + $0x24] sm:$0xf]
    %v89 = vld [vmem:[%s1 + $0x28] sm:$0xf]
    %v90 = vld [vmem:[%s1 + $0x2c] sm:$0xf]
    %v91 = vld [vmem:[%s1 + $0x30] sm:$0xf]
    %v92 = vld [vmem:[%s1 + $0x34] sm:$0xf]
    %v93 = vld [vmem:[%s1 + $0x38] sm:$0xf]
    %v94 = vld [vmem:[%s1 + $0x3c] sm:$0xf]
    %v95 = vld [vmem:[%s1 + $0x40] sm:$0xf]
    %v96 = vld [vmem:[%s1 + $0x44] sm:$0xf]
    %v97 = vld [vmem:[%s1 + $0x48] sm:$0xf]
    %v98 = vld [vmem:[%s1 + $0x4c] sm:$0xf]
    %v99 = vld [vmem:[%s1 + $0x50] sm:$0xf]
    %v100 = vld [vmem:[%s1 + $0x54] sm:$0xf]
    %v101 = vld [vmem:[%s1 + $0x58] sm:$0xf]
    %v102 = vld [vmem:[%s1 + $0x5c] sm:$0xf]
    %v103 = vld [vmem:[%s1 + $0x60] sm:$0xf]
    %v104 = vld [vmem:[%s1 + $0x64] sm:$0xf]
    %v105 = vld [vmem:[%s1 + $0x68] sm:$0xf]
    %v106 = vld [vmem:[%s1 + $0x6c] sm:$0xf]
    %v107 = vld [vmem:[%s1 + $0x70] sm:$0xf]
    %v108 = vld [vmem:[%s1 + $0x74] sm:$0xf]
    %v109 = vld [vmem:[%s1 + $0x78] sm:$0xf]
    %v110 = vld [vmem:[%s1 + $0x7c] sm:$0xf]
    %v111 = vld [vmem:[%s1 + $0x80] sm:$0xf]
    %v112 = vld [vmem:[%s1 + $0x84] sm:$0xf]
    %v113 = vld [vmem:[%s1 + $0x88] sm:$0xf]
    %v114 = vld [vmem:[%s1 + $0x8c] sm:$0xf]
    %v115 = vld [vmem:[%s1 + $0x90] sm:$0xf]
    %v116 = vld [vmem:[%s1 + $0x94] sm:$0xf]
    %v117 = vld [vmem:[%s1 + $0x98] sm:$0xf]
    %v118 = vld [vmem:[%s1 + $0x9c] sm:$0xf]
    %v119 = vld [vmem:[%s1 + $0xa0] sm:$0xf]
    %v120 = vld [vmem:[%s1 + $0xa4] sm:$0xf]
    %v121 = vld [vmem:[%s1 + $0xa8] sm:$0xf]
    %v122 = vld [vmem:[%s1 + $0xac] sm:$0xf]
    %v123 = vld [vmem:[%s1 + $0xb0] sm:$0xf]
    %v124 = vld [vmem:[%s1 + $0xb4] sm:$0xf]
    %v125 = vld [vmem:[%s1 + $0xb8] sm:$0xf]
    %v126 = vld [vmem:[%s1 + $0xbc] sm:$0xf]
    %v127 = vld [vmem:[%s1 + $0xc0] sm:$0xf]
    %v128 = vld [vmem:[%s1 + $0xc4] sm:$0xf]
    %v129 = vld [vmem:[%s1 + $0xc8] sm:$0xf]
    %v130 = vld [vmem:[%s1 + $0xcc] sm:$0xf]
    %v131 = vld [vmem:[%s1 + $0xd0] sm:$0xf]
    %v132 = vld [vmem:[%s1 + $0xd4] sm:$0xf]
    %v133 = vld [vmem:[%s1 + $0xd8] sm:$0xf]
    %v134 = vld [vmem:[%s1 + $0xdc] sm:$0xf]
    %v135 = vld [vmem:[%s1 + $0xe0] sm:$0xf]
    %v136 = vld [vmem:[%s1 + $0xe4] sm:$0xf]
    %v137 = vld [vmem:[%s1 + $0xe8] sm:$0xf]
    %v138 = vld [vmem:[%s1 + $0xec] sm:$0xf]
    %v139 = vld [vmem:[%s1 + $0xf0] sm:$0xf]
    %v140 = vld [vmem:[%s1 + $0xf4] sm:$0xf]
    %v141 = vld [vmem:[%s1 + $0xf8] sm:$0xf]
    %v142 = vld [vmem:[%s1 + $0xfc] sm:$0xf]
    %v143 = vld [vmem:[%s1 + $0x100] sm:$0xf]
    %v144 = vld [vmem:[%s1 + $0x104] sm:$0xf]
    %v145 = vld [vmem:[%s1 + $0x108] sm:$0xf]
    %v146 = vld [vmem:[%s1 + $0x10c] sm:$0xf]
    %v147 = vld [vmem:[%s1 + $0x110] sm:$0xf]
    %v148 = vld [vmem:[%s1 + $0x114] sm:$0xf]
    %v149 = vld [vmem:[%s1 + $0x118] sm:$0xf]
    %v150 = vld [vmem:[%s1 + $0x11c] sm:$0xf]
    %v151 = vld [vmem:[%s1 + $0x120] sm:$0xf]
    %v152 = vld [vmem:[%s1 + $0x124] sm:$0xf]
    %v153 = vld [vmem:[%s1 + $0x128] sm:$0xf]
    %v154 = vld [vmem:[%s1 + $0x12c] sm:$0xf]
    %v155 = vld [vmem:[%s1 + $0x130] sm:$0xf]
    %v156 = vld [vmem:[%s1 + $0x134] sm:$0xf]
    %v157 = vld [vmem:[%s1 + $0x138] sm:$0xf]
    %v158 = vld [vmem:[%s1 + $0x13c] sm:$0xf]
    %v159 = vld [vmem:[%s1 + $0x140] sm:$0xf]
    %v160 = vld [vmem:[%s1 + $0x144] sm:$0xf]
    %v161 = vld [vmem:[%s1 + $0x148] sm:$0xf]
    %v162 = vld [vmem:[%s1 + $0x14c] sm:$0xf]
    %v163 = vld [vmem:[%s1 + $0x150] sm:$0xf]
    %v164 = vld [vmem:[%s1 + $0x154] sm:$0xf]
    %v165 = vld [vmem:[%s1 + $0x158] sm:$0xf]
    %v166 = vld [vmem:[%s1 + $0x15c] sm:$0xf]
    %v167 = vld [vmem:[%s1 + $0x160] sm:$0xf]
    %v168 = vld [vmem:[%s1 + $0x164] sm:$0xf]
    %v169 = vld [vmem:[%s1 + $0x168] sm:$0xf]
    %v170 = vld [vmem:[%s1 + $0x16c] sm:$0xf]
    %v171 = vld [vmem:[%s1 + $0x170] sm:$0xf]
    %v172 = vld [vmem:[%s1 + $0x174] sm:$0xf]
    %v173 = vld [vmem:[%s1 + $0x178] sm:$0xf]
    %v174 = vld [vmem:[%s1 + $0x17c] sm:$0xf]
    %v175 = vld [vmem:[%s0 + $0x60] sm:$0x33]
    %v176 = vld [vmem:[%s0 + $0x68] sm:$0x33]
    %v177 = vld [vmem:[%s0 + $0x70] sm:$0x33]
    %s178 = scalar_lea.vmem %s1, 384
    %v179 = vld [vmem:[%s178] sm:$0xf]
    %v180 = vld [vmem:[%s178 + $0x4] sm:$0xf]
    %v181 = vld [vmem:[%s178 + $0x8] sm:$0xf]
    %v182 = vld [vmem:[%s178 + $0xc] sm:$0xf]
    %v183 = vld [vmem:[%s178 + $0x10] sm:$0xf]
    %v184 = vld [vmem:[%s178 + $0x14] sm:$0xf]
    %v185 = vld [vmem:[%s178 + $0x18] sm:$0xf]
    %v186 = vld [vmem:[%s178 + $0x1c] sm:$0xf]
    %v187 = vld [vmem:[%s178 + $0x20] sm:$0xf]
    %v188 = vld [vmem:[%s178 + $0x24] sm:$0xf]
    %v189 = vld [vmem:[%s178 + $0x28] sm:$0xf]
    %v190 = vld [vmem:[%s178 + $0x2c] sm:$0xf]
    %v191 = vld [vmem:[%s178 + $0x30] sm:$0xf]
    %v192 = vld [vmem:[%s178 + $0x34] sm:$0xf]
    %v193 = vld [vmem:[%s178 + $0x38] sm:$0xf]
    %v194 = vld [vmem:[%s178 + $0x3c] sm:$0xf]
    %v195 = vld [vmem:[%s178 + $0x40] sm:$0xf]
    %v196 = vld [vmem:[%s178 + $0x44] sm:$0xf]
    %v197 = vld [vmem:[%s178 + $0x48] sm:$0xf]
    %v198 = vld [vmem:[%s178 + $0x4c] sm:$0xf]
    %v199 = vld [vmem:[%s178 + $0x50] sm:$0xf]
    %v200 = vld [vmem:[%s178 + $0x54] sm:$0xf]
    %v201 = vld [vmem:[%s178 + $0x58] sm:$0xf]
    %v202 = vld [vmem:[%s178 + $0x5c] sm:$0xf]
    %v203 = vld [vmem:[%s178 + $0x60] sm:$0xf]
    %v204 = vld [vmem:[%s178 + $0x64] sm:$0xf]
    %v205 = vld [vmem:[%s178 + $0x68] sm:$0xf]
    %v206 = vld [vmem:[%s178 + $0x6c] sm:$0xf]
    %v207 = vld [vmem:[%s178 + $0x70] sm:$0xf]
    %v208 = vld [vmem:[%s178 + $0x74] sm:$0xf]
    %v209 = vld [vmem:[%s178 + $0x78] sm:$0xf]
    %v210 = vld [vmem:[%s178 + $0x7c] sm:$0xf]
    %v211 = vld [vmem:[%s178 + $0x80] sm:$0xf]
    %v212 = vld [vmem:[%s178 + $0x84] sm:$0xf]
    %v213 = vld [vmem:[%s178 + $0x88] sm:$0xf]
    %v214 = vld [vmem:[%s178 + $0x8c] sm:$0xf]
    %v215 = vld [vmem:[%s178 + $0x90] sm:$0xf]
    %v216 = vld [vmem:[%s178 + $0x94] sm:$0xf]
    %v217 = vld [vmem:[%s178 + $0x98] sm:$0xf]
    %v218 = vld [vmem:[%s178 + $0x9c] sm:$0xf]
    %v219 = vld [vmem:[%s178 + $0xa0] sm:$0xf]
    %v220 = vld [vmem:[%s178 + $0xa4] sm:$0xf]
    %v221 = vld [vmem:[%s178 + $0xa8] sm:$0xf]
    %v222 = vld [vmem:[%s178 + $0xac] sm:$0xf]
    %v223 = vld [vmem:[%s178 + $0xb0] sm:$0xf]
    %v224 = vld [vmem:[%s178 + $0xb4] sm:$0xf]
    %v225 = vld [vmem:[%s178 + $0xb8] sm:$0xf]
    %v226 = vld [vmem:[%s178 + $0xbc] sm:$0xf]
    %v227 = vld [vmem:[%s178 + $0xc0] sm:$0xf]
    %v228 = vld [vmem:[%s178 + $0xc4] sm:$0xf]
    %v229 = vld [vmem:[%s178 + $0xc8] sm:$0xf]
    %v230 = vld [vmem:[%s178 + $0xcc] sm:$0xf]
    %v231 = vld [vmem:[%s178 + $0xd0] sm:$0xf]
    %v232 = vld [vmem:[%s178 + $0xd4] sm:$0xf]
    %v233 = vld [vmem:[%s178 + $0xd8] sm:$0xf]
    %v234 = vld [vmem:[%s178 + $0xdc] sm:$0xf]
    %v235 = vld [vmem:[%s178 + $0xe0] sm:$0xf]
    %v236 = vld [vmem:[%s178 + $0xe4] sm:$0xf]
    %v237 = vld [vmem:[%s178 + $0xe8] sm:$0xf]
    %v238 = vld [vmem:[%s178 + $0xec] sm:$0xf]
    %v239 = vld [vmem:[%s178 + $0xf0] sm:$0xf]
    %v240 = vld [vmem:[%s178 + $0xf4] sm:$0xf]
    %v241 = vld [vmem:[%s178 + $0xf8] sm:$0xf]
    %v242 = vld [vmem:[%s178 + $0xfc] sm:$0xf]
    %v243 = vld [vmem:[%s178 + $0x100] sm:$0xf]
    %v244 = vld [vmem:[%s178 + $0x104] sm:$0xf]
    %v245 = vld [vmem:[%s178 + $0x108] sm:$0xf]
    %v246 = vld [vmem:[%s178 + $0x10c] sm:$0xf]
    %v247 = vld [vmem:[%s178 + $0x110] sm:$0xf]
    %v248 = vld [vmem:[%s178 + $0x114] sm:$0xf]
    %v249 = vld [vmem:[%s178 + $0x118] sm:$0xf]
    %v250 = vld [vmem:[%s178 + $0x11c] sm:$0xf]
    %v251 = vld [vmem:[%s178 + $0x120] sm:$0xf]
    %v252 = vld [vmem:[%s178 + $0x124] sm:$0xf]
    %v253 = vld [vmem:[%s178 + $0x128] sm:$0xf]
    %v254 = vld [vmem:[%s178 + $0x12c] sm:$0xf]
    %v255 = vld [vmem:[%s178 + $0x130] sm:$0xf]
    %v256 = vld [vmem:[%s178 + $0x134] sm:$0xf]
    %v257 = vld [vmem:[%s178 + $0x138] sm:$0xf]
    %v258 = vld [vmem:[%s178 + $0x13c] sm:$0xf]
    %v259 = vld [vmem:[%s178 + $0x140] sm:$0xf]
    %v260 = vld [vmem:[%s178 + $0x144] sm:$0xf]
    %v261 = vld [vmem:[%s178 + $0x148] sm:$0xf]
    %v262 = vld [vmem:[%s178 + $0x14c] sm:$0xf]
    %v263 = vld [vmem:[%s178 + $0x150] sm:$0xf]
    %v264 = vld [vmem:[%s178 + $0x154] sm:$0xf]
    %v265 = vld [vmem:[%s178 + $0x158] sm:$0xf]
    %v266 = vld [vmem:[%s178 + $0x15c] sm:$0xf]
    %v267 = vld [vmem:[%s178 + $0x160] sm:$0xf]
    %v268 = vld [vmem:[%s178 + $0x164] sm:$0xf]
    %v269 = vld [vmem:[%s178 + $0x168] sm:$0xf]
    %v270 = vld [vmem:[%s178 + $0x16c] sm:$0xf]
    %v271 = vld [vmem:[%s178 + $0x170] sm:$0xf]
    %v272 = vld [vmem:[%s178 + $0x174] sm:$0xf]
    %v273 = vld [vmem:[%s178 + $0x178] sm:$0xf]
    %v274 = vld [vmem:[%s178 + $0x17c] sm:$0xf]
    %v290 = vunpack.c.l.b16 %v64
    %v291 = vunpack.c.h.b16 %v64
    %v292 = vunpack.c.l.b16 %v65
    %v293 = vunpack.c.h.b16 %v65
    %v294 = vunpack.c.l.b16 %v66
    %v295 = vunpack.c.h.b16 %v66
    %v296 = vunpack.c.l.b16 %v67
    %v297 = vunpack.c.h.b16 %v67
    %v298 = vunpack.c.l.b16 %v68
    %v299 = vunpack.c.h.b16 %v68
    %v300 = vunpack.c.l.b16 %v69
    %v301 = vunpack.c.h.b16 %v69
    %v302 = vunpack.c.l.b16 %v70
    %v303 = vunpack.c.h.b16 %v70
    %v304 = vunpack.c.l.b16 %v71
    %v305 = vunpack.c.h.b16 %v71
    %v306 = vunpack.c.l.b16 %v72
    %v307 = vunpack.c.h.b16 %v72
    %v308 = vunpack.c.l.b16 %v73
    %v309 = vunpack.c.h.b16 %v73
    %v310 = vunpack.c.l.b16 %v74
    %v311 = vunpack.c.h.b16 %v74
    %v312 = vunpack.c.l.b16 %v75
    %v313 = vunpack.c.h.b16 %v75
    %v314 = vunpack.c.l.b16 %v175
    %v315 = vunpack.c.h.b16 %v175
    %v316 = vunpack.c.l.b16 %v176
    %v317 = vunpack.c.h.b16 %v176
    %v318 = vunpack.c.l.b16 %v177
    %v319 = vunpack.c.h.b16 %v177
    %v320 = vpack.c.b16 %v296, %v290
    %v321 = vpack.c.b16 %v297, %v291
    %v322 = vpack.c.b16 %v298, %v292
    %v323 = vpack.c.b16 %v299, %v293
    %v324 = vpack.c.b16 %v300, %v294
    %v325 = vpack.c.b16 %v301, %v295
    %v326 = vpack.c.b16 %v308, %v302
    %v327 = vpack.c.b16 %v309, %v303
    %v328 = vpack.c.b16 %v310, %v304
    %v329 = vpack.c.b16 %v311, %v305
    %v330 = vpack.c.b16 %v312, %v306
    %v331 = vpack.c.b16 %v313, %v307
    %v332 = vpack.c.b16 %v314, %v314
    %v333 = vpack.c.b16 %v315, %v315
    %v334 = vpack.c.b16 %v316, %v316
    %v335 = vpack.c.b16 %v317, %v317
    %v336 = vpack.c.b16 %v318, %v318
    %v337 = vpack.c.b16 %v319, %v319
    %vm338 = vsmask.f32 7424
    %v340 = vshrl.u32 %v320, 16
    %v342 = vshll.u32 %v320, 16
    %v344 = vrot.slane %v342, 1
    %v345 = vor.u32 %v340, %v344
    %v347 = vshll.u32 %v326, 16
    %v349 = vrot.slane %v347, 1
    %v350 = vsel %vm338, %v345, %v349
    %v352 = vshrl.u32 %v321, 16
    %v354 = vshll.u32 %v321, 16
    %v356 = vrot.slane %v354, 1
    %v357 = vor.u32 %v352, %v356
    %v359 = vshll.u32 %v327, 16
    %v361 = vrot.slane %v359, 1
    %v362 = vsel %vm338, %v357, %v361
    %v364 = vshrl.u32 %v322, 16
    %v366 = vshll.u32 %v322, 16
    %v368 = vrot.slane %v366, 1
    %v369 = vor.u32 %v364, %v368
    %v371 = vshll.u32 %v328, 16
    %v373 = vrot.slane %v371, 1
    %v374 = vsel %vm338, %v369, %v373
    %v376 = vshrl.u32 %v323, 16
    %v378 = vshll.u32 %v323, 16
    %v380 = vrot.slane %v378, 1
    %v381 = vor.u32 %v376, %v380
    %v383 = vshll.u32 %v329, 16
    %v385 = vrot.slane %v383, 1
    %v386 = vsel %vm338, %v381, %v385
    %v388 = vshrl.u32 %v324, 16
    %v390 = vshll.u32 %v324, 16
    %v392 = vrot.slane %v390, 1
    %v393 = vor.u32 %v388, %v392
    %v395 = vshll.u32 %v330, 16
    %v397 = vrot.slane %v395, 1
    %v398 = vsel %vm338, %v393, %v397
    %v400 = vshrl.u32 %v325, 16
    %v402 = vshll.u32 %v325, 16
    %v404 = vrot.slane %v402, 1
    %v405 = vor.u32 %v400, %v404
    %v407 = vshll.u32 %v331, 16
    %v409 = vrot.slane %v407, 1
    %v410 = vsel %vm338, %v405, %v409
    %v411 = vshrl.u32 %v326, 16
    %v413 = vor.u32 %v411, %v349
    %v415 = vshll.u32 %v332, 16
    %v417 = vrot.slane %v415, 1
    %v418 = vsel %vm338, %v413, %v417
    %v419 = vshrl.u32 %v327, 16
    %v421 = vor.u32 %v419, %v361
    %v423 = vshll.u32 %v333, 16
    %v425 = vrot.slane %v423, 1
    %v426 = vsel %vm338, %v421, %v425
    %v427 = vshrl.u32 %v328, 16
    %v429 = vor.u32 %v427, %v373
    %v431 = vshll.u32 %v334, 16
    %v433 = vrot.slane %v431, 1
    %v434 = vsel %vm338, %v429, %v433
    %v435 = vshrl.u32 %v329, 16
    %v437 = vor.u32 %v435, %v385
    %v439 = vshll.u32 %v335, 16
    %v441 = vrot.slane %v439, 1
    %v442 = vsel %vm338, %v437, %v441
    %v443 = vshrl.u32 %v330, 16
    %v445 = vor.u32 %v443, %v397
    %v447 = vshll.u32 %v336, 16
    %v449 = vrot.slane %v447, 1
    %v450 = vsel %vm338, %v445, %v449
    %v451 = vshrl.u32 %v331, 16
    %v453 = vor.u32 %v451, %v409
    %v455 = vshll.u32 %v337, 16
    %v457 = vrot.slane %v455, 1
    %v458 = vsel %vm338, %v453, %v457
    %v459 = vshrl.u32 %v332, 16
    %v461 = vor.u32 %v459, %v417
    %v462 = vshrl.u32 %v333, 16
    %v464 = vor.u32 %v462, %v425
    %v465 = vshrl.u32 %v334, 16
    %v467 = vor.u32 %v465, %v433
    %v468 = vshrl.u32 %v335, 16
    %v470 = vor.u32 %v468, %v441
    %v471 = vshrl.u32 %v336, 16
    %v473 = vor.u32 %v471, %v449
    %v474 = vshrl.u32 %v337, 16
    %v476 = vor.u32 %v474, %v457
    %v591 = vunpack.c.l.b16 %v179
    %v592 = vunpack.c.l.b16 %v180
    %v593 = vunpack.c.l.b16 %v181
    %v594 = vunpack.c.l.b16 %v182
    %v595 = vunpack.c.l.b16 %v183
    %v596 = vunpack.c.l.b16 %v184
    %v597 = vunpack.c.l.b16 %v185
    %v598 = vunpack.c.l.b16 %v186
    %v599 = vunpack.c.l.b16 %v187
    %v600 = vunpack.c.l.b16 %v188
    %v601 = vunpack.c.l.b16 %v189
    %v602 = vunpack.c.l.b16 %v190
    %v603 = vunpack.c.l.b16 %v191
    %v604 = vunpack.c.l.b16 %v192
    %v605 = vunpack.c.l.b16 %v193
    %v606 = vunpack.c.l.b16 %v194
    %v607 = vunpack.c.l.b16 %v195
    %v608 = vunpack.c.l.b16 %v196
    %v609 = vunpack.c.l.b16 %v197
    %v610 = vunpack.c.l.b16 %v198
    %v611 = vunpack.c.l.b16 %v199
    %v612 = vunpack.c.l.b16 %v200
    %v613 = vunpack.c.l.b16 %v201
    %v614 = vunpack.c.l.b16 %v202
    %v615 = vunpack.c.l.b16 %v203
    %v616 = vunpack.c.l.b16 %v204
    %v617 = vunpack.c.l.b16 %v205
    %v618 = vunpack.c.l.b16 %v206
    %v619 = vunpack.c.l.b16 %v207
    %v620 = vunpack.c.l.b16 %v208
    %v621 = vunpack.c.l.b16 %v209
    %v622 = vunpack.c.l.b16 %v210
    %v623 = vunpack.c.l.b16 %v211
    %v624 = vunpack.c.l.b16 %v212
    %v625 = vunpack.c.l.b16 %v213
    %v626 = vunpack.c.l.b16 %v214
    %v627 = vunpack.c.l.b16 %v215
    %v628 = vunpack.c.l.b16 %v216
    %v629 = vunpack.c.l.b16 %v217
    %v630 = vunpack.c.l.b16 %v218
    %v631 = vunpack.c.l.b16 %v219
    %v632 = vunpack.c.l.b16 %v220
    %v633 = vunpack.c.l.b16 %v221
    %v634 = vunpack.c.l.b16 %v222
    %v635 = vunpack.c.l.b16 %v223
    %v636 = vunpack.c.l.b16 %v224
    %v637 = vunpack.c.l.b16 %v225
    %v638 = vunpack.c.l.b16 %v226
    %v639 = vunpack.c.l.b16 %v227
    %v640 = vunpack.c.l.b16 %v228
    %v641 = vunpack.c.l.b16 %v229
    %v642 = vunpack.c.l.b16 %v230
    %v643 = vunpack.c.l.b16 %v231
    %v644 = vunpack.c.l.b16 %v232
    %v645 = vunpack.c.l.b16 %v233
    %v646 = vunpack.c.l.b16 %v234
    %v647 = vunpack.c.l.b16 %v235
    %v648 = vunpack.c.l.b16 %v236
    %v649 = vunpack.c.l.b16 %v237
    %v650 = vunpack.c.l.b16 %v238
    %v651 = vunpack.c.l.b16 %v239
    %v652 = vunpack.c.l.b16 %v240
    %v653 = vunpack.c.l.b16 %v241
    %v654 = vunpack.c.l.b16 %v242
    %v655 = vunpack.c.l.b16 %v243
    %v656 = vunpack.c.l.b16 %v244
    %v657 = vunpack.c.l.b16 %v245
    %v658 = vunpack.c.l.b16 %v246
    %v659 = vunpack.c.l.b16 %v247
    %v660 = vunpack.c.l.b16 %v248
    %v661 = vunpack.c.l.b16 %v249
    %v662 = vunpack.c.l.b16 %v250
    %v663 = vunpack.c.l.b16 %v251
    %v664 = vunpack.c.l.b16 %v252
    %v665 = vunpack.c.l.b16 %v253
    %v666 = vunpack.c.l.b16 %v254
    %v667 = vunpack.c.l.b16 %v255
    %v668 = vunpack.c.l.b16 %v256
    %v669 = vunpack.c.l.b16 %v257
    %v670 = vunpack.c.l.b16 %v258
    %v671 = vunpack.c.l.b16 %v259
    %v672 = vunpack.c.l.b16 %v260
    %v673 = vunpack.c.l.b16 %v261
    %v674 = vunpack.c.l.b16 %v262
    %v675 = vunpack.c.l.b16 %v263
    %v676 = vunpack.c.l.b16 %v264
    %v677 = vunpack.c.l.b16 %v265
    %v678 = vunpack.c.l.b16 %v266
    %v679 = vunpack.c.l.b16 %v267
    %v680 = vunpack.c.l.b16 %v268
    %v681 = vunpack.c.l.b16 %v269
    %v682 = vunpack.c.l.b16 %v270
    %v683 = vunpack.c.l.b16 %v271
    %v684 = vunpack.c.l.b16 %v272
    %v685 = vunpack.c.l.b16 %v273
    %v686 = vunpack.c.l.b16 %v274
    %v687 = vpack.c.b16 %v592, %v591
    %v688 = vpack.c.b16 %v594, %v593
    %v689 = vpack.c.b16 %v596, %v595
    %v690 = vpack.c.b16 %v598, %v597
    %v691 = vpack.c.b16 %v600, %v599
    %v692 = vpack.c.b16 %v602, %v601
    %v693 = vpack.c.b16 %v604, %v603
    %v694 = vpack.c.b16 %v606, %v605
    %v695 = vpack.c.b16 %v608, %v607
    %v696 = vpack.c.b16 %v610, %v609
    %v697 = vpack.c.b16 %v612, %v611
    %v698 = vpack.c.b16 %v614, %v613
    %v699 = vpack.c.b16 %v616, %v615
    %v700 = vpack.c.b16 %v618, %v617
    %v701 = vpack.c.b16 %v620, %v619
    %v702 = vpack.c.b16 %v622, %v621
    %v703 = vpack.c.b16 %v624, %v623
    %v704 = vpack.c.b16 %v626, %v625
    %v705 = vpack.c.b16 %v628, %v627
    %v706 = vpack.c.b16 %v630, %v629
    %v707 = vpack.c.b16 %v632, %v631
    %v708 = vpack.c.b16 %v634, %v633
    %v709 = vpack.c.b16 %v636, %v635
    %v710 = vpack.c.b16 %v638, %v637
    %v711 = vpack.c.b16 %v640, %v639
    %v712 = vpack.c.b16 %v642, %v641
    %v713 = vpack.c.b16 %v644, %v643
    %v714 = vpack.c.b16 %v646, %v645
    %v715 = vpack.c.b16 %v648, %v647
    %v716 = vpack.c.b16 %v650, %v649
    %v717 = vpack.c.b16 %v652, %v651
    %v718 = vpack.c.b16 %v654, %v653
    %v719 = vpack.c.b16 %v656, %v655
    %v720 = vpack.c.b16 %v658, %v657
    %v721 = vpack.c.b16 %v660, %v659
    %v722 = vpack.c.b16 %v662, %v661
    %v723 = vpack.c.b16 %v664, %v663
    %v724 = vpack.c.b16 %v666, %v665
    %v725 = vpack.c.b16 %v668, %v667
    %v726 = vpack.c.b16 %v670, %v669
    %v727 = vpack.c.b16 %v672, %v671
    %v728 = vpack.c.b16 %v674, %v673
    %v729 = vpack.c.b16 %v676, %v675
    %v730 = vpack.c.b16 %v678, %v677
    %v731 = vpack.c.b16 %v680, %v679
    %v732 = vpack.c.b16 %v682, %v681
    %v733 = vpack.c.b16 %v684, %v683
    %v734 = vpack.c.b16 %v686, %v685
    %783 = vmatprep.subr.bf16.mxu0 0
    %784 = vmatpush1.bf16.msra.mxu0 %v687
    %785 = vmatprep.subr.bf16.mxu0 0
    %786 = vmatpush1.bf16.msra.mxu0 %v688
    %787 = vmatprep.subr.bf16.mxu0 0
    %788 = vmatpush1.bf16.msra.mxu0 %v689
    %789 = vmatprep.subr.bf16.mxu0 0
    %790 = vmatpush1.bf16.msra.mxu0 %v690
    %791 = vmatprep.subr.bf16.mxu0 0
    %792 = vmatpush1.bf16.msra.mxu0 %v691
    %793 = vmatprep.subr.bf16.mxu0 0
    %794 = vmatpush1.bf16.msra.mxu0 %v692
    %795 = vmatprep.subr.bf16.mxu0 0
    %796 = vmatpush1.bf16.msra.mxu0 %v693
    %797 = vmatprep.subr.bf16.mxu0 0
    %798 = vmatpush1.bf16.msra.mxu0 %v694
    %799 = vmatprep.subr.bf16.mxu0 0
    %800 = vmatpush1.bf16.msra.mxu0 %v695
    %801 = vmatprep.subr.bf16.mxu0 0
    %802 = vmatpush1.bf16.msra.mxu0 %v696
    %803 = vmatprep.subr.bf16.mxu0 0
    %804 = vmatpush1.bf16.msra.mxu0 %v697
    %805 = vmatprep.subr.bf16.mxu0 0
    %806 = vmatpush1.bf16.msra.mxu0 %v698
    %807 = vmatprep.subr.bf16.mxu0 0
    %808 = vmatpush1.bf16.msra.mxu0 %v699
    %809 = vmatprep.subr.bf16.mxu0 0
    %810 = vmatpush1.bf16.msra.mxu0 %v700
    %811 = vmatprep.subr.bf16.mxu0 0
    %812 = vmatpush1.bf16.msra.mxu0 %v701
    %813 = vmatprep.subr.bf16.mxu0 0
    %814 = vmatpush1.bf16.msra.mxu0 %v702
    %815 = vmatprep.mubr.bf16.mxu0 %v362
    %816 = vmatmul.mubr.bf16.gmra.mrb[0].mxu0 %v350
    %v817 = vpop.f32.mrb[0].mxu0
    %v818 = vadd.f32 0.0, %v817
    %v819 = vpop.f32.mrb[0].mxu0
    %v820 = vpop.f32.mrb[0].mxu0
    %v821 = vadd.f32 0.0, %v820
    %v822 = vpop.f32.mrb[0].mxu0
    %823 = vmatprep.mubr.bf16.mxu0 %v426
    %824 = vmatmul.mubr.bf16.gmra.mrb[0].mxu0 %v418
    %v825 = vpop.f32.mrb[0].mxu0
    %v826 = vadd.f32 0.0, %v825
    %v827 = vpop.f32.mrb[0].mxu0
    %v828 = vpop.f32.mrb[0].mxu0
    %v829 = vadd.f32 0.0, %v828
    %v830 = vpop.f32.mrb[0].mxu0
    %831 = vmatprep.mubr.bf16.mxu0 %v464
    %832 = vmatmul.mubr.bf16.gmra.mrb[0].mxu0 %v461
    %v833 = vpop.f32.mrb[0].mxu0
    %v834 = vadd.f32 0.0, %v833
    %v835 = vpop.f32.mrb[0].mxu0
    %v836 = vpop.f32.mrb[0].mxu0
    %v837 = vpop.f32.mrb[0].mxu0
    %838 = vdwg.mxu0
    %839 = vmatprep.subr.bf16.mxu0 0
    %840 = vmatpush1.bf16.msra.mxu0 %v703
    %841 = vmatprep.subr.bf16.mxu0 0
    %842 = vmatpush1.bf16.msra.mxu0 %v704
    %843 = vmatprep.subr.bf16.mxu0 0
    %844 = vmatpush1.bf16.msra.mxu0 %v705
    %845 = vmatprep.subr.bf16.mxu0 0
    %846 = vmatpush1.bf16.msra.mxu0 %v706
    %847 = vmatprep.subr.bf16.mxu0 0
    %848 = vmatpush1.bf16.msra.mxu0 %v707
    %849 = vmatprep.subr.bf16.mxu0 0
    %850 = vmatpush1.bf16.msra.mxu0 %v708
    %851 = vmatprep.subr.bf16.mxu0 0
    %852 = vmatpush1.bf16.msra.mxu0 %v709
    %853 = vmatprep.subr.bf16.mxu0 0
    %854 = vmatpush1.bf16.msra.mxu0 %v710
    %855 = vmatprep.subr.bf16.mxu0 0
    %856 = vmatpush1.bf16.msra.mxu0 %v711
    %857 = vmatprep.subr.bf16.mxu0 0
    %858 = vmatpush1.bf16.msra.mxu0 %v712
    %859 = vmatprep.subr.bf16.mxu0 0
    %860 = vmatpush1.bf16.msra.mxu0 %v713
    %861 = vmatprep.subr.bf16.mxu0 0
    %862 = vmatpush1.bf16.msra.mxu0 %v714
    %863 = vmatprep.subr.bf16.mxu0 0
    %864 = vmatpush1.bf16.msra.mxu0 %v715
    %865 = vmatprep.subr.bf16.mxu0 0
    %866 = vmatpush1.bf16.msra.mxu0 %v716
    %867 = vmatprep.subr.bf16.mxu0 0
    %868 = vmatpush1.bf16.msra.mxu0 %v717
    %869 = vmatprep.subr.bf16.mxu0 0
    %870 = vmatpush1.bf16.msra.mxu0 %v718
    %871 = vmatprep.mubr.bf16.mxu0 %v386
    %872 = vmatmul.mubr.bf16.gmra.mrb[0].mxu0 %v374
    %v873 = vpop.f32.mrb[0].mxu0
    %v874 = vadd.f32 %v818, %v873
    %v875 = vpop.f32.mrb[0].mxu0
    %v876 = vpop.f32.mrb[0].mxu0
    %v877 = vadd.f32 %v821, %v876
    %v878 = vpop.f32.mrb[0].mxu0
    %879 = vmatprep.mubr.bf16.mxu0 %v442
    %880 = vmatmul.mubr.bf16.gmra.mrb[0].mxu0 %v434
    %v881 = vpop.f32.mrb[0].mxu0
    %v882 = vadd.f32 %v826, %v881
    %v883 = vpop.f32.mrb[0].mxu0
    %v884 = vpop.f32.mrb[0].mxu0
    %v885 = vadd.f32 %v829, %v884
    %v886 = vpop.f32.mrb[0].mxu0
    %887 = vmatprep.mubr.bf16.mxu0 %v470
    %888 = vmatmul.mubr.bf16.gmra.mrb[0].mxu0 %v467
    %v889 = vpop.f32.mrb[0].mxu0
    %v890 = vadd.f32 %v834, %v889
    %v891 = vpop.f32.mrb[0].mxu0
    %v892 = vpop.f32.mrb[0].mxu0
    %v893 = vpop.f32.mrb[0].mxu0
    %894 = vdwg.mxu0
    %895 = vmatprep.subr.bf16.mxu0 0
    %896 = vmatpush1.bf16.msra.mxu0 %v719
    %897 = vmatprep.subr.bf16.mxu0 0
    %898 = vmatpush1.bf16.msra.mxu0 %v720
    %899 = vmatprep.subr.bf16.mxu0 0
    %900 = vmatpush1.bf16.msra.mxu0 %v721
    %901 = vmatprep.subr.bf16.mxu0 0
    %902 = vmatpush1.bf16.msra.mxu0 %v722
    %903 = vmatprep.subr.bf16.mxu0 0
    %904 = vmatpush1.bf16.msra.mxu0 %v723
    %905 = vmatprep.subr.bf16.mxu0 0
    %906 = vmatpush1.bf16.msra.mxu0 %v724
    %907 = vmatprep.subr.bf16.mxu0 0
    %908 = vmatpush1.bf16.msra.mxu0 %v725
    %909 = vmatprep.subr.bf16.mxu0 0
    %910 = vmatpush1.bf16.msra.mxu0 %v726
    %911 = vmatprep.subr.bf16.mxu0 0
    %912 = vmatpush1.bf16.msra.mxu0 %v727
    %913 = vmatprep.subr.bf16.mxu0 0
    %914 = vmatpush1.bf16.msra.mxu0 %v728
    %915 = vmatprep.subr.bf16.mxu0 0
    %916 = vmatpush1.bf16.msra.mxu0 %v729
    %917 = vmatprep.subr.bf16.mxu0 0
    %918 = vmatpush1.bf16.msra.mxu0 %v730
    %919 = vmatprep.subr.bf16.mxu0 0
    %920 = vmatpush1.bf16.msra.mxu0 %v731
    %921 = vmatprep.subr.bf16.mxu0 0
    %922 = vmatpush1.bf16.msra.mxu0 %v732
    %923 = vmatprep.subr.bf16.mxu0 0
    %924 = vmatpush1.bf16.msra.mxu0 %v733
    %925 = vmatprep.subr.bf16.mxu0 0
    %926 = vmatpush1.bf16.msra.mxu0 %v734
    %927 = vmatprep.mubr.bf16.mxu0 %v410
    %928 = vmatmul.mubr.bf16.gmra.mrb[0].mxu0 %v398
    %v929 = vpop.f32.mrb[0].mxu0
    %v930 = vadd.f32 %v874, %v929
    %v931 = vpop.f32.mrb[0].mxu0
    %v932 = vpop.f32.mrb[0].mxu0
    %v933 = vadd.f32 %v877, %v932
    %v934 = vpop.f32.mrb[0].mxu0
    %935 = vmatprep.mubr.bf16.mxu0 %v458
    %936 = vmatmul.mubr.bf16.gmra.mrb[0].mxu0 %v450
    %v937 = vpop.f32.mrb[0].mxu0
    %v938 = vadd.f32 %v882, %v937
    %v939 = vpop.f32.mrb[0].mxu0
    %v940 = vpop.f32.mrb[0].mxu0
    %v941 = vadd.f32 %v885, %v940
    %v942 = vpop.f32.mrb[0].mxu0
    %943 = vmatprep.mubr.bf16.mxu0 %v476
    %944 = vmatmul.mubr.bf16.gmra.mrb[0].mxu0 %v473
    %v945 = vpop.f32.mrb[0].mxu0
    %v946 = vadd.f32 %v890, %v945
    %v947 = vpop.f32.mrb[0].mxu0
    %v948 = vpop.f32.mrb[0].mxu0
    %v949 = vpop.f32.mrb[0].mxu0
    %950 = vdwg.mxu0
    %v954 = vunpack.c.l.b16 %v76
    %v955 = vunpack.c.h.b16 %v76
    %v956 = vunpack.c.l.b16 %v77
    %v957 = vunpack.c.h.b16 %v77
    %v958 = vunpack.c.l.b16 %v78
    %v959 = vunpack.c.h.b16 %v78
    %v960 = vpack.c.b16 %v954, %v954
    %v961 = vpack.c.b16 %v955, %v955
    %v962 = vpack.c.b16 %v956, %v956
    %v963 = vpack.c.b16 %v957, %v957
    %v964 = vpack.c.b16 %v958, %v958
    %v965 = vpack.c.b16 %v959, %v959
    %v1080 = vunpack.c.l.b16 %v79
    %v1081 = vunpack.c.l.b16 %v80
    %v1082 = vunpack.c.l.b16 %v81
    %v1083 = vunpack.c.l.b16 %v82
    %v1084 = vunpack.c.l.b16 %v83
    %v1085 = vunpack.c.l.b16 %v84
    %v1086 = vunpack.c.l.b16 %v85
    %v1087 = vunpack.c.l.b16 %v86
    %v1088 = vunpack.c.l.b16 %v87
    %v1089 = vunpack.c.l.b16 %v88
    %v1090 = vunpack.c.l.b16 %v89
    %v1091 = vunpack.c.l.b16 %v90
    %v1092 = vunpack.c.l.b16 %v91
    %v1093 = vunpack.c.l.b16 %v92
    %v1094 = vunpack.c.l.b16 %v93
    %v1095 = vunpack.c.l.b16 %v94
    %v1096 = vunpack.c.l.b16 %v95
    %v1097 = vunpack.c.l.b16 %v96
    %v1098 = vunpack.c.l.b16 %v97
    %v1099 = vunpack.c.l.b16 %v98
    %v1100 = vunpack.c.l.b16 %v99
    %v1101 = vunpack.c.l.b16 %v100
    %v1102 = vunpack.c.l.b16 %v101
    %v1103 = vunpack.c.l.b16 %v102
    %v1104 = vunpack.c.l.b16 %v103
    %v1105 = vunpack.c.l.b16 %v104
    %v1106 = vunpack.c.l.b16 %v105
    %v1107 = vunpack.c.l.b16 %v106
    %v1108 = vunpack.c.l.b16 %v107
    %v1109 = vunpack.c.l.b16 %v108
    %v1110 = vunpack.c.l.b16 %v109
    %v1111 = vunpack.c.l.b16 %v110
    %v1112 = vunpack.c.l.b16 %v111
    %v1113 = vunpack.c.l.b16 %v112
    %v1114 = vunpack.c.l.b16 %v113
    %v1115 = vunpack.c.l.b16 %v114
    %v1116 = vunpack.c.l.b16 %v115
    %v1117 = vunpack.c.l.b16 %v116
    %v1118 = vunpack.c.l.b16 %v117
    %v1119 = vunpack.c.l.b16 %v118
    %v1120 = vunpack.c.l.b16 %v119
    %v1121 = vunpack.c.l.b16 %v120
    %v1122 = vunpack.c.l.b16 %v121
    %v1123 = vunpack.c.l.b16 %v122
    %v1124 = vunpack.c.l.b16 %v123
    %v1125 = vunpack.c.l.b16 %v124
    %v1126 = vunpack.c.l.b16 %v125
    %v1127 = vunpack.c.l.b16 %v126
    %v1128 = vunpack.c.l.b16 %v127
    %v1129 = vunpack.c.l.b16 %v128
    %v1130 = vunpack.c.l.b16 %v129
    %v1131 = vunpack.c.l.b16 %v130
    %v1132 = vunpack.c.l.b16 %v131
    %v1133 = vunpack.c.l.b16 %v132
    %v1134 = vunpack.c.l.b16 %v133
    %v1135 = vunpack.c.l.b16 %v134
    %v1136 = vunpack.c.l.b16 %v135
    %v1137 = vunpack.c.l.b16 %v136
    %v1138 = vunpack.c.l.b16 %v137
    %v1139 = vunpack.c.l.b16 %v138
    %v1140 = vunpack.c.l.b16 %v139
    %v1141 = vunpack.c.l.b16 %v140
    %v1142 = vunpack.c.l.b16 %v141
    %v1143 = vunpack.c.l.b16 %v142
    %v1144 = vunpack.c.l.b16 %v143
    %v1145 = vunpack.c.l.b16 %v144
    %v1146 = vunpack.c.l.b16 %v145
    %v1147 = vunpack.c.l.b16 %v146
    %v1148 = vunpack.c.l.b16 %v147
    %v1149 = vunpack.c.l.b16 %v148
    %v1150 = vunpack.c.l.b16 %v149
    %v1151 = vunpack.c.l.b16 %v150
    %v1152 = vunpack.c.l.b16 %v151
    %v1153 = vunpack.c.l.b16 %v152
    %v1154 = vunpack.c.l.b16 %v153
    %v1155 = vunpack.c.l.b16 %v154
    %v1156 = vunpack.c.l.b16 %v155
    %v1157 = vunpack.c.l.b16 %v156
    %v1158 = vunpack.c.l.b16 %v157
    %v1159 = vunpack.c.l.b16 %v158
    %v1160 = vunpack.c.l.b16 %v159
    %v1161 = vunpack.c.l.b16 %v160
    %v1162 = vunpack.c.l.b16 %v161
    %v1163 = vunpack.c.l.b16 %v162
    %v1164 = vunpack.c.l.b16 %v163
    %v1165 = vunpack.c.l.b16 %v164
    %v1166 = vunpack.c.l.b16 %v165
    %v1167 = vunpack.c.l.b16 %v166
    %v1168 = vunpack.c.l.b16 %v167
    %v1169 = vunpack.c.l.b16 %v168
    %v1170 = vunpack.c.l.b16 %v169
    %v1171 = vunpack.c.l.b16 %v170
    %v1172 = vunpack.c.l.b16 %v171
    %v1173 = vunpack.c.l.b16 %v172
    %v1174 = vunpack.c.l.b16 %v173
    %v1175 = vunpack.c.l.b16 %v174
    %v1176 = vpack.c.b16 %v1081, %v1080
    %v1177 = vpack.c.b16 %v1083, %v1082
    %v1178 = vpack.c.b16 %v1085, %v1084
    %v1179 = vpack.c.b16 %v1087, %v1086
    %v1180 = vpack.c.b16 %v1089, %v1088
    %v1181 = vpack.c.b16 %v1091, %v1090
    %v1182 = vpack.c.b16 %v1093, %v1092
    %v1183 = vpack.c.b16 %v1095, %v1094
    %v1184 = vpack.c.b16 %v1097, %v1096
    %v1185 = vpack.c.b16 %v1099, %v1098
    %v1186 = vpack.c.b16 %v1101, %v1100
    %v1187 = vpack.c.b16 %v1103, %v1102
    %v1188 = vpack.c.b16 %v1105, %v1104
    %v1189 = vpack.c.b16 %v1107, %v1106
    %v1190 = vpack.c.b16 %v1109, %v1108
    %v1191 = vpack.c.b16 %v1111, %v1110
    %v1192 = vpack.c.b16 %v1113, %v1112
    %v1193 = vpack.c.b16 %v1115, %v1114
    %v1194 = vpack.c.b16 %v1117, %v1116
    %v1195 = vpack.c.b16 %v1119, %v1118
    %v1196 = vpack.c.b16 %v1121, %v1120
    %v1197 = vpack.c.b16 %v1123, %v1122
    %v1198 = vpack.c.b16 %v1125, %v1124
    %v1199 = vpack.c.b16 %v1127, %v1126
    %v1200 = vpack.c.b16 %v1129, %v1128
    %v1201 = vpack.c.b16 %v1131, %v1130
    %v1202 = vpack.c.b16 %v1133, %v1132
    %v1203 = vpack.c.b16 %v1135, %v1134
    %v1204 = vpack.c.b16 %v1137, %v1136
    %v1205 = vpack.c.b16 %v1139, %v1138
    %v1206 = vpack.c.b16 %v1141, %v1140
    %v1207 = vpack.c.b16 %v1143, %v1142
    %v1208 = vpack.c.b16 %v1145, %v1144
    %v1209 = vpack.c.b16 %v1147, %v1146
    %v1210 = vpack.c.b16 %v1149, %v1148
    %v1211 = vpack.c.b16 %v1151, %v1150
    %v1212 = vpack.c.b16 %v1153, %v1152
    %v1213 = vpack.c.b16 %v1155, %v1154
    %v1214 = vpack.c.b16 %v1157, %v1156
    %v1215 = vpack.c.b16 %v1159, %v1158
    %v1216 = vpack.c.b16 %v1161, %v1160
    %v1217 = vpack.c.b16 %v1163, %v1162
    %v1218 = vpack.c.b16 %v1165, %v1164
    %v1219 = vpack.c.b16 %v1167, %v1166
    %v1220 = vpack.c.b16 %v1169, %v1168
    %v1221 = vpack.c.b16 %v1171, %v1170
    %v1222 = vpack.c.b16 %v1173, %v1172
    %v1223 = vpack.c.b16 %v1175, %v1174
    %1272 = vmatprep.subr.bf16.mxu0 0
    %1273 = vmatpush1.bf16.msra.mxu0 %v1176
    %1274 = vmatprep.subr.bf16.mxu0 0
    %1275 = vmatpush1.bf16.msra.mxu0 %v1177
    %1276 = vmatprep.subr.bf16.mxu0 0
    %1277 = vmatpush1.bf16.msra.mxu0 %v1178
    %1278 = vmatprep.subr.bf16.mxu0 0
    %1279 = vmatpush1.bf16.msra.mxu0 %v1179
    %1280 = vmatprep.subr.bf16.mxu0 0
    %1281 = vmatpush1.bf16.msra.mxu0 %v1180
    %1282 = vmatprep.subr.bf16.mxu0 0
    %1283 = vmatpush1.bf16.msra.mxu0 %v1181
    %1284 = vmatprep.subr.bf16.mxu0 0
    %1285 = vmatpush1.bf16.msra.mxu0 %v1182
    %1286 = vmatprep.subr.bf16.mxu0 0
    %1287 = vmatpush1.bf16.msra.mxu0 %v1183
    %1288 = vmatprep.subr.bf16.mxu0 0
    %1289 = vmatpush1.bf16.msra.mxu0 %v1184
    %1290 = vmatprep.subr.bf16.mxu0 0
    %1291 = vmatpush1.bf16.msra.mxu0 %v1185
    %1292 = vmatprep.subr.bf16.mxu0 0
    %1293 = vmatpush1.bf16.msra.mxu0 %v1186
    %1294 = vmatprep.subr.bf16.mxu0 0
    %1295 = vmatpush1.bf16.msra.mxu0 %v1187
    %1296 = vmatprep.subr.bf16.mxu0 0
    %1297 = vmatpush1.bf16.msra.mxu0 %v1188
    %1298 = vmatprep.subr.bf16.mxu0 0
    %1299 = vmatpush1.bf16.msra.mxu0 %v1189
    %1300 = vmatprep.subr.bf16.mxu0 0
    %1301 = vmatpush1.bf16.msra.mxu0 %v1190
    %1302 = vmatprep.subr.bf16.mxu0 0
    %1303 = vmatpush1.bf16.msra.mxu0 %v1191
    %1304 = vmatprep.mubr.bf16.mxu0 %v321
    %1305 = vmatmul.mubr.bf16.gmra.mrb[0].mxu0 %v320
    %v1306 = vpop.f32.mrb[0].mxu0
    %v1307 = vadd.f32 %v930, %v1306
    %v1308 = vpop.f32.mrb[0].mxu0
    %v1309 = vpop.f32.mrb[0].mxu0
    %v1310 = vadd.f32 %v933, %v1309
    %v1311 = vpop.f32.mrb[0].mxu0
    %1312 = vmatprep.mubr.bf16.mxu0 %v327
    %1313 = vmatmul.mubr.bf16.gmra.mrb[0].mxu0 %v326
    %v1314 = vpop.f32.mrb[0].mxu0
    %v1315 = vadd.f32 %v938, %v1314
    %v1316 = vpop.f32.mrb[0].mxu0
    %v1317 = vpop.f32.mrb[0].mxu0
    %v1318 = vadd.f32 %v941, %v1317
    %v1319 = vpop.f32.mrb[0].mxu0
    %1320 = vmatprep.mubr.bf16.mxu0 %v961
    %1321 = vmatmul.mubr.bf16.gmra.mrb[0].mxu0 %v960
    %v1322 = vpop.f32.mrb[0].mxu0
    %v1323 = vadd.f32 %v946, %v1322
    %v1324 = vpop.f32.mrb[0].mxu0
    %v1325 = vpop.f32.mrb[0].mxu0
    %v1326 = vpop.f32.mrb[0].mxu0
    %1327 = vdwg.mxu0
    %1328 = vmatprep.subr.bf16.mxu0 0
    %1329 = vmatpush1.bf16.msra.mxu0 %v1192
    %1330 = vmatprep.subr.bf16.mxu0 0
    %1331 = vmatpush1.bf16.msra.mxu0 %v1193
    %1332 = vmatprep.subr.bf16.mxu0 0
    %1333 = vmatpush1.bf16.msra.mxu0 %v1194
    %1334 = vmatprep.subr.bf16.mxu0 0
    %1335 = vmatpush1.bf16.msra.mxu0 %v1195
    %1336 = vmatprep.subr.bf16.mxu0 0
    %1337 = vmatpush1.bf16.msra.mxu0 %v1196
    %1338 = vmatprep.subr.bf16.mxu0 0
    %1339 = vmatpush1.bf16.msra.mxu0 %v1197
    %1340 = vmatprep.subr.bf16.mxu0 0
    %1341 = vmatpush1.bf16.msra.mxu0 %v1198
    %1342 = vmatprep.subr.bf16.mxu0 0
    %1343 = vmatpush1.bf16.msra.mxu0 %v1199
    %1344 = vmatprep.subr.bf16.mxu0 0
    %1345 = vmatpush1.bf16.msra.mxu0 %v1200
    %1346 = vmatprep.subr.bf16.mxu0 0
    %1347 = vmatpush1.bf16.msra.mxu0 %v1201
    %1348 = vmatprep.subr.bf16.mxu0 0
    %1349 = vmatpush1.bf16.msra.mxu0 %v1202
    %1350 = vmatprep.subr.bf16.mxu0 0
    %1351 = vmatpush1.bf16.msra.mxu0 %v1203
    %1352 = vmatprep.subr.bf16.mxu0 0
    %1353 = vmatpush1.bf16.msra.mxu0 %v1204
    %1354 = vmatprep.subr.bf16.mxu0 0
    %1355 = vmatpush1.bf16.msra.mxu0 %v1205
    %1356 = vmatprep.subr.bf16.mxu0 0
    %1357 = vmatpush1.bf16.msra.mxu0 %v1206
    %1358 = vmatprep.subr.bf16.mxu0 0
    %1359 = vmatpush1.bf16.msra.mxu0 %v1207
    %1360 = vmatprep.mubr.bf16.mxu0 %v323
    %1361 = vmatmul.mubr.bf16.gmra.mrb[0].mxu0 %v322
    %v1362 = vpop.f32.mrb[0].mxu0
    %v1363 = vadd.f32 %v1307, %v1362
    %v1364 = vpop.f32.mrb[0].mxu0
    %v1365 = vpop.f32.mrb[0].mxu0
    %v1366 = vadd.f32 %v1310, %v1365
    %v1367 = vpop.f32.mrb[0].mxu0
    %1368 = vmatprep.mubr.bf16.mxu0 %v329
    %1369 = vmatmul.mubr.bf16.gmra.mrb[0].mxu0 %v328
    %v1370 = vpop.f32.mrb[0].mxu0
    %v1371 = vadd.f32 %v1315, %v1370
    %v1372 = vpop.f32.mrb[0].mxu0
    %v1373 = vpop.f32.mrb[0].mxu0
    %v1374 = vadd.f32 %v1318, %v1373
    %v1375 = vpop.f32.mrb[0].mxu0
    %1376 = vmatprep.mubr.bf16.mxu0 %v963
    %1377 = vmatmul.mubr.bf16.gmra.mrb[0].mxu0 %v962
    %v1378 = vpop.f32.mrb[0].mxu0
    %v1379 = vadd.f32 %v1323, %v1378
    %v1380 = vpop.f32.mrb[0].mxu0
    %v1381 = vpop.f32.mrb[0].mxu0
    %v1382 = vpop.f32.mrb[0].mxu0
    %1383 = vdwg.mxu0
    %1384 = vmatprep.subr.bf16.mxu0 0
    %1385 = vmatpush1.bf16.msra.mxu0 %v1208
    %1386 = vmatprep.subr.bf16.mxu0 0
    %1387 = vmatpush1.bf16.msra.mxu0 %v1209
    %1388 = vmatprep.subr.bf16.mxu0 0
    %1389 = vmatpush1.bf16.msra.mxu0 %v1210
    %1390 = vmatprep.subr.bf16.mxu0 0
    %1391 = vmatpush1.bf16.msra.mxu0 %v1211
    %1392 = vmatprep.subr.bf16.mxu0 0
    %1393 = vmatpush1.bf16.msra.mxu0 %v1212
    %1394 = vmatprep.subr.bf16.mxu0 0
    %1395 = vmatpush1.bf16.msra.mxu0 %v1213
    %1396 = vmatprep.subr.bf16.mxu0 0
    %1397 = vmatpush1.bf16.msra.mxu0 %v1214
    %1398 = vmatprep.subr.bf16.mxu0 0
    %1399 = vmatpush1.bf16.msra.mxu0 %v1215
    %1400 = vmatprep.subr.bf16.mxu0 0
    %1401 = vmatpush1.bf16.msra.mxu0 %v1216
    %1402 = vmatprep.subr.bf16.mxu0 0
    %1403 = vmatpush1.bf16.msra.mxu0 %v1217
    %1404 = vmatprep.subr.bf16.mxu0 0
    %1405 = vmatpush1.bf16.msra.mxu0 %v1218
    %1406 = vmatprep.subr.bf16.mxu0 0
    %1407 = vmatpush1.bf16.msra.mxu0 %v1219
    %1408 = vmatprep.subr.bf16.mxu0 0
    %1409 = vmatpush1.bf16.msra.mxu0 %v1220
    %1410 = vmatprep.subr.bf16.mxu0 0
    %1411 = vmatpush1.bf16.msra.mxu0 %v1221
    %1412 = vmatprep.subr.bf16.mxu0 0
    %1413 = vmatpush1.bf16.msra.mxu0 %v1222
    %1414 = vmatprep.subr.bf16.mxu0 0
    %1415 = vmatpush1.bf16.msra.mxu0 %v1223
    %1416 = vmatprep.mubr.bf16.mxu0 %v325
    %1417 = vmatmul.mubr.bf16.gmra.mrb[0].mxu0 %v324
    %v1418 = vpop.f32.mrb[0].mxu0
    %v1419 = vadd.f32 %v1363, %v1418
    %v1420 = vpop.f32.mrb[0].mxu0
    %v1421 = vpop.f32.mrb[0].mxu0
    %v1422 = vadd.f32 %v1366, %v1421
    %v1423 = vpop.f32.mrb[0].mxu0
    %1424 = vmatprep.mubr.bf16.mxu0 %v331
    %1425 = vmatmul.mubr.bf16.gmra.mrb[0].mxu0 %v330
    %v1426 = vpop.f32.mrb[0].mxu0
    %v1427 = vadd.f32 %v1371, %v1426
    %v1428 = vpop.f32.mrb[0].mxu0
    %v1429 = vpop.f32.mrb[0].mxu0
    %v1430 = vadd.f32 %v1374, %v1429
    %v1431 = vpop.f32.mrb[0].mxu0
    %1432 = vmatprep.mubr.bf16.mxu0 %v965
    %1433 = vmatmul.mubr.bf16.gmra.mrb[0].mxu0 %v964
    %v1434 = vpop.f32.mrb[0].mxu0
    %v1435 = vadd.f32 %v1379, %v1434
    %v1436 = vpop.f32.mrb[0].mxu0
    %v1437 = vpop.f32.mrb[0].mxu0
    %v1438 = vpop.f32.mrb[0].mxu0
    %1439 = vdwg.mxu0
    %v1440 = vld [vmem:[%s0] sm:$0xee]
    %v1441 = vld [vmem:[%s0 + $0x8] sm:$0xee]
    %v1442 = vld [vmem:[%s0 + $0x10] sm:$0xee]
    %s1443 = scalar_lea.vmem %s1, 768
    %v1444 = vld [vmem:[%s1443] sm:$0xf]
    %v1445 = vld [vmem:[%s1443 + $0x4] sm:$0xf]
    %v1446 = vld [vmem:[%s1443 + $0x8] sm:$0xf]
    %v1447 = vld [vmem:[%s1443 + $0xc] sm:$0xf]
    %v1448 = vld [vmem:[%s1443 + $0x10] sm:$0xf]
    %v1449 = vld [vmem:[%s1443 + $0x14] sm:$0xf]
    %v1450 = vld [vmem:[%s1443 + $0x18] sm:$0xf]
    %v1451 = vld [vmem:[%s1443 + $0x1c] sm:$0xf]
    %v1452 = vld [vmem:[%s1443 + $0x20] sm:$0xf]
    %v1453 = vld [vmem:[%s1443 + $0x24] sm:$0xf]
    %v1454 = vld [vmem:[%s1443 + $0x28] sm:$0xf]
    %v1455 = vld [vmem:[%s1443 + $0x2c] sm:$0xf]
    %v1456 = vld [vmem:[%s1443 + $0x30] sm:$0xf]
    %v1457 = vld [vmem:[%s1443 + $0x34] sm:$0xf]
    %v1458 = vld [vmem:[%s1443 + $0x38] sm:$0xf]
    %v1459 = vld [vmem:[%s1443 + $0x3c] sm:$0xf]
    %v1460 = vld [vmem:[%s1443 + $0x40] sm:$0xf]
    %v1461 = vld [vmem:[%s1443 + $0x44] sm:$0xf]
    %v1462 = vld [vmem:[%s1443 + $0x48] sm:$0xf]
    %v1463 = vld [vmem:[%s1443 + $0x4c] sm:$0xf]
    %v1464 = vld [vmem:[%s1443 + $0x50] sm:$0xf]
    %v1465 = vld [vmem:[%s1443 + $0x54] sm:$0xf]
    %v1466 = vld [vmem:[%s1443 + $0x58] sm:$0xf]
    %v1467 = vld [vmem:[%s1443 + $0x5c] sm:$0xf]
    %v1468 = vld [vmem:[%s1443 + $0x60] sm:$0xf]
    %v1469 = vld [vmem:[%s1443 + $0x64] sm:$0xf]
    %v1470 = vld [vmem:[%s1443 + $0x68] sm:$0xf]
    %v1471 = vld [vmem:[%s1443 + $0x6c] sm:$0xf]
    %v1472 = vld [vmem:[%s1443 + $0x70] sm:$0xf]
    %v1473 = vld [vmem:[%s1443 + $0x74] sm:$0xf]
    %v1474 = vld [vmem:[%s1443 + $0x78] sm:$0xf]
    %v1475 = vld [vmem:[%s1443 + $0x7c] sm:$0xf]
    %v1476 = vld [vmem:[%s1443 + $0x80] sm:$0xf]
    %v1477 = vld [vmem:[%s1443 + $0x84] sm:$0xf]
    %v1478 = vld [vmem:[%s1443 + $0x88] sm:$0xf]
    %v1479 = vld [vmem:[%s1443 + $0x8c] sm:$0xf]
    %v1480 = vld [vmem:[%s1443 + $0x90] sm:$0xf]
    %v1481 = vld [vmem:[%s1443 + $0x94] sm:$0xf]
    %v1482 = vld [vmem:[%s1443 + $0x98] sm:$0xf]
    %v1483 = vld [vmem:[%s1443 + $0x9c] sm:$0xf]
    %v1484 = vld [vmem:[%s1443 + $0xa0] sm:$0xf]
    %v1485 = vld [vmem:[%s1443 + $0xa4] sm:$0xf]
    %v1486 = vld [vmem:[%s1443 + $0xa8] sm:$0xf]
    %v1487 = vld [vmem:[%s1443 + $0xac] sm:$0xf]
    %v1488 = vld [vmem:[%s1443 + $0xb0] sm:$0xf]
    %v1489 = vld [vmem:[%s1443 + $0xb4] sm:$0xf]
    %v1490 = vld [vmem:[%s1443 + $0xb8] sm:$0xf]
    %v1491 = vld [vmem:[%s1443 + $0xbc] sm:$0xf]
    %v1492 = vld [vmem:[%s1443 + $0xc0] sm:$0xf]
    %v1493 = vld [vmem:[%s1443 + $0xc4] sm:$0xf]
    %v1494 = vld [vmem:[%s1443 + $0xc8] sm:$0xf]
    %v1495 = vld [vmem:[%s1443 + $0xcc] sm:$0xf]
    %v1496 = vld [vmem:[%s1443 + $0xd0] sm:$0xf]
    %v1497 = vld [vmem:[%s1443 + $0xd4] sm:$0xf]
    %v1498 = vld [vmem:[%s1443 + $0xd8] sm:$0xf]
    %v1499 = vld [vmem:[%s1443 + $0xdc] sm:$0xf]
    %v1500 = vld [vmem:[%s1443 + $0xe0] sm:$0xf]
    %v1501 = vld [vmem:[%s1443 + $0xe4] sm:$0xf]
    %v1502 = vld [vmem:[%s1443 + $0xe8] sm:$0xf]
    %v1503 = vld [vmem:[%s1443 + $0xec] sm:$0xf]
    %v1504 = vld [vmem:[%s1443 + $0xf0] sm:$0xf]
    %v1505 = vld [vmem:[%s1443 + $0xf4] sm:$0xf]
    %v1506 = vld [vmem:[%s1443 + $0xf8] sm:$0xf]
    %v1507 = vld [vmem:[%s1443 + $0xfc] sm:$0xf]
    %v1508 = vld [vmem:[%s1443 + $0x100] sm:$0xf]
    %v1509 = vld [vmem:[%s1443 + $0x104] sm:$0xf]
    %v1510 = vld [vmem:[%s1443 + $0x108] sm:$0xf]
    %v1511 = vld [vmem:[%s1443 + $0x10c] sm:$0xf]
    %v1512 = vld [vmem:[%s1443 + $0x110] sm:$0xf]
    %v1513 = vld [vmem:[%s1443 + $0x114] sm:$0xf]
    %v1514 = vld [vmem:[%s1443 + $0x118] sm:$0xf]
    %v1515 = vld [vmem:[%s1443 + $0x11c] sm:$0xf]
    %v1516 = vld [vmem:[%s1443 + $0x120] sm:$0xf]
    %v1517 = vld [vmem:[%s1443 + $0x124] sm:$0xf]
    %v1518 = vld [vmem:[%s1443 + $0x128] sm:$0xf]
    %v1519 = vld [vmem:[%s1443 + $0x12c] sm:$0xf]
    %v1520 = vld [vmem:[%s1443 + $0x130] sm:$0xf]
    %v1521 = vld [vmem:[%s1443 + $0x134] sm:$0xf]
    %v1522 = vld [vmem:[%s1443 + $0x138] sm:$0xf]
    %v1523 = vld [vmem:[%s1443 + $0x13c] sm:$0xf]
    %v1524 = vld [vmem:[%s1443 + $0x140] sm:$0xf]
    %v1525 = vld [vmem:[%s1443 + $0x144] sm:$0xf]
    %v1526 = vld [vmem:[%s1443 + $0x148] sm:$0xf]
    %v1527 = vld [vmem:[%s1443 + $0x14c] sm:$0xf]
    %v1528 = vld [vmem:[%s1443 + $0x150] sm:$0xf]
    %v1529 = vld [vmem:[%s1443 + $0x154] sm:$0xf]
    %v1530 = vld [vmem:[%s1443 + $0x158] sm:$0xf]
    %v1531 = vld [vmem:[%s1443 + $0x15c] sm:$0xf]
    %v1532 = vld [vmem:[%s1443 + $0x160] sm:$0xf]
    %v1533 = vld [vmem:[%s1443 + $0x164] sm:$0xf]
    %v1534 = vld [vmem:[%s1443 + $0x168] sm:$0xf]
    %v1535 = vld [vmem:[%s1443 + $0x16c] sm:$0xf]
    %v1536 = vld [vmem:[%s1443 + $0x170] sm:$0xf]
    %v1537 = vld [vmem:[%s1443 + $0x174] sm:$0xf]
    %v1538 = vld [vmem:[%s1443 + $0x178] sm:$0xf]
    %v1539 = vld [vmem:[%s1443 + $0x17c] sm:$0xf]
    %v1543 = vunpack.c.l.b16 %v1440
    %v1544 = vunpack.c.h.b16 %v1440
    %v1545 = vunpack.c.l.b16 %v1441
    %v1546 = vunpack.c.h.b16 %v1441
    %v1547 = vunpack.c.l.b16 %v1442
    %v1548 = vunpack.c.h.b16 %v1442
    %v1549 = vpack.c.b16 %v296, %v1543
    %v1550 = vpack.c.b16 %v297, %v1544
    %v1551 = vpack.c.b16 %v298, %v1545
    %v1552 = vpack.c.b16 %v299, %v1546
    %v1553 = vpack.c.b16 %v300, %v1547
    %v1554 = vpack.c.b16 %v301, %v1548
    %vm1555 = vcmask 1046528
    %v1556 = vrot.slane %v1549, 1
    %v1557 = vrot.slane %v326, 1
    %v1558 = vsel %vm1555, %v1556, %v1557
    %v1559 = vrot.slane %v1550, 1
    %v1560 = vrot.slane %v327, 1
    %v1561 = vsel %vm1555, %v1559, %v1560
    %v1562 = vrot.slane %v1551, 1
    %v1563 = vrot.slane %v328, 1
    %v1564 = vsel %vm1555, %v1562, %v1563
    %v1565 = vrot.slane %v1552, 1
    %v1566 = vrot.slane %v329, 1
    %v1567 = vsel %vm1555, %v1565, %v1566
    %v1568 = vrot.slane %v1553, 1
    %v1569 = vrot.slane %v330, 1
    %v1570 = vsel %vm1555, %v1568, %v1569
    %v1571 = vrot.slane %v1554, 1
    %v1572 = vrot.slane %v331, 1
    %v1573 = vsel %vm1555, %v1571, %v1572
    %v1574 = vrot.slane %v332, 1
    %v1575 = vsel %vm1555, %v1557, %v1574
    %v1576 = vrot.slane %v333, 1
    %v1577 = vsel %vm1555, %v1560, %v1576
    %v1578 = vrot.slane %v334, 1
    %v1579 = vsel %vm1555, %v1563, %v1578
    %v1580 = vrot.slane %v335, 1
    %v1581 = vsel %vm1555, %v1566, %v1580
    %v1582 = vrot.slane %v336, 1
    %v1583 = vsel %vm1555, %v1569, %v1582
    %v1584 = vrot.slane %v337, 1
    %v1585 = vsel %vm1555, %v1572, %v1584
    %v1700 = vunpack.c.l.b16 %v1444
    %v1701 = vunpack.c.l.b16 %v1445
    %v1702 = vunpack.c.l.b16 %v1446
    %v1703 = vunpack.c.l.b16 %v1447
    %v1704 = vunpack.c.l.b16 %v1448
    %v1705 = vunpack.c.l.b16 %v1449
    %v1706 = vunpack.c.l.b16 %v1450
    %v1707 = vunpack.c.l.b16 %v1451
    %v1708 = vunpack.c.l.b16 %v1452
    %v1709 = vunpack.c.l.b16 %v1453
    %v1710 = vunpack.c.l.b16 %v1454
    %v1711 = vunpack.c.l.b16 %v1455
    %v1712 = vunpack.c.l.b16 %v1456
    %v1713 = vunpack.c.l.b16 %v1457
    %v1714 = vunpack.c.l.b16 %v1458
    %v1715 = vunpack.c.l.b16 %v1459
    %v1716 = vunpack.c.l.b16 %v1460
    %v1717 = vunpack.c.l.b16 %v1461
    %v1718 = vunpack.c.l.b16 %v1462
    %v1719 = vunpack.c.l.b16 %v1463
    %v1720 = vunpack.c.l.b16 %v1464
    %v1721 = vunpack.c.l.b16 %v1465
    %v1722 = vunpack.c.l.b16 %v1466
    %v1723 = vunpack.c.l.b16 %v1467
    %v1724 = vunpack.c.l.b16 %v1468
    %v1725 = vunpack.c.l.b16 %v1469
    %v1726 = vunpack.c.l.b16 %v1470
    %v1727 = vunpack.c.l.b16 %v1471
    %v1728 = vunpack.c.l.b16 %v1472
    %v1729 = vunpack.c.l.b16 %v1473
    %v1730 = vunpack.c.l.b16 %v1474
    %v1731 = vunpack.c.l.b16 %v1475
    %v1732 = vunpack.c.l.b16 %v1476
    %v1733 = vunpack.c.l.b16 %v1477
    %v1734 = vunpack.c.l.b16 %v1478
    %v1735 = vunpack.c.l.b16 %v1479
    %v1736 = vunpack.c.l.b16 %v1480
    %v1737 = vunpack.c.l.b16 %v1481
    %v1738 = vunpack.c.l.b16 %v1482
    %v1739 = vunpack.c.l.b16 %v1483
    %v1740 = vunpack.c.l.b16 %v1484
    %v1741 = vunpack.c.l.b16 %v1485
    %v1742 = vunpack.c.l.b16 %v1486
    %v1743 = vunpack.c.l.b16 %v1487
    %v1744 = vunpack.c.l.b16 %v1488
    %v1745 = vunpack.c.l.b16 %v1489
    %v1746 = vunpack.c.l.b16 %v1490
    %v1747 = vunpack.c.l.b16 %v1491
    %v1748 = vunpack.c.l.b16 %v1492
    %v1749 = vunpack.c.l.b16 %v1493
    %v1750 = vunpack.c.l.b16 %v1494
    %v1751 = vunpack.c.l.b16 %v1495
    %v1752 = vunpack.c.l.b16 %v1496
    %v1753 = vunpack.c.l.b16 %v1497
    %v1754 = vunpack.c.l.b16 %v1498
    %v1755 = vunpack.c.l.b16 %v1499
    %v1756 = vunpack.c.l.b16 %v1500
    %v1757 = vunpack.c.l.b16 %v1501
    %v1758 = vunpack.c.l.b16 %v1502
    %v1759 = vunpack.c.l.b16 %v1503
    %v1760 = vunpack.c.l.b16 %v1504
    %v1761 = vunpack.c.l.b16 %v1505
    %v1762 = vunpack.c.l.b16 %v1506
    %v1763 = vunpack.c.l.b16 %v1507
    %v1764 = vunpack.c.l.b16 %v1508
    %v1765 = vunpack.c.l.b16 %v1509
    %v1766 = vunpack.c.l.b16 %v1510
    %v1767 = vunpack.c.l.b16 %v1511
    %v1768 = vunpack.c.l.b16 %v1512
    %v1769 = vunpack.c.l.b16 %v1513
    %v1770 = vunpack.c.l.b16 %v1514
    %v1771 = vunpack.c.l.b16 %v1515
    %v1772 = vunpack.c.l.b16 %v1516
    %v1773 = vunpack.c.l.b16 %v1517
    %v1774 = vunpack.c.l.b16 %v1518
    %v1775 = vunpack.c.l.b16 %v1519
    %v1776 = vunpack.c.l.b16 %v1520
    %v1777 = vunpack.c.l.b16 %v1521
    %v1778 = vunpack.c.l.b16 %v1522
    %v1779 = vunpack.c.l.b16 %v1523
    %v1780 = vunpack.c.l.b16 %v1524
    %v1781 = vunpack.c.l.b16 %v1525
    %v1782 = vunpack.c.l.b16 %v1526
    %v1783 = vunpack.c.l.b16 %v1527
    %v1784 = vunpack.c.l.b16 %v1528
    %v1785 = vunpack.c.l.b16 %v1529
    %v1786 = vunpack.c.l.b16 %v1530
    %v1787 = vunpack.c.l.b16 %v1531
    %v1788 = vunpack.c.l.b16 %v1532
    %v1789 = vunpack.c.l.b16 %v1533
    %v1790 = vunpack.c.l.b16 %v1534
    %v1791 = vunpack.c.l.b16 %v1535
    %v1792 = vunpack.c.l.b16 %v1536
    %v1793 = vunpack.c.l.b16 %v1537
    %v1794 = vunpack.c.l.b16 %v1538
    %v1795 = vunpack.c.l.b16 %v1539
    %v1796 = vpack.c.b16 %v1701, %v1700
    %v1797 = vpack.c.b16 %v1703, %v1702
    %v1798 = vpack.c.b16 %v1705, %v1704
    %v1799 = vpack.c.b16 %v1707, %v1706
    %v1800 = vpack.c.b16 %v1709, %v1708
    %v1801 = vpack.c.b16 %v1711, %v1710
    %v1802 = vpack.c.b16 %v1713, %v1712
    %v1803 = vpack.c.b16 %v1715, %v1714
    %v1804 = vpack.c.b16 %v1717, %v1716
    %v1805 = vpack.c.b16 %v1719, %v1718
    %v1806 = vpack.c.b16 %v1721, %v1720
    %v1807 = vpack.c.b16 %v1723, %v1722
    %v1808 = vpack.c.b16 %v1725, %v1724
    %v1809 = vpack.c.b16 %v1727, %v1726
    %v1810 = vpack.c.b16 %v1729, %v1728
    %v1811 = vpack.c.b16 %v1731, %v1730
    %v1812 = vpack.c.b16 %v1733, %v1732
    %v1813 = vpack.c.b16 %v1735, %v1734
    %v1814 = vpack.c.b16 %v1737, %v1736
    %v1815 = vpack.c.b16 %v1739, %v1738
    %v1816 = vpack.c.b16 %v1741, %v1740
    %v1817 = vpack.c.b16 %v1743, %v1742
    %v1818 = vpack.c.b16 %v1745, %v1744
    %v1819 = vpack.c.b16 %v1747, %v1746
    %v1820 = vpack.c.b16 %v1749, %v1748
    %v1821 = vpack.c.b16 %v1751, %v1750
    %v1822 = vpack.c.b16 %v1753, %v1752
    %v1823 = vpack.c.b16 %v1755, %v1754
    %v1824 = vpack.c.b16 %v1757, %v1756
    %v1825 = vpack.c.b16 %v1759, %v1758
    %v1826 = vpack.c.b16 %v1761, %v1760
    %v1827 = vpack.c.b16 %v1763, %v1762
    %v1828 = vpack.c.b16 %v1765, %v1764
    %v1829 = vpack.c.b16 %v1767, %v1766
    %v1830 = vpack.c.b16 %v1769, %v1768
    %v1831 = vpack.c.b16 %v1771, %v1770
    %v1832 = vpack.c.b16 %v1773, %v1772
    %v1833 = vpack.c.b16 %v1775, %v1774
    %v1834 = vpack.c.b16 %v1777, %v1776
    %v1835 = vpack.c.b16 %v1779, %v1778
    %v1836 = vpack.c.b16 %v1781, %v1780
    %v1837 = vpack.c.b16 %v1783, %v1782
    %v1838 = vpack.c.b16 %v1785, %v1784
    %v1839 = vpack.c.b16 %v1787, %v1786
    %v1840 = vpack.c.b16 %v1789, %v1788
    %v1841 = vpack.c.b16 %v1791, %v1790
    %v1842 = vpack.c.b16 %v1793, %v1792
    %v1843 = vpack.c.b16 %v1795, %v1794
    %1892 = vmatprep.subr.bf16.mxu0 0
    %1893 = vmatpush1.bf16.msra.mxu0 %v1796
    %1894 = vmatprep.subr.bf16.mxu0 0
    %1895 = vmatpush1.bf16.msra.mxu0 %v1797
    %1896 = vmatprep.subr.bf16.mxu0 0
    %1897 = vmatpush1.bf16.msra.mxu0 %v1798
    %1898 = vmatprep.subr.bf16.mxu0 0
    %1899 = vmatpush1.bf16.msra.mxu0 %v1799
    %1900 = vmatprep.subr.bf16.mxu0 0
    %1901 = vmatpush1.bf16.msra.mxu0 %v1800
    %1902 = vmatprep.subr.bf16.mxu0 0
    %1903 = vmatpush1.bf16.msra.mxu0 %v1801
    %1904 = vmatprep.subr.bf16.mxu0 0
    %1905 = vmatpush1.bf16.msra.mxu0 %v1802
    %1906 = vmatprep.subr.bf16.mxu0 0
    %1907 = vmatpush1.bf16.msra.mxu0 %v1803
    %1908 = vmatprep.subr.bf16.mxu0 0
    %1909 = vmatpush1.bf16.msra.mxu0 %v1804
    %1910 = vmatprep.subr.bf16.mxu0 0
    %1911 = vmatpush1.bf16.msra.mxu0 %v1805
    %1912 = vmatprep.subr.bf16.mxu0 0
    %1913 = vmatpush1.bf16.msra.mxu0 %v1806
    %1914 = vmatprep.subr.bf16.mxu0 0
    %1915 = vmatpush1.bf16.msra.mxu0 %v1807
    %1916 = vmatprep.subr.bf16.mxu0 0
    %1917 = vmatpush1.bf16.msra.mxu0 %v1808
    %1918 = vmatprep.subr.bf16.mxu0 0
    %1919 = vmatpush1.bf16.msra.mxu0 %v1809
    %1920 = vmatprep.subr.bf16.mxu0 0
    %1921 = vmatpush1.bf16.msra.mxu0 %v1810
    %1922 = vmatprep.subr.bf16.mxu0 0
    %1923 = vmatpush1.bf16.msra.mxu0 %v1811
    %1924 = vmatprep.mubr.bf16.mxu0 %v1561
    %1925 = vmatmul.mubr.bf16.gmra.mrb[0].mxu0 %v1558
    %v1926 = vpop.f32.mrb[0].mxu0
    %v1927 = vadd.f32 0.0, %v1926
    %v1928 = vpop.f32.mrb[0].mxu0
    %v1929 = vpop.f32.mrb[0].mxu0
    %v1930 = vadd.f32 0.0, %v1929
    %v1931 = vpop.f32.mrb[0].mxu0
    %1932 = vmatprep.mubr.bf16.mxu0 %v1577
    %1933 = vmatmul.mubr.bf16.gmra.mrb[0].mxu0 %v1575
    %v1934 = vpop.f32.mrb[0].mxu0
    %v1935 = vadd.f32 0.0, %v1934
    %v1936 = vpop.f32.mrb[0].mxu0
    %v1937 = vpop.f32.mrb[0].mxu0
    %v1938 = vadd.f32 0.0, %v1937
    %v1939 = vpop.f32.mrb[0].mxu0
    %1940 = vmatprep.mubr.bf16.mxu0 %v1576
    %1941 = vmatmul.mubr.bf16.gmra.mrb[0].mxu0 %v1574
    %v1942 = vpop.f32.mrb[0].mxu0
    %v1943 = vadd.f32 0.0, %v1942
    %v1944 = vpop.f32.mrb[0].mxu0
    %v1945 = vpop.f32.mrb[0].mxu0
    %v1946 = vpop.f32.mrb[0].mxu0
    %1947 = vdwg.mxu0
    %1948 = vmatprep.subr.bf16.mxu0 0
    %1949 = vmatpush1.bf16.msra.mxu0 %v1812
    %1950 = vmatprep.subr.bf16.mxu0 0
    %1951 = vmatpush1.bf16.msra.mxu0 %v1813
    %1952 = vmatprep.subr.bf16.mxu0 0
    %1953 = vmatpush1.bf16.msra.mxu0 %v1814
    %1954 = vmatprep.subr.bf16.mxu0 0
    %1955 = vmatpush1.bf16.msra.mxu0 %v1815
    %1956 = vmatprep.subr.bf16.mxu0 0
    %1957 = vmatpush1.bf16.msra.mxu0 %v1816
    %1958 = vmatprep.subr.bf16.mxu0 0
    %1959 = vmatpush1.bf16.msra.mxu0 %v1817
    %1960 = vmatprep.subr.bf16.mxu0 0
    %1961 = vmatpush1.bf16.msra.mxu0 %v1818
    %1962 = vmatprep.subr.bf16.mxu0 0
    %1963 = vmatpush1.bf16.msra.mxu0 %v1819
    %1964 = vmatprep.subr.bf16.mxu0 0
    %1965 = vmatpush1.bf16.msra.mxu0 %v1820
    %1966 = vmatprep.subr.bf16.mxu0 0
    %1967 = vmatpush1.bf16.msra.mxu0 %v1821
    %1968 = vmatprep.subr.bf16.mxu0 0
    %1969 = vmatpush1.bf16.msra.mxu0 %v1822
    %1970 = vmatprep.subr.bf16.mxu0 0
    %1971 = vmatpush1.bf16.msra.mxu0 %v1823
    %1972 = vmatprep.subr.bf16.mxu0 0
    %1973 = vmatpush1.bf16.msra.mxu0 %v1824
    %1974 = vmatprep.subr.bf16.mxu0 0
    %1975 = vmatpush1.bf16.msra.mxu0 %v1825
    %1976 = vmatprep.subr.bf16.mxu0 0
    %1977 = vmatpush1.bf16.msra.mxu0 %v1826
    %1978 = vmatprep.subr.bf16.mxu0 0
    %1979 = vmatpush1.bf16.msra.mxu0 %v1827
    %1980 = vmatprep.mubr.bf16.mxu0 %v1567
    %1981 = vmatmul.mubr.bf16.gmra.mrb[0].mxu0 %v1564
    %v1982 = vpop.f32.mrb[0].mxu0
    %v1983 = vadd.f32 %v1927, %v1982
    %v1984 = vpop.f32.mrb[0].mxu0
    %v1985 = vpop.f32.mrb[0].mxu0
    %v1986 = vadd.f32 %v1930, %v1985
    %v1987 = vpop.f32.mrb[0].mxu0
    %1988 = vmatprep.mubr.bf16.mxu0 %v1581
    %1989 = vmatmul.mubr.bf16.gmra.mrb[0].mxu0 %v1579
    %v1990 = vpop.f32.mrb[0].mxu0
    %v1991 = vadd.f32 %v1935, %v1990
    %v1992 = vpop.f32.mrb[0].mxu0
    %v1993 = vpop.f32.mrb[0].mxu0
    %v1994 = vadd.f32 %v1938, %v1993
    %v1995 = vpop.f32.mrb[0].mxu0
    %1996 = vmatprep.mubr.bf16.mxu0 %v1580
    %1997 = vmatmul.mubr.bf16.gmra.mrb[0].mxu0 %v1578
    %v1998 = vpop.f32.mrb[0].mxu0
    %v1999 = vadd.f32 %v1943, %v1998
    %v2000 = vpop.f32.mrb[0].mxu0
    %v2001 = vpop.f32.mrb[0].mxu0
    %v2002 = vpop.f32.mrb[0].mxu0
    %2003 = vdwg.mxu0
    %2004 = vmatprep.subr.bf16.mxu0 0
    %2005 = vmatpush1.bf16.msra.mxu0 %v1828
    %2006 = vmatprep.subr.bf16.mxu0 0
    %2007 = vmatpush1.bf16.msra.mxu0 %v1829
    %2008 = vmatprep.subr.bf16.mxu0 0
    %2009 = vmatpush1.bf16.msra.mxu0 %v1830
    %2010 = vmatprep.subr.bf16.mxu0 0
    %2011 = vmatpush1.bf16.msra.mxu0 %v1831
    %2012 = vmatprep.subr.bf16.mxu0 0
    %2013 = vmatpush1.bf16.msra.mxu0 %v1832
    %2014 = vmatprep.subr.bf16.mxu0 0
    %2015 = vmatpush1.bf16.msra.mxu0 %v1833
    %2016 = vmatprep.subr.bf16.mxu0 0
    %2017 = vmatpush1.bf16.msra.mxu0 %v1834
    %2018 = vmatprep.subr.bf16.mxu0 0
    %2019 = vmatpush1.bf16.msra.mxu0 %v1835
    %2020 = vmatprep.subr.bf16.mxu0 0
    %2021 = vmatpush1.bf16.msra.mxu0 %v1836
    %2022 = vmatprep.subr.bf16.mxu0 0
    %2023 = vmatpush1.bf16.msra.mxu0 %v1837
    %2024 = vmatprep.subr.bf16.mxu0 0
    %2025 = vmatpush1.bf16.msra.mxu0 %v1838
    %2026 = vmatprep.subr.bf16.mxu0 0
    %2027 = vmatpush1.bf16.msra.mxu0 %v1839
    %2028 = vmatprep.subr.bf16.mxu0 0
    %2029 = vmatpush1.bf16.msra.mxu0 %v1840
    %2030 = vmatprep.subr.bf16.mxu0 0
    %2031 = vmatpush1.bf16.msra.mxu0 %v1841
    %2032 = vmatprep.subr.bf16.mxu0 0
    %2033 = vmatpush1.bf16.msra.mxu0 %v1842
    %2034 = vmatprep.subr.bf16.mxu0 0
    %2035 = vmatpush1.bf16.msra.mxu0 %v1843
    %2036 = vmatprep.mubr.bf16.mxu0 %v1573
    %2037 = vmatmul.mubr.bf16.gmra.mrb[0].mxu0 %v1570
    %v2038 = vpop.f32.mrb[0].mxu0
    %v2039 = vadd.f32 %v1983, %v2038
    %v2040 = vpop.f32.mrb[0].mxu0
    %v2041 = vpop.f32.mrb[0].mxu0
    %v2042 = vadd.f32 %v1986, %v2041
    %v2043 = vpop.f32.mrb[0].mxu0
    %2044 = vmatprep.mubr.bf16.mxu0 %v1585
    %2045 = vmatmul.mubr.bf16.gmra.mrb[0].mxu0 %v1583
    %v2046 = vpop.f32.mrb[0].mxu0
    %v2047 = vadd.f32 %v1991, %v2046
    %v2048 = vpop.f32.mrb[0].mxu0
    %v2049 = vpop.f32.mrb[0].mxu0
    %v2050 = vadd.f32 %v1994, %v2049
    %v2051 = vpop.f32.mrb[0].mxu0
    %2052 = vmatprep.mubr.bf16.mxu0 %v1584
    %2053 = vmatmul.mubr.bf16.gmra.mrb[0].mxu0 %v1582
    %v2054 = vpop.f32.mrb[0].mxu0
    %v2055 = vadd.f32 %v1999, %v2054
    %v2056 = vpop.f32.mrb[0].mxu0
    %v2057 = vpop.f32.mrb[0].mxu0
    %v2058 = vpop.f32.mrb[0].mxu0
    %2059 = vdwg.mxu0
    %v2060 = vadd.f32 %v1419, %v2039
    %v2061 = vadd.f32 %v1422, %v2042
    %v2062 = vadd.f32 %v1427, %v2047
    %v2063 = vadd.f32 %v1430, %v2050
    %v2064 = vadd.f32 %v1435, %v2055
    %v2065 = vld [vmem:[%s10] sm:$0x1]
    %v2067 = vlaneseq
    %v2068 = vshrl.u32 %v2067, 7
    %v2069 = vsub.s32 0, %v2068
    %v2070 = vrot.slane %v2065, %v2069
    %v2072 = vadd.f32 %v2060, %v2070
    %v2073 = vadd.f32 %v2061, %v2070
    %v2074 = vadd.f32 %v2062, %v2070
    %v2075 = vadd.f32 %v2063, %v2070
    %v2076 = vadd.f32 %v2064, %v2070
    %v2077 = vmax.f32 %v2072, 0.0
    %v2078 = vmax.f32 %v2073, 0.0
    %v2079 = vmax.f32 %v2074, 0.0
    %v2080 = vmax.f32 %v2075, 0.0
    %v2081 = vmax.f32 %v2076, 0.0
    %2082 = vst [vmem:[#allocation2] sm:$0xff] 0.0
    %2083 = vst [vmem:[#allocation2 + $0x8] sm:$0xff] 0.0
    %2084 = vst [vmem:[#allocation2 + $0x10] sm:$0xff] 0.0
    %2085 = vst [vmem:[#allocation2 + $0x18] sm:$0xff] 0.0
    %2086 = vst [vmem:[#allocation2 + $0x20] sm:$0xf] 0.0
    %2087 = vst [vmem:[#allocation2 + $0x1] sm:$0xff] %v2077
    %2088 = vst [vmem:[#allocation2 + $0x9] sm:$0xff] %v2078
    %2089 = vst [vmem:[#allocation2 + $0x11] sm:$0xfc] %v2079
    %2090 = vst [vmem:[#allocation2 + $0x19] sm:$0xff] %v2080
    %2091 = vst [vmem:[#allocation2 + $0x21] sm:$0x3] %v2081
    %v2092 = vld [vmem:[#allocation2] ss:$2 sm:$0xff]
    %s2093 = scalar_lea.vmem [#allocation2], 16
    %v2094 = vld [vmem:[%s2093] ss:$2 sm:$0xff]
    %s2095 = scalar_lea.vmem [#allocation2], 32
    %v2096 = vld [vmem:[%s2095] ss:$2 sm:$0x1]
    %v2097 = vpack.c.bf16 %v2094, %v2092
    %v2098 = vpack.c.bf16 %v2096, %v2096
    %v2099 = vld [vmem:[%s2] sm:$0xf]
    %v2100 = vld [vmem:[%s2 + $0x4] sm:$0xf]
    %v2101 = vld [vmem:[%s2 + $0x8] sm:$0xf]
    %v2102 = vld [vmem:[%s2 + $0xc] sm:$0xf]
    %v2103 = vld [vmem:[%s2 + $0x10] sm:$0xf]
    %v2104 = vld [vmem:[%s2 + $0x14] sm:$0xf]
    %v2105 = vld [vmem:[%s2 + $0x18] sm:$0xf]
    %v2106 = vld [vmem:[%s2 + $0x1c] sm:$0xf]
    %v2107 = vld [vmem:[%s2 + $0x20] sm:$0xf]
    %v2108 = vld [vmem:[%s2 + $0x24] sm:$0xf]
    %v2109 = vld [vmem:[%s2 + $0x28] sm:$0xf]
    %v2110 = vld [vmem:[%s2 + $0x2c] sm:$0xf]
    %v2111 = vld [vmem:[%s2 + $0x30] sm:$0xf]
    %v2112 = vld [vmem:[%s2 + $0x34] sm:$0xf]
    %v2113 = vld [vmem:[%s2 + $0x38] sm:$0xf]
    %v2114 = vld [vmem:[%s2 + $0x3c] sm:$0xf]
    %s2115 = scalar_lea.vmem [#allocation2], 1
    %v2116 = vld [vmem:[%s2115] ss:$2 sm:$0xff]
    %s2117 = scalar_lea.vmem [#allocation2], 17
    %v2118 = vld [vmem:[%s2117] ss:$2 sm:$0xff]
    %s2119 = scalar_lea.vmem [#allocation2], 33
    %v2120 = vld [vmem:[%s2119] ss:$2 sm:$0x1]
    %v2121 = vpack.c.bf16 %v2118, %v2116
    %v2122 = vpack.c.bf16 %v2120, %v2120
    %s2123 = scalar_lea.vmem %s2, 64
    %v2124 = vld [vmem:[%s2123] sm:$0xf]
    %v2125 = vld [vmem:[%s2123 + $0x4] sm:$0xf]
    %v2126 = vld [vmem:[%s2123 + $0x8] sm:$0xf]
    %v2127 = vld [vmem:[%s2123 + $0xc] sm:$0xf]
    %v2128 = vld [vmem:[%s2123 + $0x10] sm:$0xf]
    %v2129 = vld [vmem:[%s2123 + $0x14] sm:$0xf]
    %v2130 = vld [vmem:[%s2123 + $0x18] sm:$0xf]
    %v2131 = vld [vmem:[%s2123 + $0x1c] sm:$0xf]
    %v2132 = vld [vmem:[%s2123 + $0x20] sm:$0xf]
    %v2133 = vld [vmem:[%s2123 + $0x24] sm:$0xf]
    %v2134 = vld [vmem:[%s2123 + $0x28] sm:$0xf]
    %v2135 = vld [vmem:[%s2123 + $0x2c] sm:$0xf]
    %v2136 = vld [vmem:[%s2123 + $0x30] sm:$0xf]
    %v2137 = vld [vmem:[%s2123 + $0x34] sm:$0xf]
    %v2138 = vld [vmem:[%s2123 + $0x38] sm:$0xf]
    %v2139 = vld [vmem:[%s2123 + $0x3c] sm:$0xf]
    %v2156 = vunpack.c.l.b16 %v2124
    %v2157 = vunpack.c.l.b16 %v2125
    %v2158 = vunpack.c.l.b16 %v2126
    %v2159 = vunpack.c.l.b16 %v2127
    %v2160 = vunpack.c.l.b16 %v2128
    %v2161 = vunpack.c.l.b16 %v2129
    %v2162 = vunpack.c.l.b16 %v2130
    %v2163 = vunpack.c.l.b16 %v2131
    %v2164 = vunpack.c.l.b16 %v2132
    %v2165 = vunpack.c.l.b16 %v2133
    %v2166 = vunpack.c.l.b16 %v2134
    %v2167 = vunpack.c.l.b16 %v2135
    %v2168 = vunpack.c.l.b16 %v2136
    %v2169 = vunpack.c.l.b16 %v2137
    %v2170 = vunpack.c.l.b16 %v2138
    %v2171 = vunpack.c.l.b16 %v2139
    %v2172 = vpack.c.b16 %v2157, %v2156
    %v2173 = vpack.c.b16 %v2159, %v2158
    %v2174 = vpack.c.b16 %v2161, %v2160
    %v2175 = vpack.c.b16 %v2163, %v2162
    %v2176 = vpack.c.b16 %v2165, %v2164
    %v2177 = vpack.c.b16 %v2167, %v2166
    %v2178 = vpack.c.b16 %v2169, %v2168
    %v2179 = vpack.c.b16 %v2171, %v2170
    %2188 = vmatprep.subr.bf16.mxu0 0
    %2189 = vmatpush1.bf16.msra.mxu0 %v2172
    %2190 = vmatprep.subr.bf16.mxu0 0
    %2191 = vmatpush1.bf16.msra.mxu0 %v2173
    %2192 = vmatprep.subr.bf16.mxu0 0
    %2193 = vmatpush1.bf16.msra.mxu0 %v2174
    %2194 = vmatprep.subr.bf16.mxu0 0
    %2195 = vmatpush1.bf16.msra.mxu0 %v2175
    %2196 = vmatprep.subr.bf16.mxu0 0
    %2197 = vmatpush1.bf16.msra.mxu0 %v2176
    %2198 = vmatprep.subr.bf16.mxu0 0
    %2199 = vmatpush1.bf16.msra.mxu0 %v2177
    %2200 = vmatprep.subr.bf16.mxu0 0
    %2201 = vmatpush1.bf16.msra.mxu0 %v2178
    %2202 = vmatprep.subr.bf16.mxu0 0
    %2203 = vmatpush1.bf16.msra.mxu0 %v2179
    %2204 = vmatprep.subr.bf16.mxu0 0
    %2205 = vmatpush1.bf16.msra.mxu0 0
    %2206 = vmatprep.subr.bf16.mxu0 0
    %2207 = vmatpush1.bf16.msra.mxu0 0
    %2208 = vmatprep.subr.bf16.mxu0 0
    %2209 = vmatpush1.bf16.msra.mxu0 0
    %2210 = vmatprep.subr.bf16.mxu0 0
    %2211 = vmatpush1.bf16.msra.mxu0 0
    %2212 = vmatprep.subr.bf16.mxu0 0
    %2213 = vmatpush1.bf16.msra.mxu0 0
    %2214 = vmatprep.subr.bf16.mxu0 0
    %2215 = vmatpush1.bf16.msra.mxu0 0
    %2216 = vmatprep.subr.bf16.mxu0 0
    %2217 = vmatpush1.bf16.msra.mxu0 0
    %2218 = vmatprep.subr.bf16.mxu0 0
    %2219 = vmatpush1.bf16.msra.mxu0 0
    %2220 = vmatprep.mubr.bf16.mxu0 0
    %2221 = vmatmul.mubr.bf16.gmra.mrb[0].mxu0 %v2121
    %v2222 = vpop.f32.mrb[0].mxu0
    %v2223 = vadd.f32 0.0, %v2222
    %v2224 = vpop.f32.mrb[0].mxu0
    %v2225 = vpop.f32.mrb[0].mxu0
    %v2226 = vadd.f32 0.0, %v2225
    %v2227 = vpop.f32.mrb[0].mxu0
    %2228 = vmatprep.mubr.bf16.mxu0 0
    %2229 = vmatmul.mubr.bf16.gmra.mrb[0].mxu0 %v2122
    %v2230 = vpop.f32.mrb[0].mxu0
    %v2231 = vadd.f32 0.0, %v2230
    %v2232 = vpop.f32.mrb[0].mxu0
    %v2233 = vpop.f32.mrb[0].mxu0
    %v2234 = vpop.f32.mrb[0].mxu0
    %2235 = vdwg.mxu0
    %v2252 = vunpack.c.l.b16 %v2099
    %v2253 = vunpack.c.l.b16 %v2100
    %v2254 = vunpack.c.l.b16 %v2101
    %v2255 = vunpack.c.l.b16 %v2102
    %v2256 = vunpack.c.l.b16 %v2103
    %v2257 = vunpack.c.l.b16 %v2104
    %v2258 = vunpack.c.l.b16 %v2105
    %v2259 = vunpack.c.l.b16 %v2106
    %v2260 = vunpack.c.l.b16 %v2107
    %v2261 = vunpack.c.l.b16 %v2108
    %v2262 = vunpack.c.l.b16 %v2109
    %v2263 = vunpack.c.l.b16 %v2110
    %v2264 = vunpack.c.l.b16 %v2111
    %v2265 = vunpack.c.l.b16 %v2112
    %v2266 = vunpack.c.l.b16 %v2113
    %v2267 = vunpack.c.l.b16 %v2114
    %v2268 = vpack.c.b16 %v2253, %v2252
    %v2269 = vpack.c.b16 %v2255, %v2254
    %v2270 = vpack.c.b16 %v2257, %v2256
    %v2271 = vpack.c.b16 %v2259, %v2258
    %v2272 = vpack.c.b16 %v2261, %v2260
    %v2273 = vpack.c.b16 %v2263, %v2262
    %v2274 = vpack.c.b16 %v2265, %v2264
    %v2275 = vpack.c.b16 %v2267, %v2266
    %2284 = vmatprep.subr.bf16.mxu0 0
    %2285 = vmatpush1.bf16.msra.mxu0 %v2268
    %2286 = vmatprep.subr.bf16.mxu0 0
    %2287 = vmatpush1.bf16.msra.mxu0 %v2269
    %2288 = vmatprep.subr.bf16.mxu0 0
    %2289 = vmatpush1.bf16.msra.mxu0 %v2270
    %2290 = vmatprep.subr.bf16.mxu0 0
    %2291 = vmatpush1.bf16.msra.mxu0 %v2271
    %2292 = vmatprep.subr.bf16.mxu0 0
    %2293 = vmatpush1.bf16.msra.mxu0 %v2272
    %2294 = vmatprep.subr.bf16.mxu0 0
    %2295 = vmatpush1.bf16.msra.mxu0 %v2273
    %2296 = vmatprep.subr.bf16.mxu0 0
    %2297 = vmatpush1.bf16.msra.mxu0 %v2274
    %2298 = vmatprep.subr.bf16.mxu0 0
    %2299 = vmatpush1.bf16.msra.mxu0 %v2275
    %2300 = vmatprep.subr.bf16.mxu0 0
    %2301 = vmatpush1.bf16.msra.mxu0 0
    %2302 = vmatprep.subr.bf16.mxu0 0
    %2303 = vmatpush1.bf16.msra.mxu0 0
    %2304 = vmatprep.subr.bf16.mxu0 0
    %2305 = vmatpush1.bf16.msra.mxu0 0
    %2306 = vmatprep.subr.bf16.mxu0 0
    %2307 = vmatpush1.bf16.msra.mxu0 0
    %2308 = vmatprep.subr.bf16.mxu0 0
    %2309 = vmatpush1.bf16.msra.mxu0 0
    %2310 = vmatprep.subr.bf16.mxu0 0
    %2311 = vmatpush1.bf16.msra.mxu0 0
    %2312 = vmatprep.subr.bf16.mxu0 0
    %2313 = vmatpush1.bf16.msra.mxu0 0
    %2314 = vmatprep.subr.bf16.mxu0 0
    %2315 = vmatpush1.bf16.msra.mxu0 0
    %2316 = vmatprep.mubr.bf16.mxu0 0
    %2317 = vmatmul.mubr.bf16.gmra.mrb[0].mxu0 %v2097
    %v2318 = vpop.f32.mrb[0].mxu0
    %v2319 = vadd.f32 %v2223, %v2318
    %v2320 = vpop.f32.mrb[0].mxu0
    %v2321 = vpop.f32.mrb[0].mxu0
    %v2322 = vadd.f32 %v2226, %v2321
    %v2323 = vpop.f32.mrb[0].mxu0
    %2324 = vmatprep.mubr.bf16.mxu0 0
    %2325 = vmatmul.mubr.bf16.gmra.mrb[0].mxu0 %v2098
    %v2326 = vpop.f32.mrb[0].mxu0
    %v2327 = vadd.f32 %v2231, %v2326
    %v2328 = vpop.f32.mrb[0].mxu0
    %v2329 = vpop.f32.mrb[0].mxu0
    %v2330 = vpop.f32.mrb[0].mxu0
    %2331 = vdwg.mxu0
    %s2332 = scalar_lea.vmem [#allocation2], 2
    %v2333 = vld [vmem:[%s2332] ss:$2 sm:$0xff]
    %s2334 = scalar_lea.vmem [#allocation2], 18
    %v2335 = vld [vmem:[%s2334] ss:$2 sm:$0xff]
    %s2336 = scalar_lea.vmem [#allocation2], 34
    %v2337 = vld [vmem:[%s2336] ss:$2 sm:$0x1]
    %v2338 = vpack.c.bf16 %v2335, %v2333
    %v2339 = vpack.c.bf16 %v2337, %v2337
    %s2340 = scalar_lea.vmem %s2, 128
    %v2341 = vld [vmem:[%s2340] sm:$0xf]
    %v2342 = vld [vmem:[%s2340 + $0x4] sm:$0xf]
    %v2343 = vld [vmem:[%s2340 + $0x8] sm:$0xf]
    %v2344 = vld [vmem:[%s2340 + $0xc] sm:$0xf]
    %v2345 = vld [vmem:[%s2340 + $0x10] sm:$0xf]
    %v2346 = vld [vmem:[%s2340 + $0x14] sm:$0xf]
    %v2347 = vld [vmem:[%s2340 + $0x18] sm:$0xf]
    %v2348 = vld [vmem:[%s2340 + $0x1c] sm:$0xf]
    %v2349 = vld [vmem:[%s2340 + $0x20] sm:$0xf]
    %v2350 = vld [vmem:[%s2340 + $0x24] sm:$0xf]
    %v2351 = vld [vmem:[%s2340 + $0x28] sm:$0xf]
    %v2352 = vld [vmem:[%s2340 + $0x2c] sm:$0xf]
    %v2353 = vld [vmem:[%s2340 + $0x30] sm:$0xf]
    %v2354 = vld [vmem:[%s2340 + $0x34] sm:$0xf]
    %v2355 = vld [vmem:[%s2340 + $0x38] sm:$0xf]
    %v2356 = vld [vmem:[%s2340 + $0x3c] sm:$0xf]
    %v2373 = vunpack.c.l.b16 %v2341
    %v2374 = vunpack.c.l.b16 %v2342
    %v2375 = vunpack.c.l.b16 %v2343
    %v2376 = vunpack.c.l.b16 %v2344
    %v2377 = vunpack.c.l.b16 %v2345
    %v2378 = vunpack.c.l.b16 %v2346
    %v2379 = vunpack.c.l.b16 %v2347
    %v2380 = vunpack.c.l.b16 %v2348
    %v2381 = vunpack.c.l.b16 %v2349
    %v2382 = vunpack.c.l.b16 %v2350
    %v2383 = vunpack.c.l.b16 %v2351
    %v2384 = vunpack.c.l.b16 %v2352
    %v2385 = vunpack.c.l.b16 %v2353
    %v2386 = vunpack.c.l.b16 %v2354
    %v2387 = vunpack.c.l.b16 %v2355
    %v2388 = vunpack.c.l.b16 %v2356
    %v2389 = vpack.c.b16 %v2374, %v2373
    %v2390 = vpack.c.b16 %v2376, %v2375
    %v2391 = vpack.c.b16 %v2378, %v2377
    %v2392 = vpack.c.b16 %v2380, %v2379
    %v2393 = vpack.c.b16 %v2382, %v2381
    %v2394 = vpack.c.b16 %v2384, %v2383
    %v2395 = vpack.c.b16 %v2386, %v2385
    %v2396 = vpack.c.b16 %v2388, %v2387
    %2405 = vmatprep.subr.bf16.mxu0 0
    %2406 = vmatpush1.bf16.msra.mxu0 %v2389
    %2407 = vmatprep.subr.bf16.mxu0 0
    %2408 = vmatpush1.bf16.msra.mxu0 %v2390
    %2409 = vmatprep.subr.bf16.mxu0 0
    %2410 = vmatpush1.bf16.msra.mxu0 %v2391
    %2411 = vmatprep.subr.bf16.mxu0 0
    %2412 = vmatpush1.bf16.msra.mxu0 %v2392
    %2413 = vmatprep.subr.bf16.mxu0 0
    %2414 = vmatpush1.bf16.msra.mxu0 %v2393
    %2415 = vmatprep.subr.bf16.mxu0 0
    %2416 = vmatpush1.bf16.msra.mxu0 %v2394
    %2417 = vmatprep.subr.bf16.mxu0 0
    %2418 = vmatpush1.bf16.msra.mxu0 %v2395
    %2419 = vmatprep.subr.bf16.mxu0 0
    %2420 = vmatpush1.bf16.msra.mxu0 %v2396
    %2421 = vmatprep.subr.bf16.mxu0 0
    %2422 = vmatpush1.bf16.msra.mxu0 0
    %2423 = vmatprep.subr.bf16.mxu0 0
    %2424 = vmatpush1.bf16.msra.mxu0 0
    %2425 = vmatprep.subr.bf16.mxu0 0
    %2426 = vmatpush1.bf16.msra.mxu0 0
    %2427 = vmatprep.subr.bf16.mxu0 0
    %2428 = vmatpush1.bf16.msra.mxu0 0
    %2429 = vmatprep.subr.bf16.mxu0 0
    %2430 = vmatpush1.bf16.msra.mxu0 0
    %2431 = vmatprep.subr.bf16.mxu0 0
    %2432 = vmatpush1.bf16.msra.mxu0 0
    %2433 = vmatprep.subr.bf16.mxu0 0
    %2434 = vmatpush1.bf16.msra.mxu0 0
    %2435 = vmatprep.subr.bf16.mxu0 0
    %2436 = vmatpush1.bf16.msra.mxu0 0
    %2437 = vmatprep.mubr.bf16.mxu0 0
    %2438 = vmatmul.mubr.bf16.gmra.mrb[0].mxu0 %v2338
    %v2439 = vpop.f32.mrb[0].mxu0
    %v2440 = vadd.f32 0.0, %v2439
    %v2441 = vpop.f32.mrb[0].mxu0
    %v2442 = vpop.f32.mrb[0].mxu0
    %v2443 = vadd.f32 0.0, %v2442
    %v2444 = vpop.f32.mrb[0].mxu0
    %2445 = vmatprep.mubr.bf16.mxu0 0
    %2446 = vmatmul.mubr.bf16.gmra.mrb[0].mxu0 %v2339
    %v2447 = vpop.f32.mrb[0].mxu0
    %v2448 = vadd.f32 0.0, %v2447
    %v2449 = vpop.f32.mrb[0].mxu0
    %v2450 = vpop.f32.mrb[0].mxu0
    %v2451 = vpop.f32.mrb[0].mxu0
    %2452 = vdwg.mxu0
    %v2453 = vadd.f32 %v2319, %v2440
    %v2454 = vadd.f32 %v2322, %v2443
    %v2455 = vadd.f32 %v2327, %v2448
    %v2456 = vld [vmem:[%s11] sm:$0x1]
    %v2458 = vlaneseq
    %v2459 = vshrl.u32 %v2458, 7
    %v2460 = vsub.s32 0, %v2459
    %v2461 = vrot.slane %v2456, %v2460
    %v2463 = vadd.f32 %v2453, %v2461
    %v2464 = vadd.f32 %v2454, %v2461
    %v2465 = vadd.f32 %v2455, %v2461
    %v2466 = vmax.f32 %v2463, 0.0
    %v2467 = vmax.f32 %v2464, 0.0
    %v2468 = vmax.f32 %v2465, 0.0
    %2469 = vst [vmem:[#allocation3] sm:$0xff] 0.0
    %2470 = vst [vmem:[#allocation3 + $0x8] sm:$0xff] 0.0
    %2471 = vst [vmem:[#allocation3 + $0x10] sm:$0xf] 0.0
    %2472 = vst [vmem:[#allocation3 + $0x1] sm:$0xff] %v2466
    %2473 = vst [vmem:[#allocation3 + $0xa] sm:$0xfe] %v2467
    %2474 = vst [vmem:[#allocation3 + $0x12] sm:$0x1] %v2468
    %v2475 = vld [vmem:[#allocation3] sm:$0xff]
    %v2476 = vld [vmem:[#allocation3 + $0x8] sm:$0xff]
    %v2477 = vld [vmem:[#allocation3 + $0x10] sm:$0x3]
    %v2478 = vpack.c.bf16 %v2476, %v2475
    %v2479 = vpack.c.bf16 %v2477, %v2477
    %v2480 = vld [vmem:[%s3] sm:$0xf]
    %v2481 = vld [vmem:[%s3 + $0x4] sm:$0xf]
    %v2482 = vld [vmem:[%s3 + $0x8] sm:$0xf]
    %v2483 = vld [vmem:[%s3 + $0xc] sm:$0xf]
    %v2484 = vld [vmem:[%s3 + $0x10] sm:$0xf]
    %v2485 = vld [vmem:[%s3 + $0x14] sm:$0xf]
    %v2486 = vld [vmem:[%s3 + $0x18] sm:$0xf]
    %v2487 = vld [vmem:[%s3 + $0x1c] sm:$0xf]
    %v2488 = vld [vmem:[%s3 + $0x20] sm:$0xf]
    %v2489 = vld [vmem:[%s3 + $0x24] sm:$0xf]
    %v2490 = vld [vmem:[%s3 + $0x28] sm:$0xf]
    %v2491 = vld [vmem:[%s3 + $0x2c] sm:$0xf]
    %v2492 = vld [vmem:[%s3 + $0x30] sm:$0xf]
    %v2493 = vld [vmem:[%s3 + $0x34] sm:$0xf]
    %v2494 = vld [vmem:[%s3 + $0x38] sm:$0xf]
    %v2495 = vld [vmem:[%s3 + $0x3c] sm:$0xf]
    %v2496 = vld [vmem:[#allocation3 + $0x1] sm:$0xff]
    %v2497 = vld [vmem:[#allocation3 + $0x9] sm:$0xff]
    %v2498 = vld [vmem:[#allocation3 + $0x11] sm:$0x3]
    %v2499 = vpack.c.bf16 %v2497, %v2496
    %v2500 = vpack.c.bf16 %v2498, %v2498
    %s2501 = scalar_lea.vmem %s3, 64
    %v2502 = vld [vmem:[%s2501] sm:$0xf]
    %v2503 = vld [vmem:[%s2501 + $0x4] sm:$0xf]
    %v2504 = vld [vmem:[%s2501 + $0x8] sm:$0xf]
    %v2505 = vld [vmem:[%s2501 + $0xc] sm:$0xf]
    %v2506 = vld [vmem:[%s2501 + $0x10] sm:$0xf]
    %v2507 = vld [vmem:[%s2501 + $0x14] sm:$0xf]
    %v2508 = vld [vmem:[%s2501 + $0x18] sm:$0xf]
    %v2509 = vld [vmem:[%s2501 + $0x1c] sm:$0xf]
    %v2510 = vld [vmem:[%s2501 + $0x20] sm:$0xf]
    %v2511 = vld [vmem:[%s2501 + $0x24] sm:$0xf]
    %v2512 = vld [vmem:[%s2501 + $0x28] sm:$0xf]
    %v2513 = vld [vmem:[%s2501 + $0x2c] sm:$0xf]
    %v2514 = vld [vmem:[%s2501 + $0x30] sm:$0xf]
    %v2515 = vld [vmem:[%s2501 + $0x34] sm:$0xf]
    %v2516 = vld [vmem:[%s2501 + $0x38] sm:$0xf]
    %v2517 = vld [vmem:[%s2501 + $0x3c] sm:$0xf]
    %v2534 = vunpack.c.l.b16 %v2502
    %v2535 = vunpack.c.l.b16 %v2503
    %v2536 = vunpack.c.l.b16 %v2504
    %v2537 = vunpack.c.l.b16 %v2505
    %v2538 = vunpack.c.l.b16 %v2506
    %v2539 = vunpack.c.l.b16 %v2507
    %v2540 = vunpack.c.l.b16 %v2508
    %v2541 = vunpack.c.l.b16 %v2509
    %v2542 = vunpack.c.l.b16 %v2510
    %v2543 = vunpack.c.l.b16 %v2511
    %v2544 = vunpack.c.l.b16 %v2512
    %v2545 = vunpack.c.l.b16 %v2513
    %v2546 = vunpack.c.l.b16 %v2514
    %v2547 = vunpack.c.l.b16 %v2515
    %v2548 = vunpack.c.l.b16 %v2516
    %v2549 = vunpack.c.l.b16 %v2517
    %v2550 = vpack.c.b16 %v2535, %v2534
    %v2551 = vpack.c.b16 %v2537, %v2536
    %v2552 = vpack.c.b16 %v2539, %v2538
    %v2553 = vpack.c.b16 %v2541, %v2540
    %v2554 = vpack.c.b16 %v2543, %v2542
    %v2555 = vpack.c.b16 %v2545, %v2544
    %v2556 = vpack.c.b16 %v2547, %v2546
    %v2557 = vpack.c.b16 %v2549, %v2548
    %2566 = vmatprep.subr.bf16.mxu0 0
    %2567 = vmatpush1.bf16.msra.mxu0 %v2550
    %2568 = vmatprep.subr.bf16.mxu0 0
    %2569 = vmatpush1.bf16.msra.mxu0 %v2551
    %2570 = vmatprep.subr.bf16.mxu0 0
    %2571 = vmatpush1.bf16.msra.mxu0 %v2552
    %2572 = vmatprep.subr.bf16.mxu0 0
    %2573 = vmatpush1.bf16.msra.mxu0 %v2553
    %2574 = vmatprep.subr.bf16.mxu0 0
    %2575 = vmatpush1.bf16.msra.mxu0 %v2554
    %2576 = vmatprep.subr.bf16.mxu0 0
    %2577 = vmatpush1.bf16.msra.mxu0 %v2555
    %2578 = vmatprep.subr.bf16.mxu0 0
    %2579 = vmatpush1.bf16.msra.mxu0 %v2556
    %2580 = vmatprep.subr.bf16.mxu0 0
    %2581 = vmatpush1.bf16.msra.mxu0 %v2557
    %2582 = vmatprep.subr.bf16.mxu0 0
    %2583 = vmatpush1.bf16.msra.mxu0 0
    %2584 = vmatprep.subr.bf16.mxu0 0
    %2585 = vmatpush1.bf16.msra.mxu0 0
    %2586 = vmatprep.subr.bf16.mxu0 0
    %2587 = vmatpush1.bf16.msra.mxu0 0
    %2588 = vmatprep.subr.bf16.mxu0 0
    %2589 = vmatpush1.bf16.msra.mxu0 0
    %2590 = vmatprep.subr.bf16.mxu0 0
    %2591 = vmatpush1.bf16.msra.mxu0 0
    %2592 = vmatprep.subr.bf16.mxu0 0
    %2593 = vmatpush1.bf16.msra.mxu0 0
    %2594 = vmatprep.subr.bf16.mxu0 0
    %2595 = vmatpush1.bf16.msra.mxu0 0
    %2596 = vmatprep.subr.bf16.mxu0 0
    %2597 = vmatpush1.bf16.msra.mxu0 0
    %2598 = vmatprep.mubr.bf16.mxu0 0
    %2599 = vmatmul.mubr.bf16.gmra.mrb[0].mxu0 %v2499
    %v2600 = vpop.f32.mrb[0].mxu0
    %v2601 = vadd.f32 0.0, %v2600
    %v2602 = vpop.f32.mrb[0].mxu0
    %v2603 = vpop.f32.mrb[0].mxu0
    %v2604 = vadd.f32 0.0, %v2603
    %v2605 = vpop.f32.mrb[0].mxu0
    %2606 = vmatprep.mubr.bf16.mxu0 0
    %2607 = vmatmul.mubr.bf16.gmra.mrb[0].mxu0 %v2500
    %v2608 = vpop.f32.mrb[0].mxu0
    %v2609 = vadd.f32 0.0, %v2608
    %v2610 = vpop.f32.mrb[0].mxu0
    %v2611 = vpop.f32.mrb[0].mxu0
    %v2612 = vpop.f32.mrb[0].mxu0
    %2613 = vdwg.mxu0
    %v2630 = vunpack.c.l.b16 %v2480
    %v2631 = vunpack.c.l.b16 %v2481
    %v2632 = vunpack.c.l.b16 %v2482
    %v2633 = vunpack.c.l.b16 %v2483
    %v2634 = vunpack.c.l.b16 %v2484
    %v2635 = vunpack.c.l.b16 %v2485
    %v2636 = vunpack.c.l.b16 %v2486
    %v2637 = vunpack.c.l.b16 %v2487
    %v2638 = vunpack.c.l.b16 %v2488
    %v2639 = vunpack.c.l.b16 %v2489
    %v2640 = vunpack.c.l.b16 %v2490
    %v2641 = vunpack.c.l.b16 %v2491
    %v2642 = vunpack.c.l.b16 %v2492
    %v2643 = vunpack.c.l.b16 %v2493
    %v2644 = vunpack.c.l.b16 %v2494
    %v2645 = vunpack.c.l.b16 %v2495
    %v2646 = vpack.c.b16 %v2631, %v2630
    %v2647 = vpack.c.b16 %v2633, %v2632
    %v2648 = vpack.c.b16 %v2635, %v2634
    %v2649 = vpack.c.b16 %v2637, %v2636
    %v2650 = vpack.c.b16 %v2639, %v2638
    %v2651 = vpack.c.b16 %v2641, %v2640
    %v2652 = vpack.c.b16 %v2643, %v2642
    %v2653 = vpack.c.b16 %v2645, %v2644
    %2662 = vmatprep.subr.bf16.mxu0 0
    %2663 = vmatpush1.bf16.msra.mxu0 %v2646
    %2664 = vmatprep.subr.bf16.mxu0 0
    %2665 = vmatpush1.bf16.msra.mxu0 %v2647
    %2666 = vmatprep.subr.bf16.mxu0 0
    %2667 = vmatpush1.bf16.msra.mxu0 %v2648
    %2668 = vmatprep.subr.bf16.mxu0 0
    %2669 = vmatpush1.bf16.msra.mxu0 %v2649
    %2670 = vmatprep.subr.bf16.mxu0 0
    %2671 = vmatpush1.bf16.msra.mxu0 %v2650
    %2672 = vmatprep.subr.bf16.mxu0 0
    %2673 = vmatpush1.bf16.msra.mxu0 %v2651
    %2674 = vmatprep.subr.bf16.mxu0 0
    %2675 = vmatpush1.bf16.msra.mxu0 %v2652
    %2676 = vmatprep.subr.bf16.mxu0 0
    %2677 = vmatpush1.bf16.msra.mxu0 %v2653
    %2678 = vmatprep.subr.bf16.mxu0 0
    %2679 = vmatpush1.bf16.msra.mxu0 0
    %2680 = vmatprep.subr.bf16.mxu0 0
    %2681 = vmatpush1.bf16.msra.mxu0 0
    %2682 = vmatprep.subr.bf16.mxu0 0
    %2683 = vmatpush1.bf16.msra.mxu0 0
    %2684 = vmatprep.subr.bf16.mxu0 0
    %2685 = vmatpush1.bf16.msra.mxu0 0
    %2686 = vmatprep.subr.bf16.mxu0 0
    %2687 = vmatpush1.bf16.msra.mxu0 0
    %2688 = vmatprep.subr.bf16.mxu0 0
    %2689 = vmatpush1.bf16.msra.mxu0 0
    %2690 = vmatprep.subr.bf16.mxu0 0
    %2691 = vmatpush1.bf16.msra.mxu0 0
    %2692 = vmatprep.subr.bf16.mxu0 0
    %2693 = vmatpush1.bf16.msra.mxu0 0
    %2694 = vmatprep.mubr.bf16.mxu0 0
    %2695 = vmatmul.mubr.bf16.gmra.mrb[0].mxu0 %v2478
    %v2696 = vpop.f32.mrb[0].mxu0
    %v2697 = vadd.f32 %v2601, %v2696
    %v2698 = vpop.f32.mrb[0].mxu0
    %v2699 = vpop.f32.mrb[0].mxu0
    %v2700 = vadd.f32 %v2604, %v2699
    %v2701 = vpop.f32.mrb[0].mxu0
    %2702 = vmatprep.mubr.bf16.mxu0 0
    %2703 = vmatmul.mubr.bf16.gmra.mrb[0].mxu0 %v2479
    %v2704 = vpop.f32.mrb[0].mxu0
    %v2705 = vadd.f32 %v2609, %v2704
    %v2706 = vpop.f32.mrb[0].mxu0
    %v2707 = vpop.f32.mrb[0].mxu0
    %v2708 = vpop.f32.mrb[0].mxu0
    %2709 = vdwg.mxu0
    %v2710 = vld [vmem:[#allocation3 + $0x2] sm:$0xff]
    %v2711 = vld [vmem:[#allocation3 + $0xa] sm:$0xff]
    %v2712 = vld [vmem:[#allocation3 + $0x12] sm:$0x3]
    %v2713 = vpack.c.bf16 %v2711, %v2710
    %v2714 = vpack.c.bf16 %v2712, %v2712
    %s2715 = scalar_lea.vmem %s3, 128
    %v2716 = vld [vmem:[%s2715] sm:$0xf]
    %v2717 = vld [vmem:[%s2715 + $0x4] sm:$0xf]
    %v2718 = vld [vmem:[%s2715 + $0x8] sm:$0xf]
    %v2719 = vld [vmem:[%s2715 + $0xc] sm:$0xf]
    %v2720 = vld [vmem:[%s2715 + $0x10] sm:$0xf]
    %v2721 = vld [vmem:[%s2715 + $0x14] sm:$0xf]
    %v2722 = vld [vmem:[%s2715 + $0x18] sm:$0xf]
    %v2723 = vld [vmem:[%s2715 + $0x1c] sm:$0xf]
    %v2724 = vld [vmem:[%s2715 + $0x20] sm:$0xf]
    %v2725 = vld [vmem:[%s2715 + $0x24] sm:$0xf]
    %v2726 = vld [vmem:[%s2715 + $0x28] sm:$0xf]
    %v2727 = vld [vmem:[%s2715 + $0x2c] sm:$0xf]
    %v2728 = vld [vmem:[%s2715 + $0x30] sm:$0xf]
    %v2729 = vld [vmem:[%s2715 + $0x34] sm:$0xf]
    %v2730 = vld [vmem:[%s2715 + $0x38] sm:$0xf]
    %v2731 = vld [vmem:[%s2715 + $0x3c] sm:$0xf]
    %v2748 = vunpack.c.l.b16 %v2716
    %v2749 = vunpack.c.l.b16 %v2717
    %v2750 = vunpack.c.l.b16 %v2718
    %v2751 = vunpack.c.l.b16 %v2719
    %v2752 = vunpack.c.l.b16 %v2720
    %v2753 = vunpack.c.l.b16 %v2721
    %v2754 = vunpack.c.l.b16 %v2722
    %v2755 = vunpack.c.l.b16 %v2723
    %v2756 = vunpack.c.l.b16 %v2724
    %v2757 = vunpack.c.l.b16 %v2725
    %v2758 = vunpack.c.l.b16 %v2726
    %v2759 = vunpack.c.l.b16 %v2727
    %v2760 = vunpack.c.l.b16 %v2728
    %v2761 = vunpack.c.l.b16 %v2729
    %v2762 = vunpack.c.l.b16 %v2730
    %v2763 = vunpack.c.l.b16 %v2731
    %v2764 = vpack.c.b16 %v2749, %v2748
    %v2765 = vpack.c.b16 %v2751, %v2750
    %v2766 = vpack.c.b16 %v2753, %v2752
    %v2767 = vpack.c.b16 %v2755, %v2754
    %v2768 = vpack.c.b16 %v2757, %v2756
    %v2769 = vpack.c.b16 %v2759, %v2758
    %v2770 = vpack.c.b16 %v2761, %v2760
    %v2771 = vpack.c.b16 %v2763, %v2762
    %2780 = vmatprep.subr.bf16.mxu0 0
    %2781 = vmatpush1.bf16.msra.mxu0 %v2764
    %2782 = vmatprep.subr.bf16.mxu0 0
    %2783 = vmatpush1.bf16.msra.mxu0 %v2765
    %2784 = vmatprep.subr.bf16.mxu0 0
    %2785 = vmatpush1.bf16.msra.mxu0 %v2766
    %2786 = vmatprep.subr.bf16.mxu0 0
    %2787 = vmatpush1.bf16.msra.mxu0 %v2767
    %2788 = vmatprep.subr.bf16.mxu0 0
    %2789 = vmatpush1.bf16.msra.mxu0 %v2768
    %2790 = vmatprep.subr.bf16.mxu0 0
    %2791 = vmatpush1.bf16.msra.mxu0 %v2769
    %2792 = vmatprep.subr.bf16.mxu0 0
    %2793 = vmatpush1.bf16.msra.mxu0 %v2770
    %2794 = vmatprep.subr.bf16.mxu0 0
    %2795 = vmatpush1.bf16.msra.mxu0 %v2771
    %2796 = vmatprep.subr.bf16.mxu0 0
    %2797 = vmatpush1.bf16.msra.mxu0 0
    %2798 = vmatprep.subr.bf16.mxu0 0
    %2799 = vmatpush1.bf16.msra.mxu0 0
    %2800 = vmatprep.subr.bf16.mxu0 0
    %2801 = vmatpush1.bf16.msra.mxu0 0
    %2802 = vmatprep.subr.bf16.mxu0 0
    %2803 = vmatpush1.bf16.msra.mxu0 0
    %2804 = vmatprep.subr.bf16.mxu0 0
    %2805 = vmatpush1.bf16.msra.mxu0 0
    %2806 = vmatprep.subr.bf16.mxu0 0
    %2807 = vmatpush1.bf16.msra.mxu0 0
    %2808 = vmatprep.subr.bf16.mxu0 0
    %2809 = vmatpush1.bf16.msra.mxu0 0
    %2810 = vmatprep.subr.bf16.mxu0 0
    %2811 = vmatpush1.bf16.msra.mxu0 0
    %2812 = vmatprep.mubr.bf16.mxu0 0
    %2813 = vmatmul.mubr.bf16.gmra.mrb[0].mxu0 %v2713
    %v2814 = vpop.f32.mrb[0].mxu0
    %v2815 = vadd.f32 0.0, %v2814
    %v2816 = vpop.f32.mrb[0].mxu0
    %v2817 = vpop.f32.mrb[0].mxu0
    %v2818 = vadd.f32 0.0, %v2817
    %v2819 = vpop.f32.mrb[0].mxu0
    %2820 = vmatprep.mubr.bf16.mxu0 0
    %2821 = vmatmul.mubr.bf16.gmra.mrb[0].mxu0 %v2714
    %v2822 = vpop.f32.mrb[0].mxu0
    %v2823 = vadd.f32 0.0, %v2822
    %v2824 = vpop.f32.mrb[0].mxu0
    %v2825 = vpop.f32.mrb[0].mxu0
    %v2826 = vpop.f32.mrb[0].mxu0
    %2827 = vdwg.mxu0
    %v2828 = vadd.f32 %v2697, %v2815
    %v2829 = vadd.f32 %v2700, %v2818
    %v2830 = vadd.f32 %v2705, %v2823
    %v2831 = vld [vmem:[%s12] sm:$0x1]
    %v2833 = vlaneseq
    %v2834 = vshrl.u32 %v2833, 7
    %v2835 = vsub.s32 0, %v2834
    %v2836 = vrot.slane %v2831, %v2835
    %v2838 = vadd.f32 %v2828, %v2836
    %v2839 = vadd.f32 %v2829, %v2836
    %v2840 = vadd.f32 %v2830, %v2836
    %v2841 = vadd.f32 %v2838, %v2496
    %v2842 = vadd.f32 %v2839, %v2497
    %v2843 = vadd.f32 %v2840, %v2498
    %v2844 = vmax.f32 %v2841, 0.0
    %v2845 = vmax.f32 %v2842, 0.0
    %v2846 = vmax.f32 %v2843, 0.0
    %2847 = vst [vmem:[#allocation2] sm:$0xff] 0.0
    %2848 = vst [vmem:[#allocation2 + $0x8] sm:$0xff] 0.0
    %2849 = vst [vmem:[#allocation2 + $0x10] sm:$0xf] 0.0
    %2850 = vst [vmem:[#allocation2 + $0x1] sm:$0xff] %v2844
    %2851 = vst [vmem:[#allocation2 + $0x9] sm:$0xfc] %v2845
    %2852 = vst [vmem:[#allocation2 + $0x11] sm:$0x3] %v2846
    %v2853 = vld [vmem:[#allocation2] sm:$0xff]
    %v2854 = vld [vmem:[#allocation2 + $0x8] sm:$0xff]
    %v2855 = vld [vmem:[#allocation2 + $0x10] sm:$0x3]
    %v2856 = vpack.c.bf16 %v2854, %v2853
    %v2857 = vpack.c.bf16 %v2855, %v2855
    %v2858 = vld [vmem:[%s4] sm:$0xf]
    %v2859 = vld [vmem:[%s4 + $0x4] sm:$0xf]
    %v2860 = vld [vmem:[%s4 + $0x8] sm:$0xf]
    %v2861 = vld [vmem:[%s4 + $0xc] sm:$0xf]
    %v2862 = vld [vmem:[%s4 + $0x10] sm:$0xf]
    %v2863 = vld [vmem:[%s4 + $0x14] sm:$0xf]
    %v2864 = vld [vmem:[%s4 + $0x18] sm:$0xf]
    %v2865 = vld [vmem:[%s4 + $0x1c] sm:$0xf]
    %v2866 = vld [vmem:[%s4 + $0x20] sm:$0xf]
    %v2867 = vld [vmem:[%s4 + $0x24] sm:$0xf]
    %v2868 = vld [vmem:[%s4 + $0x28] sm:$0xf]
    %v2869 = vld [vmem:[%s4 + $0x2c] sm:$0xf]
    %v2870 = vld [vmem:[%s4 + $0x30] sm:$0xf]
    %v2871 = vld [vmem:[%s4 + $0x34] sm:$0xf]
    %v2872 = vld [vmem:[%s4 + $0x38] sm:$0xf]
    %v2873 = vld [vmem:[%s4 + $0x3c] sm:$0xf]
    %v2874 = vld [vmem:[#allocation2 + $0x1] sm:$0xff]
    %v2875 = vld [vmem:[#allocation2 + $0x9] sm:$0xff]
    %v2876 = vld [vmem:[#allocation2 + $0x11] sm:$0x3]
    %v2877 = vpack.c.bf16 %v2875, %v2874
    %v2878 = vpack.c.bf16 %v2876, %v2876
    %s2879 = scalar_lea.vmem %s4, 64
    %v2880 = vld [vmem:[%s2879] sm:$0xf]
    %v2881 = vld [vmem:[%s2879 + $0x4] sm:$0xf]
    %v2882 = vld [vmem:[%s2879 + $0x8] sm:$0xf]
    %v2883 = vld [vmem:[%s2879 + $0xc] sm:$0xf]
    %v2884 = vld [vmem:[%s2879 + $0x10] sm:$0xf]
    %v2885 = vld [vmem:[%s2879 + $0x14] sm:$0xf]
    %v2886 = vld [vmem:[%s2879 + $0x18] sm:$0xf]
    %v2887 = vld [vmem:[%s2879 + $0x1c] sm:$0xf]
    %v2888 = vld [vmem:[%s2879 + $0x20] sm:$0xf]
    %v2889 = vld [vmem:[%s2879 + $0x24] sm:$0xf]
    %v2890 = vld [vmem:[%s2879 + $0x28] sm:$0xf]
    %v2891 = vld [vmem:[%s2879 + $0x2c] sm:$0xf]
    %v2892 = vld [vmem:[%s2879 + $0x30] sm:$0xf]
    %v2893 = vld [vmem:[%s2879 + $0x34] sm:$0xf]
    %v2894 = vld [vmem:[%s2879 + $0x38] sm:$0xf]
    %v2895 = vld [vmem:[%s2879 + $0x3c] sm:$0xf]
    %v2912 = vunpack.c.l.b16 %v2880
    %v2913 = vunpack.c.l.b16 %v2881
    %v2914 = vunpack.c.l.b16 %v2882
    %v2915 = vunpack.c.l.b16 %v2883
    %v2916 = vunpack.c.l.b16 %v2884
    %v2917 = vunpack.c.l.b16 %v2885
    %v2918 = vunpack.c.l.b16 %v2886
    %v2919 = vunpack.c.l.b16 %v2887
    %v2920 = vunpack.c.l.b16 %v2888
    %v2921 = vunpack.c.l.b16 %v2889
    %v2922 = vunpack.c.l.b16 %v2890
    %v2923 = vunpack.c.l.b16 %v2891
    %v2924 = vunpack.c.l.b16 %v2892
    %v2925 = vunpack.c.l.b16 %v2893
    %v2926 = vunpack.c.l.b16 %v2894
    %v2927 = vunpack.c.l.b16 %v2895
    %v2928 = vpack.c.b16 %v2913, %v2912
    %v2929 = vpack.c.b16 %v2915, %v2914
    %v2930 = vpack.c.b16 %v2917, %v2916
    %v2931 = vpack.c.b16 %v2919, %v2918
    %v2932 = vpack.c.b16 %v2921, %v2920
    %v2933 = vpack.c.b16 %v2923, %v2922
    %v2934 = vpack.c.b16 %v2925, %v2924
    %v2935 = vpack.c.b16 %v2927, %v2926
    %2944 = vmatprep.subr.bf16.mxu0 0
    %2945 = vmatpush1.bf16.msra.mxu0 %v2928
    %2946 = vmatprep.subr.bf16.mxu0 0
    %2947 = vmatpush1.bf16.msra.mxu0 %v2929
    %2948 = vmatprep.subr.bf16.mxu0 0
    %2949 = vmatpush1.bf16.msra.mxu0 %v2930
    %2950 = vmatprep.subr.bf16.mxu0 0
    %2951 = vmatpush1.bf16.msra.mxu0 %v2931
    %2952 = vmatprep.subr.bf16.mxu0 0
    %2953 = vmatpush1.bf16.msra.mxu0 %v2932
    %2954 = vmatprep.subr.bf16.mxu0 0
    %2955 = vmatpush1.bf16.msra.mxu0 %v2933
    %2956 = vmatprep.subr.bf16.mxu0 0
    %2957 = vmatpush1.bf16.msra.mxu0 %v2934
    %2958 = vmatprep.subr.bf16.mxu0 0
    %2959 = vmatpush1.bf16.msra.mxu0 %v2935
    %2960 = vmatprep.subr.bf16.mxu0 0
    %2961 = vmatpush1.bf16.msra.mxu0 0
    %2962 = vmatprep.subr.bf16.mxu0 0
    %2963 = vmatpush1.bf16.msra.mxu0 0
    %2964 = vmatprep.subr.bf16.mxu0 0
    %2965 = vmatpush1.bf16.msra.mxu0 0
    %2966 = vmatprep.subr.bf16.mxu0 0
    %2967 = vmatpush1.bf16.msra.mxu0 0
    %2968 = vmatprep.subr.bf16.mxu0 0
    %2969 = vmatpush1.bf16.msra.mxu0 0
    %2970 = vmatprep.subr.bf16.mxu0 0
    %2971 = vmatpush1.bf16.msra.mxu0 0
    %2972 = vmatprep.subr.bf16.mxu0 0
    %2973 = vmatpush1.bf16.msra.mxu0 0
    %2974 = vmatprep.subr.bf16.mxu0 0
    %2975 = vmatpush1.bf16.msra.mxu0 0
    %2976 = vmatprep.mubr.bf16.mxu0 0
    %2977 = vmatmul.mubr.bf16.gmra.mrb[0].mxu0 %v2877
    %v2978 = vpop.f32.mrb[0].mxu0
    %v2979 = vadd.f32 0.0, %v2978
    %v2980 = vpop.f32.mrb[0].mxu0
    %v2981 = vpop.f32.mrb[0].mxu0
    %v2982 = vadd.f32 0.0, %v2981
    %v2983 = vpop.f32.mrb[0].mxu0
    %2984 = vmatprep.mubr.bf16.mxu0 0
    %2985 = vmatmul.mubr.bf16.gmra.mrb[0].mxu0 %v2878
    %v2986 = vpop.f32.mrb[0].mxu0
    %v2987 = vadd.f32 0.0, %v2986
    %v2988 = vpop.f32.mrb[0].mxu0
    %v2989 = vpop.f32.mrb[0].mxu0
    %v2990 = vpop.f32.mrb[0].mxu0
    %2991 = vdwg.mxu0
    %v3008 = vunpack.c.l.b16 %v2858
    %v3009 = vunpack.c.l.b16 %v2859
    %v3010 = vunpack.c.l.b16 %v2860
    %v3011 = vunpack.c.l.b16 %v2861
    %v3012 = vunpack.c.l.b16 %v2862
    %v3013 = vunpack.c.l.b16 %v2863
    %v3014 = vunpack.c.l.b16 %v2864
    %v3015 = vunpack.c.l.b16 %v2865
    %v3016 = vunpack.c.l.b16 %v2866
    %v3017 = vunpack.c.l.b16 %v2867
    %v3018 = vunpack.c.l.b16 %v2868
    %v3019 = vunpack.c.l.b16 %v2869
    %v3020 = vunpack.c.l.b16 %v2870
    %v3021 = vunpack.c.l.b16 %v2871
    %v3022 = vunpack.c.l.b16 %v2872
    %v3023 = vunpack.c.l.b16 %v2873
    %v3024 = vpack.c.b16 %v3009, %v3008
    %v3025 = vpack.c.b16 %v3011, %v3010
    %v3026 = vpack.c.b16 %v3013, %v3012
    %v3027 = vpack.c.b16 %v3015, %v3014
    %v3028 = vpack.c.b16 %v3017, %v3016
    %v3029 = vpack.c.b16 %v3019, %v3018
    %v3030 = vpack.c.b16 %v3021, %v3020
    %v3031 = vpack.c.b16 %v3023, %v3022
    %3040 = vmatprep.subr.bf16.mxu0 0
    %3041 = vmatpush1.bf16.msra.mxu0 %v3024
    %3042 = vmatprep.subr.bf16.mxu0 0
    %3043 = vmatpush1.bf16.msra.mxu0 %v3025
    %3044 = vmatprep.subr.bf16.mxu0 0
    %3045 = vmatpush1.bf16.msra.mxu0 %v3026
    %3046 = vmatprep.subr.bf16.mxu0 0
    %3047 = vmatpush1.bf16.msra.mxu0 %v3027
    %3048 = vmatprep.subr.bf16.mxu0 0
    %3049 = vmatpush1.bf16.msra.mxu0 %v3028
    %3050 = vmatprep.subr.bf16.mxu0 0
    %3051 = vmatpush1.bf16.msra.mxu0 %v3029
    %3052 = vmatprep.subr.bf16.mxu0 0
    %3053 = vmatpush1.bf16.msra.mxu0 %v3030
    %3054 = vmatprep.subr.bf16.mxu0 0
    %3055 = vmatpush1.bf16.msra.mxu0 %v3031
    %3056 = vmatprep.subr.bf16.mxu0 0
    %3057 = vmatpush1.bf16.msra.mxu0 0
    %3058 = vmatprep.subr.bf16.mxu0 0
    %3059 = vmatpush1.bf16.msra.mxu0 0
    %3060 = vmatprep.subr.bf16.mxu0 0
    %3061 = vmatpush1.bf16.msra.mxu0 0
    %3062 = vmatprep.subr.bf16.mxu0 0
    %3063 = vmatpush1.bf16.msra.mxu0 0
    %3064 = vmatprep.subr.bf16.mxu0 0
    %3065 = vmatpush1.bf16.msra.mxu0 0
    %3066 = vmatprep.subr.bf16.mxu0 0
    %3067 = vmatpush1.bf16.msra.mxu0 0
    %3068 = vmatprep.subr.bf16.mxu0 0
    %3069 = vmatpush1.bf16.msra.mxu0 0
    %3070 = vmatprep.subr.bf16.mxu0 0
    %3071 = vmatpush1.bf16.msra.mxu0 0
    %3072 = vmatprep.mubr.bf16.mxu0 0
    %3073 = vmatmul.mubr.bf16.gmra.mrb[0].mxu0 %v2856
    %v3074 = vpop.f32.mrb[0].mxu0
    %v3075 = vadd.f32 %v2979, %v3074
    %v3076 = vpop.f32.mrb[0].mxu0
    %v3077 = vpop.f32.mrb[0].mxu0
    %v3078 = vadd.f32 %v2982, %v3077
    %v3079 = vpop.f32.mrb[0].mxu0
    %3080 = vmatprep.mubr.bf16.mxu0 0
    %3081 = vmatmul.mubr.bf16.gmra.mrb[0].mxu0 %v2857
    %v3082 = vpop.f32.mrb[0].mxu0
    %v3083 = vadd.f32 %v2987, %v3082
    %v3084 = vpop.f32.mrb[0].mxu0
    %v3085 = vpop.f32.mrb[0].mxu0
    %v3086 = vpop.f32.mrb[0].mxu0
    %3087 = vdwg.mxu0
    %v3088 = vld [vmem:[#allocation2 + $0x2] sm:$0xff]
    %v3089 = vld [vmem:[#allocation2 + $0xa] sm:$0xff]
    %v3090 = vld [vmem:[#allocation2 + $0x12] sm:$0x3]
    %v3091 = vpack.c.bf16 %v3089, %v3088
    %v3092 = vpack.c.bf16 %v3090, %v3090
    %s3093 = scalar_lea.vmem %s4, 128
    %v3094 = vld [vmem:[%s3093] sm:$0xf]
    %v3095 = vld [vmem:[%s3093 + $0x4] sm:$0xf]
    %v3096 = vld [vmem:[%s3093 + $0x8] sm:$0xf]
    %v3097 = vld [vmem:[%s3093 + $0xc] sm:$0xf]
    %v3098 = vld [vmem:[%s3093 + $0x10] sm:$0xf]
    %v3099 = vld [vmem:[%s3093 + $0x14] sm:$0xf]
    %v3100 = vld [vmem:[%s3093 + $0x18] sm:$0xf]
    %v3101 = vld [vmem:[%s3093 + $0x1c] sm:$0xf]
    %v3102 = vld [vmem:[%s3093 + $0x20] sm:$0xf]
    %v3103 = vld [vmem:[%s3093 + $0x24] sm:$0xf]
    %v3104 = vld [vmem:[%s3093 + $0x28] sm:$0xf]
    %v3105 = vld [vmem:[%s3093 + $0x2c] sm:$0xf]
    %v3106 = vld [vmem:[%s3093 + $0x30] sm:$0xf]
    %v3107 = vld [vmem:[%s3093 + $0x34] sm:$0xf]
    %v3108 = vld [vmem:[%s3093 + $0x38] sm:$0xf]
    %v3109 = vld [vmem:[%s3093 + $0x3c] sm:$0xf]
    %v3126 = vunpack.c.l.b16 %v3094
    %v3127 = vunpack.c.l.b16 %v3095
    %v3128 = vunpack.c.l.b16 %v3096
    %v3129 = vunpack.c.l.b16 %v3097
    %v3130 = vunpack.c.l.b16 %v3098
    %v3131 = vunpack.c.l.b16 %v3099
    %v3132 = vunpack.c.l.b16 %v3100
    %v3133 = vunpack.c.l.b16 %v3101
    %v3134 = vunpack.c.l.b16 %v3102
    %v3135 = vunpack.c.l.b16 %v3103
    %v3136 = vunpack.c.l.b16 %v3104
    %v3137 = vunpack.c.l.b16 %v3105
    %v3138 = vunpack.c.l.b16 %v3106
    %v3139 = vunpack.c.l.b16 %v3107
    %v3140 = vunpack.c.l.b16 %v3108
    %v3141 = vunpack.c.l.b16 %v3109
    %v3142 = vpack.c.b16 %v3127, %v3126
    %v3143 = vpack.c.b16 %v3129, %v3128
    %v3144 = vpack.c.b16 %v3131, %v3130
    %v3145 = vpack.c.b16 %v3133, %v3132
    %v3146 = vpack.c.b16 %v3135, %v3134
    %v3147 = vpack.c.b16 %v3137, %v3136
    %v3148 = vpack.c.b16 %v3139, %v3138
    %v3149 = vpack.c.b16 %v3141, %v3140
    %3158 = vmatprep.subr.bf16.mxu0 0
    %3159 = vmatpush1.bf16.msra.mxu0 %v3142
    %3160 = vmatprep.subr.bf16.mxu0 0
    %3161 = vmatpush1.bf16.msra.mxu0 %v3143
    %3162 = vmatprep.subr.bf16.mxu0 0
    %3163 = vmatpush1.bf16.msra.mxu0 %v3144
    %3164 = vmatprep.subr.bf16.mxu0 0
    %3165 = vmatpush1.bf16.msra.mxu0 %v3145
    %3166 = vmatprep.subr.bf16.mxu0 0
    %3167 = vmatpush1.bf16.msra.mxu0 %v3146
    %3168 = vmatprep.subr.bf16.mxu0 0
    %3169 = vmatpush1.bf16.msra.mxu0 %v3147
    %3170 = vmatprep.subr.bf16.mxu0 0
    %3171 = vmatpush1.bf16.msra.mxu0 %v3148
    %3172 = vmatprep.subr.bf16.mxu0 0
    %3173 = vmatpush1.bf16.msra.mxu0 %v3149
    %3174 = vmatprep.subr.bf16.mxu0 0
    %3175 = vmatpush1.bf16.msra.mxu0 0
    %3176 = vmatprep.subr.bf16.mxu0 0
    %3177 = vmatpush1.bf16.msra.mxu0 0
    %3178 = vmatprep.subr.bf16.mxu0 0
    %3179 = vmatpush1.bf16.msra.mxu0 0
    %3180 = vmatprep.subr.bf16.mxu0 0
    %3181 = vmatpush1.bf16.msra.mxu0 0
    %3182 = vmatprep.subr.bf16.mxu0 0
    %3183 = vmatpush1.bf16.msra.mxu0 0
    %3184 = vmatprep.subr.bf16.mxu0 0
    %3185 = vmatpush1.bf16.msra.mxu0 0
    %3186 = vmatprep.subr.bf16.mxu0 0
    %3187 = vmatpush1.bf16.msra.mxu0 0
    %3188 = vmatprep.subr.bf16.mxu0 0
    %3189 = vmatpush1.bf16.msra.mxu0 0
    %3190 = vmatprep.mubr.bf16.mxu0 0
    %3191 = vmatmul.mubr.bf16.gmra.mrb[0].mxu0 %v3091
    %v3192 = vpop.f32.mrb[0].mxu0
    %v3193 = vadd.f32 0.0, %v3192
    %v3194 = vpop.f32.mrb[0].mxu0
    %v3195 = vpop.f32.mrb[0].mxu0
    %v3196 = vadd.f32 0.0, %v3195
    %v3197 = vpop.f32.mrb[0].mxu0
    %3198 = vmatprep.mubr.bf16.mxu0 0
    %3199 = vmatmul.mubr.bf16.gmra.mrb[0].mxu0 %v3092
    %v3200 = vpop.f32.mrb[0].mxu0
    %v3201 = vadd.f32 0.0, %v3200
    %v3202 = vpop.f32.mrb[0].mxu0
    %v3203 = vpop.f32.mrb[0].mxu0
    %v3204 = vpop.f32.mrb[0].mxu0
    %3205 = vdwg.mxu0
    %v3206 = vadd.f32 %v3075, %v3193
    %v3207 = vadd.f32 %v3078, %v3196
    %v3208 = vadd.f32 %v3083, %v3201
    %v3209 = vld [vmem:[%s13] sm:$0x1]
    %v3211 = vlaneseq
    %v3212 = vshrl.u32 %v3211, 7
    %v3213 = vsub.s32 0, %v3212
    %v3214 = vrot.slane %v3209, %v3213
    %v3216 = vadd.f32 %v3206, %v3214
    %v3217 = vadd.f32 %v3207, %v3214
    %v3218 = vadd.f32 %v3208, %v3214
    %v3219 = vadd.f32 %v3216, %v2874
    %v3220 = vadd.f32 %v3217, %v2875
    %v3221 = vadd.f32 %v3218, %v2876
    %v3222 = vmax.f32 %v3219, 0.0
    %v3223 = vmax.f32 %v3220, 0.0
    %v3224 = vmax.f32 %v3221, 0.0
    %3225 = vst [vmem:[#allocation3] sm:$0xff] 0.0
    %3226 = vst [vmem:[#allocation3 + $0x8] sm:$0xff] 0.0
    %3227 = vst [vmem:[#allocation3 + $0x10] sm:$0xf] 0.0
    %3228 = vst [vmem:[#allocation3 + $0x1] sm:$0xff] %v3222
    %3229 = vst [vmem:[#allocation3 + $0x9] sm:$0xfc] %v3223
    %3230 = vst [vmem:[#allocation3 + $0x11] sm:$0x3] %v3224
    %v3231 = vld [vmem:[#allocation3] ss:$2 sm:$0xff]
    %s3232 = scalar_lea.vmem [#allocation3], 16
    %v3233 = vld [vmem:[%s3232] ss:$2 sm:$0x1]
    %v3234 = vpack.c.bf16 %v3233, %v3231
    %v3235 = vld [vmem:[%s5] sm:$0xf]
    %v3236 = vld [vmem:[%s5 + $0x4] sm:$0xf]
    %v3237 = vld [vmem:[%s5 + $0x8] sm:$0xf]
    %v3238 = vld [vmem:[%s5 + $0xc] sm:$0xf]
    %v3239 = vld [vmem:[%s5 + $0x10] sm:$0xf]
    %v3240 = vld [vmem:[%s5 + $0x14] sm:$0xf]
    %v3241 = vld [vmem:[%s5 + $0x18] sm:$0xf]
    %v3242 = vld [vmem:[%s5 + $0x1c] sm:$0xf]
    %v3243 = vld [vmem:[%s5 + $0x20] sm:$0xf]
    %v3244 = vld [vmem:[%s5 + $0x24] sm:$0xf]
    %v3245 = vld [vmem:[%s5 + $0x28] sm:$0xf]
    %v3246 = vld [vmem:[%s5 + $0x2c] sm:$0xf]
    %v3247 = vld [vmem:[%s5 + $0x30] sm:$0xf]
    %v3248 = vld [vmem:[%s5 + $0x34] sm:$0xf]
    %v3249 = vld [vmem:[%s5 + $0x38] sm:$0xf]
    %v3250 = vld [vmem:[%s5 + $0x3c] sm:$0xf]
    %s3251 = scalar_lea.vmem [#allocation3], 1
    %v3252 = vld [vmem:[%s3251] ss:$2 sm:$0xff]
    %s3253 = scalar_lea.vmem [#allocation3], 17
    %v3254 = vld [vmem:[%s3253] ss:$2 sm:$0x1]
    %v3255 = vpack.c.bf16 %v3254, %v3252
    %s3256 = scalar_lea.vmem %s5, 64
    %v3257 = vld [vmem:[%s3256] sm:$0xf]
    %v3258 = vld [vmem:[%s3256 + $0x4] sm:$0xf]
    %v3259 = vld [vmem:[%s3256 + $0x8] sm:$0xf]
    %v3260 = vld [vmem:[%s3256 + $0xc] sm:$0xf]
    %v3261 = vld [vmem:[%s3256 + $0x10] sm:$0xf]
    %v3262 = vld [vmem:[%s3256 + $0x14] sm:$0xf]
    %v3263 = vld [vmem:[%s3256 + $0x18] sm:$0xf]
    %v3264 = vld [vmem:[%s3256 + $0x1c] sm:$0xf]
    %v3265 = vld [vmem:[%s3256 + $0x20] sm:$0xf]
    %v3266 = vld [vmem:[%s3256 + $0x24] sm:$0xf]
    %v3267 = vld [vmem:[%s3256 + $0x28] sm:$0xf]
    %v3268 = vld [vmem:[%s3256 + $0x2c] sm:$0xf]
    %v3269 = vld [vmem:[%s3256 + $0x30] sm:$0xf]
    %v3270 = vld [vmem:[%s3256 + $0x34] sm:$0xf]
    %v3271 = vld [vmem:[%s3256 + $0x38] sm:$0xf]
    %v3272 = vld [vmem:[%s3256 + $0x3c] sm:$0xf]
    %v3289 = vunpack.c.l.b16 %v3257
    %v3290 = vunpack.c.l.b16 %v3258
    %v3291 = vunpack.c.l.b16 %v3259
    %v3292 = vunpack.c.l.b16 %v3260
    %v3293 = vunpack.c.l.b16 %v3261
    %v3294 = vunpack.c.l.b16 %v3262
    %v3295 = vunpack.c.l.b16 %v3263
    %v3296 = vunpack.c.l.b16 %v3264
    %v3297 = vunpack.c.l.b16 %v3265
    %v3298 = vunpack.c.l.b16 %v3266
    %v3299 = vunpack.c.l.b16 %v3267
    %v3300 = vunpack.c.l.b16 %v3268
    %v3301 = vunpack.c.l.b16 %v3269
    %v3302 = vunpack.c.l.b16 %v3270
    %v3303 = vunpack.c.l.b16 %v3271
    %v3304 = vunpack.c.l.b16 %v3272
    %v3305 = vpack.c.b16 %v3290, %v3289
    %v3306 = vpack.c.b16 %v3292, %v3291
    %v3307 = vpack.c.b16 %v3294, %v3293
    %v3308 = vpack.c.b16 %v3296, %v3295
    %v3309 = vpack.c.b16 %v3298, %v3297
    %v3310 = vpack.c.b16 %v3300, %v3299
    %v3311 = vpack.c.b16 %v3302, %v3301
    %v3312 = vpack.c.b16 %v3304, %v3303
    %3321 = vmatprep.subr.bf16.mxu0 0
    %3322 = vmatpush1.bf16.msra.mxu0 %v3305
    %3323 = vmatprep.subr.bf16.mxu0 0
    %3324 = vmatpush1.bf16.msra.mxu0 %v3306
    %3325 = vmatprep.subr.bf16.mxu0 0
    %3326 = vmatpush1.bf16.msra.mxu0 %v3307
    %3327 = vmatprep.subr.bf16.mxu0 0
    %3328 = vmatpush1.bf16.msra.mxu0 %v3308
    %3329 = vmatprep.subr.bf16.mxu0 0
    %3330 = vmatpush1.bf16.msra.mxu0 %v3309
    %3331 = vmatprep.subr.bf16.mxu0 0
    %3332 = vmatpush1.bf16.msra.mxu0 %v3310
    %3333 = vmatprep.subr.bf16.mxu0 0
    %3334 = vmatpush1.bf16.msra.mxu0 %v3311
    %3335 = vmatprep.subr.bf16.mxu0 0
    %3336 = vmatpush1.bf16.msra.mxu0 %v3312
    %3337 = vmatprep.subr.bf16.mxu0 0
    %3338 = vmatpush1.bf16.msra.mxu0 0
    %3339 = vmatprep.subr.bf16.mxu0 0
    %3340 = vmatpush1.bf16.msra.mxu0 0
    %3341 = vmatprep.subr.bf16.mxu0 0
    %3342 = vmatpush1.bf16.msra.mxu0 0
    %3343 = vmatprep.subr.bf16.mxu0 0
    %3344 = vmatpush1.bf16.msra.mxu0 0
    %3345 = vmatprep.subr.bf16.mxu0 0
    %3346 = vmatpush1.bf16.msra.mxu0 0
    %3347 = vmatprep.subr.bf16.mxu0 0
    %3348 = vmatpush1.bf16.msra.mxu0 0
    %3349 = vmatprep.subr.bf16.mxu0 0
    %3350 = vmatpush1.bf16.msra.mxu0 0
    %3351 = vmatprep.subr.bf16.mxu0 0
    %3352 = vmatpush1.bf16.msra.mxu0 0
    %3353 = vmatprep.mubr.bf16.mxu0 0
    %3354 = vmatmul.mubr.bf16.gmra.mrb[0].mxu0 %v3255
    %v3355 = vpop.f32.mrb[0].mxu0
    %v3356 = vadd.f32 0.0, %v3355
    %v3357 = vpop.f32.mrb[0].mxu0
    %v3358 = vpop.f32.mrb[0].mxu0
    %v3359 = vadd.f32 0.0, %v3358
    %v3360 = vpop.f32.mrb[0].mxu0
    %3361 = vdwg.mxu0
    %v3378 = vunpack.c.l.b16 %v3235
    %v3379 = vunpack.c.l.b16 %v3236
    %v3380 = vunpack.c.l.b16 %v3237
    %v3381 = vunpack.c.l.b16 %v3238
    %v3382 = vunpack.c.l.b16 %v3239
    %v3383 = vunpack.c.l.b16 %v3240
    %v3384 = vunpack.c.l.b16 %v3241
    %v3385 = vunpack.c.l.b16 %v3242
    %v3386 = vunpack.c.l.b16 %v3243
    %v3387 = vunpack.c.l.b16 %v3244
    %v3388 = vunpack.c.l.b16 %v3245
    %v3389 = vunpack.c.l.b16 %v3246
    %v3390 = vunpack.c.l.b16 %v3247
    %v3391 = vunpack.c.l.b16 %v3248
    %v3392 = vunpack.c.l.b16 %v3249
    %v3393 = vunpack.c.l.b16 %v3250
    %v3394 = vpack.c.b16 %v3379, %v3378
    %v3395 = vpack.c.b16 %v3381, %v3380
    %v3396 = vpack.c.b16 %v3383, %v3382
    %v3397 = vpack.c.b16 %v3385, %v3384
    %v3398 = vpack.c.b16 %v3387, %v3386
    %v3399 = vpack.c.b16 %v3389, %v3388
    %v3400 = vpack.c.b16 %v3391, %v3390
    %v3401 = vpack.c.b16 %v3393, %v3392
    %3410 = vmatprep.subr.bf16.mxu0 0
    %3411 = vmatpush1.bf16.msra.mxu0 %v3394
    %3412 = vmatprep.subr.bf16.mxu0 0
    %3413 = vmatpush1.bf16.msra.mxu0 %v3395
    %3414 = vmatprep.subr.bf16.mxu0 0
    %3415 = vmatpush1.bf16.msra.mxu0 %v3396
    %3416 = vmatprep.subr.bf16.mxu0 0
    %3417 = vmatpush1.bf16.msra.mxu0 %v3397
    %3418 = vmatprep.subr.bf16.mxu0 0
    %3419 = vmatpush1.bf16.msra.mxu0 %v3398
    %3420 = vmatprep.subr.bf16.mxu0 0
    %3421 = vmatpush1.bf16.msra.mxu0 %v3399
    %3422 = vmatprep.subr.bf16.mxu0 0
    %3423 = vmatpush1.bf16.msra.mxu0 %v3400
    %3424 = vmatprep.subr.bf16.mxu0 0
    %3425 = vmatpush1.bf16.msra.mxu0 %v3401
    %3426 = vmatprep.subr.bf16.mxu0 0
    %3427 = vmatpush1.bf16.msra.mxu0 0
    %3428 = vmatprep.subr.bf16.mxu0 0
    %3429 = vmatpush1.bf16.msra.mxu0 0
    %3430 = vmatprep.subr.bf16.mxu0 0
    %3431 = vmatpush1.bf16.msra.mxu0 0
    %3432 = vmatprep.subr.bf16.mxu0 0
    %3433 = vmatpush1.bf16.msra.mxu0 0
    %3434 = vmatprep.subr.bf16.mxu0 0
    %3435 = vmatpush1.bf16.msra.mxu0 0
    %3436 = vmatprep.subr.bf16.mxu0 0
    %3437 = vmatpush1.bf16.msra.mxu0 0
    %3438 = vmatprep.subr.bf16.mxu0 0
    %3439 = vmatpush1.bf16.msra.mxu0 0
    %3440 = vmatprep.subr.bf16.mxu0 0
    %3441 = vmatpush1.bf16.msra.mxu0 0
    %3442 = vmatprep.mubr.bf16.mxu0 0
    %3443 = vmatmul.mubr.bf16.gmra.mrb[0].mxu0 %v3234
    %v3444 = vpop.f32.mrb[0].mxu0
    %v3445 = vadd.f32 %v3356, %v3444
    %v3446 = vpop.f32.mrb[0].mxu0
    %v3447 = vpop.f32.mrb[0].mxu0
    %v3448 = vadd.f32 %v3359, %v3447
    %v3449 = vpop.f32.mrb[0].mxu0
    %3450 = vdwg.mxu0
    %s3451 = scalar_lea.vmem [#allocation3], 2
    %v3452 = vld [vmem:[%s3451] ss:$2 sm:$0xff]
    %s3453 = scalar_lea.vmem [#allocation3], 18
    %v3454 = vld [vmem:[%s3453] ss:$2 sm:$0x1]
    %v3455 = vpack.c.bf16 %v3454, %v3452
    %s3456 = scalar_lea.vmem %s5, 128
    %v3457 = vld [vmem:[%s3456] sm:$0xf]
    %v3458 = vld [vmem:[%s3456 + $0x4] sm:$0xf]
    %v3459 = vld [vmem:[%s3456 + $0x8] sm:$0xf]
    %v3460 = vld [vmem:[%s3456 + $0xc] sm:$0xf]
    %v3461 = vld [vmem:[%s3456 + $0x10] sm:$0xf]
    %v3462 = vld [vmem:[%s3456 + $0x14] sm:$0xf]
    %v3463 = vld [vmem:[%s3456 + $0x18] sm:$0xf]
    %v3464 = vld [vmem:[%s3456 + $0x1c] sm:$0xf]
    %v3465 = vld [vmem:[%s3456 + $0x20] sm:$0xf]
    %v3466 = vld [vmem:[%s3456 + $0x24] sm:$0xf]
    %v3467 = vld [vmem:[%s3456 + $0x28] sm:$0xf]
    %v3468 = vld [vmem:[%s3456 + $0x2c] sm:$0xf]
    %v3469 = vld [vmem:[%s3456 + $0x30] sm:$0xf]
    %v3470 = vld [vmem:[%s3456 + $0x34] sm:$0xf]
    %v3471 = vld [vmem:[%s3456 + $0x38] sm:$0xf]
    %v3472 = vld [vmem:[%s3456 + $0x3c] sm:$0xf]
    %v3489 = vunpack.c.l.b16 %v3457
    %v3490 = vunpack.c.l.b16 %v3458
    %v3491 = vunpack.c.l.b16 %v3459
    %v3492 = vunpack.c.l.b16 %v3460
    %v3493 = vunpack.c.l.b16 %v3461
    %v3494 = vunpack.c.l.b16 %v3462
    %v3495 = vunpack.c.l.b16 %v3463
    %v3496 = vunpack.c.l.b16 %v3464
    %v3497 = vunpack.c.l.b16 %v3465
    %v3498 = vunpack.c.l.b16 %v3466
    %v3499 = vunpack.c.l.b16 %v3467
    %v3500 = vunpack.c.l.b16 %v3468
    %v3501 = vunpack.c.l.b16 %v3469
    %v3502 = vunpack.c.l.b16 %v3470
    %v3503 = vunpack.c.l.b16 %v3471
    %v3504 = vunpack.c.l.b16 %v3472
    %v3505 = vpack.c.b16 %v3490, %v3489
    %v3506 = vpack.c.b16 %v3492, %v3491
    %v3507 = vpack.c.b16 %v3494, %v3493
    %v3508 = vpack.c.b16 %v3496, %v3495
    %v3509 = vpack.c.b16 %v3498, %v3497
    %v3510 = vpack.c.b16 %v3500, %v3499
    %v3511 = vpack.c.b16 %v3502, %v3501
    %v3512 = vpack.c.b16 %v3504, %v3503
    %3521 = vmatprep.subr.bf16.mxu0 0
    %3522 = vmatpush1.bf16.msra.mxu0 %v3505
    %3523 = vmatprep.subr.bf16.mxu0 0
    %3524 = vmatpush1.bf16.msra.mxu0 %v3506
    %3525 = vmatprep.subr.bf16.mxu0 0
    %3526 = vmatpush1.bf16.msra.mxu0 %v3507
    %3527 = vmatprep.subr.bf16.mxu0 0
    %3528 = vmatpush1.bf16.msra.mxu0 %v3508
    %3529 = vmatprep.subr.bf16.mxu0 0
    %3530 = vmatpush1.bf16.msra.mxu0 %v3509
    %3531 = vmatprep.subr.bf16.mxu0 0
    %3532 = vmatpush1.bf16.msra.mxu0 %v3510
    %3533 = vmatprep.subr.bf16.mxu0 0
    %3534 = vmatpush1.bf16.msra.mxu0 %v3511
    %3535 = vmatprep.subr.bf16.mxu0 0
    %3536 = vmatpush1.bf16.msra.mxu0 %v3512
    %3537 = vmatprep.subr.bf16.mxu0 0
    %3538 = vmatpush1.bf16.msra.mxu0 0
    %3539 = vmatprep.subr.bf16.mxu0 0
    %3540 = vmatpush1.bf16.msra.mxu0 0
    %3541 = vmatprep.subr.bf16.mxu0 0
    %3542 = vmatpush1.bf16.msra.mxu0 0
    %3543 = vmatprep.subr.bf16.mxu0 0
    %3544 = vmatpush1.bf16.msra.mxu0 0
    %3545 = vmatprep.subr.bf16.mxu0 0
    %3546 = vmatpush1.bf16.msra.mxu0 0
    %3547 = vmatprep.subr.bf16.mxu0 0
    %3548 = vmatpush1.bf16.msra.mxu0 0
    %3549 = vmatprep.subr.bf16.mxu0 0
    %3550 = vmatpush1.bf16.msra.mxu0 0
    %3551 = vmatprep.subr.bf16.mxu0 0
    %3552 = vmatpush1.bf16.msra.mxu0 0
    %3553 = vmatprep.mubr.bf16.mxu0 0
    %3554 = vmatmul.mubr.bf16.gmra.mrb[0].mxu0 %v3455
    %v3555 = vpop.f32.mrb[0].mxu0
    %v3556 = vadd.f32 0.0, %v3555
    %v3557 = vpop.f32.mrb[0].mxu0
    %v3558 = vpop.f32.mrb[0].mxu0
    %v3559 = vadd.f32 0.0, %v3558
    %v3560 = vpop.f32.mrb[0].mxu0
    %3561 = vdwg.mxu0
    %v3562 = vadd.f32 %v3445, %v3556
    %v3563 = vadd.f32 %v3448, %v3559
    %v3564 = vld [vmem:[%s14] sm:$0x1]
    %v3566 = vlaneseq
    %v3567 = vshrl.u32 %v3566, 7
    %v3568 = vsub.s32 0, %v3567
    %v3569 = vrot.slane %v3564, %v3568
    %v3571 = vadd.f32 %v3562, %v3569
    %v3572 = vadd.f32 %v3563, %v3569
    %v3573 = vmax.f32 %v3571, 0.0
    %v3574 = vmax.f32 %v3572, 0.0
    %3575 = vst [vmem:[#allocation2] sm:$0xff] 0.0
    %3576 = vst [vmem:[#allocation2 + $0x8] sm:$0xf] 0.0
    %3577 = vst [vmem:[#allocation2 + $0x1] sm:$0xf] %v3573
    %3578 = vst [vmem:[#allocation2 + $0x2] sm:$0xe0] %v3573
    %3579 = vst [vmem:[#allocation2 + $0xa] sm:$0x1] %v3574
    %v3580 = vld [vmem:[#allocation2] sm:$0xff]
    %v3581 = vld [vmem:[#allocation2 + $0x8] sm:$0x3]
    %v3582 = vpack.c.bf16 %v3581, %v3580
    %v3583 = vld [vmem:[%s6] sm:$0xf]
    %v3584 = vld [vmem:[%s6 + $0x4] sm:$0xf]
    %v3585 = vld [vmem:[%s6 + $0x8] sm:$0xf]
    %v3586 = vld [vmem:[%s6 + $0xc] sm:$0xf]
    %v3587 = vld [vmem:[%s6 + $0x10] sm:$0xf]
    %v3588 = vld [vmem:[%s6 + $0x14] sm:$0xf]
    %v3589 = vld [vmem:[%s6 + $0x18] sm:$0xf]
    %v3590 = vld [vmem:[%s6 + $0x1c] sm:$0xf]
    %v3591 = vld [vmem:[%s6 + $0x20] sm:$0xf]
    %v3592 = vld [vmem:[%s6 + $0x24] sm:$0xf]
    %v3593 = vld [vmem:[%s6 + $0x28] sm:$0xf]
    %v3594 = vld [vmem:[%s6 + $0x2c] sm:$0xf]
    %v3595 = vld [vmem:[%s6 + $0x30] sm:$0xf]
    %v3596 = vld [vmem:[%s6 + $0x34] sm:$0xf]
    %v3597 = vld [vmem:[%s6 + $0x38] sm:$0xf]
    %v3598 = vld [vmem:[%s6 + $0x3c] sm:$0xf]
    %v3599 = vld [vmem:[#allocation2 + $0x1] sm:$0xff]
    %v3600 = vld [vmem:[#allocation2 + $0x9] sm:$0x3]
    %v3601 = vpack.c.bf16 %v3600, %v3599
    %s3602 = scalar_lea.vmem %s6, 64
    %v3603 = vld [vmem:[%s3602] sm:$0xf]
    %v3604 = vld [vmem:[%s3602 + $0x4] sm:$0xf]
    %v3605 = vld [vmem:[%s3602 + $0x8] sm:$0xf]
    %v3606 = vld [vmem:[%s3602 + $0xc] sm:$0xf]
    %v3607 = vld [vmem:[%s3602 + $0x10] sm:$0xf]
    %v3608 = vld [vmem:[%s3602 + $0x14] sm:$0xf]
    %v3609 = vld [vmem:[%s3602 + $0x18] sm:$0xf]
    %v3610 = vld [vmem:[%s3602 + $0x1c] sm:$0xf]
    %v3611 = vld [vmem:[%s3602 + $0x20] sm:$0xf]
    %v3612 = vld [vmem:[%s3602 + $0x24] sm:$0xf]
    %v3613 = vld [vmem:[%s3602 + $0x28] sm:$0xf]
    %v3614 = vld [vmem:[%s3602 + $0x2c] sm:$0xf]
    %v3615 = vld [vmem:[%s3602 + $0x30] sm:$0xf]
    %v3616 = vld [vmem:[%s3602 + $0x34] sm:$0xf]
    %v3617 = vld [vmem:[%s3602 + $0x38] sm:$0xf]
    %v3618 = vld [vmem:[%s3602 + $0x3c] sm:$0xf]
    %v3635 = vunpack.c.l.b16 %v3603
    %v3636 = vunpack.c.l.b16 %v3604
    %v3637 = vunpack.c.l.b16 %v3605
    %v3638 = vunpack.c.l.b16 %v3606
    %v3639 = vunpack.c.l.b16 %v3607
    %v3640 = vunpack.c.l.b16 %v3608
    %v3641 = vunpack.c.l.b16 %v3609
    %v3642 = vunpack.c.l.b16 %v3610
    %v3643 = vunpack.c.l.b16 %v3611
    %v3644 = vunpack.c.l.b16 %v3612
    %v3645 = vunpack.c.l.b16 %v3613
    %v3646 = vunpack.c.l.b16 %v3614
    %v3647 = vunpack.c.l.b16 %v3615
    %v3648 = vunpack.c.l.b16 %v3616
    %v3649 = vunpack.c.l.b16 %v3617
    %v3650 = vunpack.c.l.b16 %v3618
    %v3651 = vpack.c.b16 %v3636, %v3635
    %v3652 = vpack.c.b16 %v3638, %v3637
    %v3653 = vpack.c.b16 %v3640, %v3639
    %v3654 = vpack.c.b16 %v3642, %v3641
    %v3655 = vpack.c.b16 %v3644, %v3643
    %v3656 = vpack.c.b16 %v3646, %v3645
    %v3657 = vpack.c.b16 %v3648, %v3647
    %v3658 = vpack.c.b16 %v3650, %v3649
    %3667 = vmatprep.subr.bf16.mxu0 0
    %3668 = vmatpush1.bf16.msra.mxu0 %v3651
    %3669 = vmatprep.subr.bf16.mxu0 0
    %3670 = vmatpush1.bf16.msra.mxu0 %v3652
    %3671 = vmatprep.subr.bf16.mxu0 0
    %3672 = vmatpush1.bf16.msra.mxu0 %v3653
    %3673 = vmatprep.subr.bf16.mxu0 0
    %3674 = vmatpush1.bf16.msra.mxu0 %v3654
    %3675 = vmatprep.subr.bf16.mxu0 0
    %3676 = vmatpush1.bf16.msra.mxu0 %v3655
    %3677 = vmatprep.subr.bf16.mxu0 0
    %3678 = vmatpush1.bf16.msra.mxu0 %v3656
    %3679 = vmatprep.subr.bf16.mxu0 0
    %3680 = vmatpush1.bf16.msra.mxu0 %v3657
    %3681 = vmatprep.subr.bf16.mxu0 0
    %3682 = vmatpush1.bf16.msra.mxu0 %v3658
    %3683 = vmatprep.subr.bf16.mxu0 0
    %3684 = vmatpush1.bf16.msra.mxu0 0
    %3685 = vmatprep.subr.bf16.mxu0 0
    %3686 = vmatpush1.bf16.msra.mxu0 0
    %3687 = vmatprep.subr.bf16.mxu0 0
    %3688 = vmatpush1.bf16.msra.mxu0 0
    %3689 = vmatprep.subr.bf16.mxu0 0
    %3690 = vmatpush1.bf16.msra.mxu0 0
    %3691 = vmatprep.subr.bf16.mxu0 0
    %3692 = vmatpush1.bf16.msra.mxu0 0
    %3693 = vmatprep.subr.bf16.mxu0 0
    %3694 = vmatpush1.bf16.msra.mxu0 0
    %3695 = vmatprep.subr.bf16.mxu0 0
    %3696 = vmatpush1.bf16.msra.mxu0 0
    %3697 = vmatprep.subr.bf16.mxu0 0
    %3698 = vmatpush1.bf16.msra.mxu0 0
    %3699 = vmatprep.mubr.bf16.mxu0 0
    %3700 = vmatmul.mubr.bf16.gmra.mrb[0].mxu0 %v3601
    %v3701 = vpop.f32.mrb[0].mxu0
    %v3702 = vadd.f32 0.0, %v3701
    %v3703 = vpop.f32.mrb[0].mxu0
    %v3704 = vpop.f32.mrb[0].mxu0
    %v3705 = vadd.f32 0.0, %v3704
    %v3706 = vpop.f32.mrb[0].mxu0
    %3707 = vdwg.mxu0
    %v3724 = vunpack.c.l.b16 %v3583
    %v3725 = vunpack.c.l.b16 %v3584
    %v3726 = vunpack.c.l.b16 %v3585
    %v3727 = vunpack.c.l.b16 %v3586
    %v3728 = vunpack.c.l.b16 %v3587
    %v3729 = vunpack.c.l.b16 %v3588
    %v3730 = vunpack.c.l.b16 %v3589
    %v3731 = vunpack.c.l.b16 %v3590
    %v3732 = vunpack.c.l.b16 %v3591
    %v3733 = vunpack.c.l.b16 %v3592
    %v3734 = vunpack.c.l.b16 %v3593
    %v3735 = vunpack.c.l.b16 %v3594
    %v3736 = vunpack.c.l.b16 %v3595
    %v3737 = vunpack.c.l.b16 %v3596
    %v3738 = vunpack.c.l.b16 %v3597
    %v3739 = vunpack.c.l.b16 %v3598
    %v3740 = vpack.c.b16 %v3725, %v3724
    %v3741 = vpack.c.b16 %v3727, %v3726
    %v3742 = vpack.c.b16 %v3729, %v3728
    %v3743 = vpack.c.b16 %v3731, %v3730
    %v3744 = vpack.c.b16 %v3733, %v3732
    %v3745 = vpack.c.b16 %v3735, %v3734
    %v3746 = vpack.c.b16 %v3737, %v3736
    %v3747 = vpack.c.b16 %v3739, %v3738
    %3756 = vmatprep.subr.bf16.mxu0 0
    %3757 = vmatpush1.bf16.msra.mxu0 %v3740
    %3758 = vmatprep.subr.bf16.mxu0 0
    %3759 = vmatpush1.bf16.msra.mxu0 %v3741
    %3760 = vmatprep.subr.bf16.mxu0 0
    %3761 = vmatpush1.bf16.msra.mxu0 %v3742
    %3762 = vmatprep.subr.bf16.mxu0 0
    %3763 = vmatpush1.bf16.msra.mxu0 %v3743
    %3764 = vmatprep.subr.bf16.mxu0 0
    %3765 = vmatpush1.bf16.msra.mxu0 %v3744
    %3766 = vmatprep.subr.bf16.mxu0 0
    %3767 = vmatpush1.bf16.msra.mxu0 %v3745
    %3768 = vmatprep.subr.bf16.mxu0 0
    %3769 = vmatpush1.bf16.msra.mxu0 %v3746
    %3770 = vmatprep.subr.bf16.mxu0 0
    %3771 = vmatpush1.bf16.msra.mxu0 %v3747
    %3772 = vmatprep.subr.bf16.mxu0 0
    %3773 = vmatpush1.bf16.msra.mxu0 0
    %3774 = vmatprep.subr.bf16.mxu0 0
    %3775 = vmatpush1.bf16.msra.mxu0 0
    %3776 = vmatprep.subr.bf16.mxu0 0
    %3777 = vmatpush1.bf16.msra.mxu0 0
    %3778 = vmatprep.subr.bf16.mxu0 0
    %3779 = vmatpush1.bf16.msra.mxu0 0
    %3780 = vmatprep.subr.bf16.mxu0 0
    %3781 = vmatpush1.bf16.msra.mxu0 0
    %3782 = vmatprep.subr.bf16.mxu0 0
    %3783 = vmatpush1.bf16.msra.mxu0 0
    %3784 = vmatprep.subr.bf16.mxu0 0
    %3785 = vmatpush1.bf16.msra.mxu0 0
    %3786 = vmatprep.subr.bf16.mxu0 0
    %3787 = vmatpush1.bf16.msra.mxu0 0
    %3788 = vmatprep.mubr.bf16.mxu0 0
    %3789 = vmatmul.mubr.bf16.gmra.mrb[0].mxu0 %v3582
    %v3790 = vpop.f32.mrb[0].mxu0
    %v3791 = vadd.f32 %v3702, %v3790
    %v3792 = vpop.f32.mrb[0].mxu0
    %v3793 = vpop.f32.mrb[0].mxu0
    %v3794 = vadd.f32 %v3705, %v3793
    %v3795 = vpop.f32.mrb[0].mxu0
    %3796 = vdwg.mxu0
    %v3797 = vld [vmem:[#allocation2 + $0x2] sm:$0xff]
    %v3798 = vld [vmem:[#allocation2 + $0xa] sm:$0x3]
    %v3799 = vpack.c.bf16 %v3798, %v3797
    %s3800 = scalar_lea.vmem %s6, 128
    %v3801 = vld [vmem:[%s3800] sm:$0xf]
    %v3802 = vld [vmem:[%s3800 + $0x4] sm:$0xf]
    %v3803 = vld [vmem:[%s3800 + $0x8] sm:$0xf]
    %v3804 = vld [vmem:[%s3800 + $0xc] sm:$0xf]
    %v3805 = vld [vmem:[%s3800 + $0x10] sm:$0xf]
    %v3806 = vld [vmem:[%s3800 + $0x14] sm:$0xf]
    %v3807 = vld [vmem:[%s3800 + $0x18] sm:$0xf]
    %v3808 = vld [vmem:[%s3800 + $0x1c] sm:$0xf]
    %v3809 = vld [vmem:[%s3800 + $0x20] sm:$0xf]
    %v3810 = vld [vmem:[%s3800 + $0x24] sm:$0xf]
    %v3811 = vld [vmem:[%s3800 + $0x28] sm:$0xf]
    %v3812 = vld [vmem:[%s3800 + $0x2c] sm:$0xf]
    %v3813 = vld [vmem:[%s3800 + $0x30] sm:$0xf]
    %v3814 = vld [vmem:[%s3800 + $0x34] sm:$0xf]
    %v3815 = vld [vmem:[%s3800 + $0x38] sm:$0xf]
    %v3816 = vld [vmem:[%s3800 + $0x3c] sm:$0xf]
    %v3833 = vunpack.c.l.b16 %v3801
    %v3834 = vunpack.c.l.b16 %v3802
    %v3835 = vunpack.c.l.b16 %v3803
    %v3836 = vunpack.c.l.b16 %v3804
    %v3837 = vunpack.c.l.b16 %v3805
    %v3838 = vunpack.c.l.b16 %v3806
    %v3839 = vunpack.c.l.b16 %v3807
    %v3840 = vunpack.c.l.b16 %v3808
    %v3841 = vunpack.c.l.b16 %v3809
    %v3842 = vunpack.c.l.b16 %v3810
    %v3843 = vunpack.c.l.b16 %v3811
    %v3844 = vunpack.c.l.b16 %v3812
    %v3845 = vunpack.c.l.b16 %v3813
    %v3846 = vunpack.c.l.b16 %v3814
    %v3847 = vunpack.c.l.b16 %v3815
    %v3848 = vunpack.c.l.b16 %v3816
    %v3849 = vpack.c.b16 %v3834, %v3833
    %v3850 = vpack.c.b16 %v3836, %v3835
    %v3851 = vpack.c.b16 %v3838, %v3837
    %v3852 = vpack.c.b16 %v3840, %v3839
    %v3853 = vpack.c.b16 %v3842, %v3841
    %v3854 = vpack.c.b16 %v3844, %v3843
    %v3855 = vpack.c.b16 %v3846, %v3845
    %v3856 = vpack.c.b16 %v3848, %v3847
    %3865 = vmatprep.subr.bf16.mxu0 0
    %3866 = vmatpush1.bf16.msra.mxu0 %v3849
    %3867 = vmatprep.subr.bf16.mxu0 0
    %3868 = vmatpush1.bf16.msra.mxu0 %v3850
    %3869 = vmatprep.subr.bf16.mxu0 0
    %3870 = vmatpush1.bf16.msra.mxu0 %v3851
    %3871 = vmatprep.subr.bf16.mxu0 0
    %3872 = vmatpush1.bf16.msra.mxu0 %v3852
    %3873 = vmatprep.subr.bf16.mxu0 0
    %3874 = vmatpush1.bf16.msra.mxu0 %v3853
    %3875 = vmatprep.subr.bf16.mxu0 0
    %3876 = vmatpush1.bf16.msra.mxu0 %v3854
    %3877 = vmatprep.subr.bf16.mxu0 0
    %3878 = vmatpush1.bf16.msra.mxu0 %v3855
    %3879 = vmatprep.subr.bf16.mxu0 0
    %3880 = vmatpush1.bf16.msra.mxu0 %v3856
    %3881 = vmatprep.subr.bf16.mxu0 0
    %3882 = vmatpush1.bf16.msra.mxu0 0
    %3883 = vmatprep.subr.bf16.mxu0 0
    %3884 = vmatpush1.bf16.msra.mxu0 0
    %3885 = vmatprep.subr.bf16.mxu0 0
    %3886 = vmatpush1.bf16.msra.mxu0 0
    %3887 = vmatprep.subr.bf16.mxu0 0
    %3888 = vmatpush1.bf16.msra.mxu0 0
    %3889 = vmatprep.subr.bf16.mxu0 0
    %3890 = vmatpush1.bf16.msra.mxu0 0
    %3891 = vmatprep.subr.bf16.mxu0 0
    %3892 = vmatpush1.bf16.msra.mxu0 0
    %3893 = vmatprep.subr.bf16.mxu0 0
    %3894 = vmatpush1.bf16.msra.mxu0 0
    %3895 = vmatprep.subr.bf16.mxu0 0
    %3896 = vmatpush1.bf16.msra.mxu0 0
    %3897 = vmatprep.mubr.bf16.mxu0 0
    %3898 = vmatmul.mubr.bf16.gmra.mrb[0].mxu0 %v3799
    %v3899 = vpop.f32.mrb[0].mxu0
    %v3900 = vadd.f32 0.0, %v3899
    %v3901 = vpop.f32.mrb[0].mxu0
    %v3902 = vpop.f32.mrb[0].mxu0
    %v3903 = vadd.f32 0.0, %v3902
    %v3904 = vpop.f32.mrb[0].mxu0
    %3905 = vdwg.mxu0
    %v3906 = vadd.f32 %v3791, %v3900
    %v3907 = vadd.f32 %v3794, %v3903
    %v3908 = vld [vmem:[%s15] sm:$0x1]
    %v3910 = vlaneseq
    %v3911 = vshrl.u32 %v3910, 7
    %v3912 = vsub.s32 0, %v3911
    %v3913 = vrot.slane %v3908, %v3912
    %v3915 = vadd.f32 %v3906, %v3913
    %v3916 = vadd.f32 %v3907, %v3913
    %v3917 = vadd.f32 %v3915, %v3599
    %v3918 = vadd.f32 %v3916, %v3600
    %v3919 = vmax.f32 %v3917, 0.0
    %v3920 = vmax.f32 %v3918, 0.0
    %3921 = vst [vmem:[#allocation3] sm:$0xff] 0.0
    %3922 = vst [vmem:[#allocation3 + $0x8] sm:$0xf] 0.0
    %3923 = vst [vmem:[#allocation3 + $0x1] sm:$0xf] %v3919
    %3924 = vst [vmem:[#allocation3 + $0x1] sm:$0xc0] %v3919
    %3925 = vst [vmem:[#allocation3 + $0x9] sm:$0x3] %v3920
    %v3926 = vld [vmem:[#allocation3] sm:$0xff]
    %v3927 = vld [vmem:[#allocation3 + $0x8] sm:$0x3]
    %v3928 = vpack.c.bf16 %v3927, %v3926
    %v3929 = vld [vmem:[%s7] sm:$0xf]
    %v3930 = vld [vmem:[%s7 + $0x4] sm:$0xf]
    %v3931 = vld [vmem:[%s7 + $0x8] sm:$0xf]
    %v3932 = vld [vmem:[%s7 + $0xc] sm:$0xf]
    %v3933 = vld [vmem:[%s7 + $0x10] sm:$0xf]
    %v3934 = vld [vmem:[%s7 + $0x14] sm:$0xf]
    %v3935 = vld [vmem:[%s7 + $0x18] sm:$0xf]
    %v3936 = vld [vmem:[%s7 + $0x1c] sm:$0xf]
    %v3937 = vld [vmem:[%s7 + $0x20] sm:$0xf]
    %v3938 = vld [vmem:[%s7 + $0x24] sm:$0xf]
    %v3939 = vld [vmem:[%s7 + $0x28] sm:$0xf]
    %v3940 = vld [vmem:[%s7 + $0x2c] sm:$0xf]
    %v3941 = vld [vmem:[%s7 + $0x30] sm:$0xf]
    %v3942 = vld [vmem:[%s7 + $0x34] sm:$0xf]
    %v3943 = vld [vmem:[%s7 + $0x38] sm:$0xf]
    %v3944 = vld [vmem:[%s7 + $0x3c] sm:$0xf]
    %v3945 = vld [vmem:[#allocation3 + $0x1] sm:$0xff]
    %v3946 = vld [vmem:[#allocation3 + $0x9] sm:$0x3]
    %v3947 = vpack.c.bf16 %v3946, %v3945
    %s3948 = scalar_lea.vmem %s7, 64
    %v3949 = vld [vmem:[%s3948] sm:$0xf]
    %v3950 = vld [vmem:[%s3948 + $0x4] sm:$0xf]
    %v3951 = vld [vmem:[%s3948 + $0x8] sm:$0xf]
    %v3952 = vld [vmem:[%s3948 + $0xc] sm:$0xf]
    %v3953 = vld [vmem:[%s3948 + $0x10] sm:$0xf]
    %v3954 = vld [vmem:[%s3948 + $0x14] sm:$0xf]
    %v3955 = vld [vmem:[%s3948 + $0x18] sm:$0xf]
    %v3956 = vld [vmem:[%s3948 + $0x1c] sm:$0xf]
    %v3957 = vld [vmem:[%s3948 + $0x20] sm:$0xf]
    %v3958 = vld [vmem:[%s3948 + $0x24] sm:$0xf]
    %v3959 = vld [vmem:[%s3948 + $0x28] sm:$0xf]
    %v3960 = vld [vmem:[%s3948 + $0x2c] sm:$0xf]
    %v3961 = vld [vmem:[%s3948 + $0x30] sm:$0xf]
    %v3962 = vld [vmem:[%s3948 + $0x34] sm:$0xf]
    %v3963 = vld [vmem:[%s3948 + $0x38] sm:$0xf]
    %v3964 = vld [vmem:[%s3948 + $0x3c] sm:$0xf]
    %v3981 = vunpack.c.l.b16 %v3949
    %v3982 = vunpack.c.l.b16 %v3950
    %v3983 = vunpack.c.l.b16 %v3951
    %v3984 = vunpack.c.l.b16 %v3952
    %v3985 = vunpack.c.l.b16 %v3953
    %v3986 = vunpack.c.l.b16 %v3954
    %v3987 = vunpack.c.l.b16 %v3955
    %v3988 = vunpack.c.l.b16 %v3956
    %v3989 = vunpack.c.l.b16 %v3957
    %v3990 = vunpack.c.l.b16 %v3958
    %v3991 = vunpack.c.l.b16 %v3959
    %v3992 = vunpack.c.l.b16 %v3960
    %v3993 = vunpack.c.l.b16 %v3961
    %v3994 = vunpack.c.l.b16 %v3962
    %v3995 = vunpack.c.l.b16 %v3963
    %v3996 = vunpack.c.l.b16 %v3964
    %v3997 = vpack.c.b16 %v3982, %v3981
    %v3998 = vpack.c.b16 %v3984, %v3983
    %v3999 = vpack.c.b16 %v3986, %v3985
    %v4000 = vpack.c.b16 %v3988, %v3987
    %v4001 = vpack.c.b16 %v3990, %v3989
    %v4002 = vpack.c.b16 %v3992, %v3991
    %v4003 = vpack.c.b16 %v3994, %v3993
    %v4004 = vpack.c.b16 %v3996, %v3995
    %4013 = vmatprep.subr.bf16.mxu0 0
    %4014 = vmatpush1.bf16.msra.mxu0 %v3997
    %4015 = vmatprep.subr.bf16.mxu0 0
    %4016 = vmatpush1.bf16.msra.mxu0 %v3998
    %4017 = vmatprep.subr.bf16.mxu0 0
    %4018 = vmatpush1.bf16.msra.mxu0 %v3999
    %4019 = vmatprep.subr.bf16.mxu0 0
    %4020 = vmatpush1.bf16.msra.mxu0 %v4000
    %4021 = vmatprep.subr.bf16.mxu0 0
    %4022 = vmatpush1.bf16.msra.mxu0 %v4001
    %4023 = vmatprep.subr.bf16.mxu0 0
    %4024 = vmatpush1.bf16.msra.mxu0 %v4002
    %4025 = vmatprep.subr.bf16.mxu0 0
    %4026 = vmatpush1.bf16.msra.mxu0 %v4003
    %4027 = vmatprep.subr.bf16.mxu0 0
    %4028 = vmatpush1.bf16.msra.mxu0 %v4004
    %4029 = vmatprep.subr.bf16.mxu0 0
    %4030 = vmatpush1.bf16.msra.mxu0 0
    %4031 = vmatprep.subr.bf16.mxu0 0
    %4032 = vmatpush1.bf16.msra.mxu0 0
    %4033 = vmatprep.subr.bf16.mxu0 0
    %4034 = vmatpush1.bf16.msra.mxu0 0
    %4035 = vmatprep.subr.bf16.mxu0 0
    %4036 = vmatpush1.bf16.msra.mxu0 0
    %4037 = vmatprep.subr.bf16.mxu0 0
    %4038 = vmatpush1.bf16.msra.mxu0 0
    %4039 = vmatprep.subr.bf16.mxu0 0
    %4040 = vmatpush1.bf16.msra.mxu0 0
    %4041 = vmatprep.subr.bf16.mxu0 0
    %4042 = vmatpush1.bf16.msra.mxu0 0
    %4043 = vmatprep.subr.bf16.mxu0 0
    %4044 = vmatpush1.bf16.msra.mxu0 0
    %4045 = vmatprep.mubr.bf16.mxu0 0
    %4046 = vmatmul.mubr.bf16.gmra.mrb[0].mxu0 %v3947
    %v4047 = vpop.f32.mrb[0].mxu0
    %v4048 = vadd.f32 0.0, %v4047
    %v4049 = vpop.f32.mrb[0].mxu0
    %v4050 = vpop.f32.mrb[0].mxu0
    %v4051 = vadd.f32 0.0, %v4050
    %v4052 = vpop.f32.mrb[0].mxu0
    %4053 = vdwg.mxu0
    %v4070 = vunpack.c.l.b16 %v3929
    %v4071 = vunpack.c.l.b16 %v3930
    %v4072 = vunpack.c.l.b16 %v3931
    %v4073 = vunpack.c.l.b16 %v3932
    %v4074 = vunpack.c.l.b16 %v3933
    %v4075 = vunpack.c.l.b16 %v3934
    %v4076 = vunpack.c.l.b16 %v3935
    %v4077 = vunpack.c.l.b16 %v3936
    %v4078 = vunpack.c.l.b16 %v3937
    %v4079 = vunpack.c.l.b16 %v3938
    %v4080 = vunpack.c.l.b16 %v3939
    %v4081 = vunpack.c.l.b16 %v3940
    %v4082 = vunpack.c.l.b16 %v3941
    %v4083 = vunpack.c.l.b16 %v3942
    %v4084 = vunpack.c.l.b16 %v3943
    %v4085 = vunpack.c.l.b16 %v3944
    %v4086 = vpack.c.b16 %v4071, %v4070
    %v4087 = vpack.c.b16 %v4073, %v4072
    %v4088 = vpack.c.b16 %v4075, %v4074
    %v4089 = vpack.c.b16 %v4077, %v4076
    %v4090 = vpack.c.b16 %v4079, %v4078
    %v4091 = vpack.c.b16 %v4081, %v4080
    %v4092 = vpack.c.b16 %v4083, %v4082
    %v4093 = vpack.c.b16 %v4085, %v4084
    %4102 = vmatprep.subr.bf16.mxu0 0
    %4103 = vmatpush1.bf16.msra.mxu0 %v4086
    %4104 = vmatprep.subr.bf16.mxu0 0
    %4105 = vmatpush1.bf16.msra.mxu0 %v4087
    %4106 = vmatprep.subr.bf16.mxu0 0
    %4107 = vmatpush1.bf16.msra.mxu0 %v4088
    %4108 = vmatprep.subr.bf16.mxu0 0
    %4109 = vmatpush1.bf16.msra.mxu0 %v4089
    %4110 = vmatprep.subr.bf16.mxu0 0
    %4111 = vmatpush1.bf16.msra.mxu0 %v4090
    %4112 = vmatprep.subr.bf16.mxu0 0
    %4113 = vmatpush1.bf16.msra.mxu0 %v4091
    %4114 = vmatprep.subr.bf16.mxu0 0
    %4115 = vmatpush1.bf16.msra.mxu0 %v4092
    %4116 = vmatprep.subr.bf16.mxu0 0
    %4117 = vmatpush1.bf16.msra.mxu0 %v4093
    %4118 = vmatprep.subr.bf16.mxu0 0
    %4119 = vmatpush1.bf16.msra.mxu0 0
    %4120 = vmatprep.subr.bf16.mxu0 0
    %4121 = vmatpush1.bf16.msra.mxu0 0
    %4122 = vmatprep.subr.bf16.mxu0 0
    %4123 = vmatpush1.bf16.msra.mxu0 0
    %4124 = vmatprep.subr.bf16.mxu0 0
    %4125 = vmatpush1.bf16.msra.mxu0 0
    %4126 = vmatprep.subr.bf16.mxu0 0
    %4127 = vmatpush1.bf16.msra.mxu0 0
    %4128 = vmatprep.subr.bf16.mxu0 0
    %4129 = vmatpush1.bf16.msra.mxu0 0
    %4130 = vmatprep.subr.bf16.mxu0 0
    %4131 = vmatpush1.bf16.msra.mxu0 0
    %4132 = vmatprep.subr.bf16.mxu0 0
    %4133 = vmatpush1.bf16.msra.mxu0 0
    %4134 = vmatprep.mubr.bf16.mxu0 0
    %4135 = vmatmul.mubr.bf16.gmra.mrb[0].mxu0 %v3928
    %v4136 = vpop.f32.mrb[0].mxu0
    %v4137 = vadd.f32 %v4048, %v4136
    %v4138 = vpop.f32.mrb[0].mxu0
    %v4139 = vpop.f32.mrb[0].mxu0
    %v4140 = vadd.f32 %v4051, %v4139
    %v4141 = vpop.f32.mrb[0].mxu0
    %4142 = vdwg.mxu0
    %v4143 = vld [vmem:[#allocation3 + $0x2] sm:$0xff]
    %v4144 = vld [vmem:[#allocation3 + $0xa] sm:$0x3]
    %v4145 = vpack.c.bf16 %v4144, %v4143
    %s4146 = scalar_lea.vmem %s7, 128
    %v4147 = vld [vmem:[%s4146] sm:$0xf]
    %v4148 = vld [vmem:[%s4146 + $0x4] sm:$0xf]
    %v4149 = vld [vmem:[%s4146 + $0x8] sm:$0xf]
    %v4150 = vld [vmem:[%s4146 + $0xc] sm:$0xf]
    %v4151 = vld [vmem:[%s4146 + $0x10] sm:$0xf]
    %v4152 = vld [vmem:[%s4146 + $0x14] sm:$0xf]
    %v4153 = vld [vmem:[%s4146 + $0x18] sm:$0xf]
    %v4154 = vld [vmem:[%s4146 + $0x1c] sm:$0xf]
    %v4155 = vld [vmem:[%s4146 + $0x20] sm:$0xf]
    %v4156 = vld [vmem:[%s4146 + $0x24] sm:$0xf]
    %v4157 = vld [vmem:[%s4146 + $0x28] sm:$0xf]
    %v4158 = vld [vmem:[%s4146 + $0x2c] sm:$0xf]
    %v4159 = vld [vmem:[%s4146 + $0x30] sm:$0xf]
    %v4160 = vld [vmem:[%s4146 + $0x34] sm:$0xf]
    %v4161 = vld [vmem:[%s4146 + $0x38] sm:$0xf]
    %v4162 = vld [vmem:[%s4146 + $0x3c] sm:$0xf]
    %v4179 = vunpack.c.l.b16 %v4147
    %v4180 = vunpack.c.l.b16 %v4148
    %v4181 = vunpack.c.l.b16 %v4149
    %v4182 = vunpack.c.l.b16 %v4150
    %v4183 = vunpack.c.l.b16 %v4151
    %v4184 = vunpack.c.l.b16 %v4152
    %v4185 = vunpack.c.l.b16 %v4153
    %v4186 = vunpack.c.l.b16 %v4154
    %v4187 = vunpack.c.l.b16 %v4155
    %v4188 = vunpack.c.l.b16 %v4156
    %v4189 = vunpack.c.l.b16 %v4157
    %v4190 = vunpack.c.l.b16 %v4158
    %v4191 = vunpack.c.l.b16 %v4159
    %v4192 = vunpack.c.l.b16 %v4160
    %v4193 = vunpack.c.l.b16 %v4161
    %v4194 = vunpack.c.l.b16 %v4162
    %v4195 = vpack.c.b16 %v4180, %v4179
    %v4196 = vpack.c.b16 %v4182, %v4181
    %v4197 = vpack.c.b16 %v4184, %v4183
    %v4198 = vpack.c.b16 %v4186, %v4185
    %v4199 = vpack.c.b16 %v4188, %v4187
    %v4200 = vpack.c.b16 %v4190, %v4189
    %v4201 = vpack.c.b16 %v4192, %v4191
    %v4202 = vpack.c.b16 %v4194, %v4193
    %4211 = vmatprep.subr.bf16.mxu0 0
    %4212 = vmatpush1.bf16.msra.mxu0 %v4195
    %4213 = vmatprep.subr.bf16.mxu0 0
    %4214 = vmatpush1.bf16.msra.mxu0 %v4196
    %4215 = vmatprep.subr.bf16.mxu0 0
    %4216 = vmatpush1.bf16.msra.mxu0 %v4197
    %4217 = vmatprep.subr.bf16.mxu0 0
    %4218 = vmatpush1.bf16.msra.mxu0 %v4198
    %4219 = vmatprep.subr.bf16.mxu0 0
    %4220 = vmatpush1.bf16.msra.mxu0 %v4199
    %4221 = vmatprep.subr.bf16.mxu0 0
    %4222 = vmatpush1.bf16.msra.mxu0 %v4200
    %4223 = vmatprep.subr.bf16.mxu0 0
    %4224 = vmatpush1.bf16.msra.mxu0 %v4201
    %4225 = vmatprep.subr.bf16.mxu0 0
    %4226 = vmatpush1.bf16.msra.mxu0 %v4202
    %4227 = vmatprep.subr.bf16.mxu0 0
    %4228 = vmatpush1.bf16.msra.mxu0 0
    %4229 = vmatprep.subr.bf16.mxu0 0
    %4230 = vmatpush1.bf16.msra.mxu0 0
    %4231 = vmatprep.subr.bf16.mxu0 0
    %4232 = vmatpush1.bf16.msra.mxu0 0
    %4233 = vmatprep.subr.bf16.mxu0 0
    %4234 = vmatpush1.bf16.msra.mxu0 0
    %4235 = vmatprep.subr.bf16.mxu0 0
    %4236 = vmatpush1.bf16.msra.mxu0 0
    %4237 = vmatprep.subr.bf16.mxu0 0
    %4238 = vmatpush1.bf16.msra.mxu0 0
    %4239 = vmatprep.subr.bf16.mxu0 0
    %4240 = vmatpush1.bf16.msra.mxu0 0
    %4241 = vmatprep.subr.bf16.mxu0 0
    %4242 = vmatpush1.bf16.msra.mxu0 0
    %4243 = vmatprep.mubr.bf16.mxu0 0
    %4244 = vmatmul.mubr.bf16.gmra.mrb[0].mxu0 %v4145
    %v4245 = vpop.f32.mrb[0].mxu0
    %v4246 = vadd.f32 0.0, %v4245
    %v4247 = vpop.f32.mrb[0].mxu0
    %v4248 = vpop.f32.mrb[0].mxu0
    %v4249 = vadd.f32 0.0, %v4248
    %v4250 = vpop.f32.mrb[0].mxu0
    %4251 = vdwg.mxu0
    %v4252 = vadd.f32 %v4137, %v4246
    %v4253 = vadd.f32 %v4140, %v4249
    %v4254 = vld [vmem:[%s16] sm:$0x1]
    %v4256 = vlaneseq
    %v4257 = vshrl.u32 %v4256, 7
    %v4258 = vsub.s32 0, %v4257
    %v4259 = vrot.slane %v4254, %v4258
    %v4261 = vadd.f32 %v4252, %v4259
    %v4262 = vadd.f32 %v4253, %v4259
    %v4263 = vadd.f32 %v4261, %v3945
    %v4264 = vadd.f32 %v4262, %v3946
    %v4265 = vmax.f32 %v4263, 0.0
    %v4266 = vmax.f32 %v4264, 0.0
    %4267 = vst [vmem:[#allocation2] sm:$0xff] 0.0
    %4268 = vst [vmem:[#allocation2 + $0x8] sm:$0xf] 0.0
    %4269 = vst [vmem:[#allocation2 + $0x1] sm:$0xf] %v4265
    %4270 = vst [vmem:[#allocation2 + $0x1] sm:$0xc0] %v4265
    %4271 = vst [vmem:[#allocation2 + $0x9] sm:$0x3] %v4266
    %v4272 = vld [vmem:[#allocation2] sm:$0xff]
    %v4273 = vld [vmem:[#allocation2 + $0x8] sm:$0x3]
    %v4274 = vpack.c.bf16 %v4273, %v4272
    %v4275 = vld [vmem:[%s8] sm:$0xf]
    %v4276 = vld [vmem:[%s8 + $0x4] sm:$0xf]
    %v4277 = vld [vmem:[%s8 + $0x8] sm:$0xf]
    %v4278 = vld [vmem:[%s8 + $0xc] sm:$0xf]
    %v4279 = vld [vmem:[%s8 + $0x10] sm:$0xf]
    %v4280 = vld [vmem:[%s8 + $0x14] sm:$0xf]
    %v4281 = vld [vmem:[%s8 + $0x18] sm:$0xf]
    %v4282 = vld [vmem:[%s8 + $0x1c] sm:$0xf]
    %v4283 = vld [vmem:[%s8 + $0x20] sm:$0xf]
    %v4284 = vld [vmem:[%s8 + $0x24] sm:$0xf]
    %v4285 = vld [vmem:[%s8 + $0x28] sm:$0xf]
    %v4286 = vld [vmem:[%s8 + $0x2c] sm:$0xf]
    %v4287 = vld [vmem:[%s8 + $0x30] sm:$0xf]
    %v4288 = vld [vmem:[%s8 + $0x34] sm:$0xf]
    %v4289 = vld [vmem:[%s8 + $0x38] sm:$0xf]
    %v4290 = vld [vmem:[%s8 + $0x3c] sm:$0xf]
    %v4291 = vld [vmem:[#allocation2 + $0x1] sm:$0xff]
    %v4292 = vld [vmem:[#allocation2 + $0x9] sm:$0x3]
    %v4293 = vpack.c.bf16 %v4292, %v4291
    %s4294 = scalar_lea.vmem %s8, 64
    %v4295 = vld [vmem:[%s4294] sm:$0xf]
    %v4296 = vld [vmem:[%s4294 + $0x4] sm:$0xf]
    %v4297 = vld [vmem:[%s4294 + $0x8] sm:$0xf]
    %v4298 = vld [vmem:[%s4294 + $0xc] sm:$0xf]
    %v4299 = vld [vmem:[%s4294 + $0x10] sm:$0xf]
    %v4300 = vld [vmem:[%s4294 + $0x14] sm:$0xf]
    %v4301 = vld [vmem:[%s4294 + $0x18] sm:$0xf]
    %v4302 = vld [vmem:[%s4294 + $0x1c] sm:$0xf]
    %v4303 = vld [vmem:[%s4294 + $0x20] sm:$0xf]
    %v4304 = vld [vmem:[%s4294 + $0x24] sm:$0xf]
    %v4305 = vld [vmem:[%s4294 + $0x28] sm:$0xf]
    %v4306 = vld [vmem:[%s4294 + $0x2c] sm:$0xf]
    %v4307 = vld [vmem:[%s4294 + $0x30] sm:$0xf]
    %v4308 = vld [vmem:[%s4294 + $0x34] sm:$0xf]
    %v4309 = vld [vmem:[%s4294 + $0x38] sm:$0xf]
    %v4310 = vld [vmem:[%s4294 + $0x3c] sm:$0xf]
    %v4327 = vunpack.c.l.b16 %v4295
    %v4328 = vunpack.c.l.b16 %v4296
    %v4329 = vunpack.c.l.b16 %v4297
    %v4330 = vunpack.c.l.b16 %v4298
    %v4331 = vunpack.c.l.b16 %v4299
    %v4332 = vunpack.c.l.b16 %v4300
    %v4333 = vunpack.c.l.b16 %v4301
    %v4334 = vunpack.c.l.b16 %v4302
    %v4335 = vunpack.c.l.b16 %v4303
    %v4336 = vunpack.c.l.b16 %v4304
    %v4337 = vunpack.c.l.b16 %v4305
    %v4338 = vunpack.c.l.b16 %v4306
    %v4339 = vunpack.c.l.b16 %v4307
    %v4340 = vunpack.c.l.b16 %v4308
    %v4341 = vunpack.c.l.b16 %v4309
    %v4342 = vunpack.c.l.b16 %v4310
    %v4343 = vpack.c.b16 %v4328, %v4327
    %v4344 = vpack.c.b16 %v4330, %v4329
    %v4345 = vpack.c.b16 %v4332, %v4331
    %v4346 = vpack.c.b16 %v4334, %v4333
    %v4347 = vpack.c.b16 %v4336, %v4335
    %v4348 = vpack.c.b16 %v4338, %v4337
    %v4349 = vpack.c.b16 %v4340, %v4339
    %v4350 = vpack.c.b16 %v4342, %v4341
    %4359 = vmatprep.subr.bf16.mxu0 0
    %4360 = vmatpush1.bf16.msra.mxu0 %v4343
    %4361 = vmatprep.subr.bf16.mxu0 0
    %4362 = vmatpush1.bf16.msra.mxu0 %v4344
    %4363 = vmatprep.subr.bf16.mxu0 0
    %4364 = vmatpush1.bf16.msra.mxu0 %v4345
    %4365 = vmatprep.subr.bf16.mxu0 0
    %4366 = vmatpush1.bf16.msra.mxu0 %v4346
    %4367 = vmatprep.subr.bf16.mxu0 0
    %4368 = vmatpush1.bf16.msra.mxu0 %v4347
    %4369 = vmatprep.subr.bf16.mxu0 0
    %4370 = vmatpush1.bf16.msra.mxu0 %v4348
    %4371 = vmatprep.subr.bf16.mxu0 0
    %4372 = vmatpush1.bf16.msra.mxu0 %v4349
    %4373 = vmatprep.subr.bf16.mxu0 0
    %4374 = vmatpush1.bf16.msra.mxu0 %v4350
    %4375 = vmatprep.subr.bf16.mxu0 0
    %4376 = vmatpush1.bf16.msra.mxu0 0
    %4377 = vmatprep.subr.bf16.mxu0 0
    %4378 = vmatpush1.bf16.msra.mxu0 0
    %4379 = vmatprep.subr.bf16.mxu0 0
    %4380 = vmatpush1.bf16.msra.mxu0 0
    %4381 = vmatprep.subr.bf16.mxu0 0
    %4382 = vmatpush1.bf16.msra.mxu0 0
    %4383 = vmatprep.subr.bf16.mxu0 0
    %4384 = vmatpush1.bf16.msra.mxu0 0
    %4385 = vmatprep.subr.bf16.mxu0 0
    %4386 = vmatpush1.bf16.msra.mxu0 0
    %4387 = vmatprep.subr.bf16.mxu0 0
    %4388 = vmatpush1.bf16.msra.mxu0 0
    %4389 = vmatprep.subr.bf16.mxu0 0
    %4390 = vmatpush1.bf16.msra.mxu0 0
    %4391 = vmatprep.mubr.bf16.mxu0 0
    %4392 = vmatmul.mubr.bf16.gmra.mrb[0].mxu0 %v4293
    %v4393 = vpop.f32.mrb[0].mxu0
    %v4394 = vadd.f32 0.0, %v4393
    %v4395 = vpop.f32.mrb[0].mxu0
    %v4396 = vpop.f32.mrb[0].mxu0
    %v4397 = vadd.f32 0.0, %v4396
    %v4398 = vpop.f32.mrb[0].mxu0
    %4399 = vdwg.mxu0
    %v4416 = vunpack.c.l.b16 %v4275
    %v4417 = vunpack.c.l.b16 %v4276
    %v4418 = vunpack.c.l.b16 %v4277
    %v4419 = vunpack.c.l.b16 %v4278
    %v4420 = vunpack.c.l.b16 %v4279
    %v4421 = vunpack.c.l.b16 %v4280
    %v4422 = vunpack.c.l.b16 %v4281
    %v4423 = vunpack.c.l.b16 %v4282
    %v4424 = vunpack.c.l.b16 %v4283
    %v4425 = vunpack.c.l.b16 %v4284
    %v4426 = vunpack.c.l.b16 %v4285
    %v4427 = vunpack.c.l.b16 %v4286
    %v4428 = vunpack.c.l.b16 %v4287
    %v4429 = vunpack.c.l.b16 %v4288
    %v4430 = vunpack.c.l.b16 %v4289
    %v4431 = vunpack.c.l.b16 %v4290
    %v4432 = vpack.c.b16 %v4417, %v4416
    %v4433 = vpack.c.b16 %v4419, %v4418
    %v4434 = vpack.c.b16 %v4421, %v4420
    %v4435 = vpack.c.b16 %v4423, %v4422
    %v4436 = vpack.c.b16 %v4425, %v4424
    %v4437 = vpack.c.b16 %v4427, %v4426
    %v4438 = vpack.c.b16 %v4429, %v4428
    %v4439 = vpack.c.b16 %v4431, %v4430
    %4448 = vmatprep.subr.bf16.mxu0 0
    %4449 = vmatpush1.bf16.msra.mxu0 %v4432
    %4450 = vmatprep.subr.bf16.mxu0 0
    %4451 = vmatpush1.bf16.msra.mxu0 %v4433
    %4452 = vmatprep.subr.bf16.mxu0 0
    %4453 = vmatpush1.bf16.msra.mxu0 %v4434
    %4454 = vmatprep.subr.bf16.mxu0 0
    %4455 = vmatpush1.bf16.msra.mxu0 %v4435
    %4456 = vmatprep.subr.bf16.mxu0 0
    %4457 = vmatpush1.bf16.msra.mxu0 %v4436
    %4458 = vmatprep.subr.bf16.mxu0 0
    %4459 = vmatpush1.bf16.msra.mxu0 %v4437
    %4460 = vmatprep.subr.bf16.mxu0 0
    %4461 = vmatpush1.bf16.msra.mxu0 %v4438
    %4462 = vmatprep.subr.bf16.mxu0 0
    %4463 = vmatpush1.bf16.msra.mxu0 %v4439
    %4464 = vmatprep.subr.bf16.mxu0 0
    %4465 = vmatpush1.bf16.msra.mxu0 0
    %4466 = vmatprep.subr.bf16.mxu0 0
    %4467 = vmatpush1.bf16.msra.mxu0 0
    %4468 = vmatprep.subr.bf16.mxu0 0
    %4469 = vmatpush1.bf16.msra.mxu0 0
    %4470 = vmatprep.subr.bf16.mxu0 0
    %4471 = vmatpush1.bf16.msra.mxu0 0
    %4472 = vmatprep.subr.bf16.mxu0 0
    %4473 = vmatpush1.bf16.msra.mxu0 0
    %4474 = vmatprep.subr.bf16.mxu0 0
    %4475 = vmatpush1.bf16.msra.mxu0 0
    %4476 = vmatprep.subr.bf16.mxu0 0
    %4477 = vmatpush1.bf16.msra.mxu0 0
    %4478 = vmatprep.subr.bf16.mxu0 0
    %4479 = vmatpush1.bf16.msra.mxu0 0
    %4480 = vmatprep.mubr.bf16.mxu0 0
    %4481 = vmatmul.mubr.bf16.gmra.mrb[0].mxu0 %v4274
    %v4482 = vpop.f32.mrb[0].mxu0
    %v4483 = vadd.f32 %v4394, %v4482
    %v4484 = vpop.f32.mrb[0].mxu0
    %v4485 = vpop.f32.mrb[0].mxu0
    %v4486 = vadd.f32 %v4397, %v4485
    %v4487 = vpop.f32.mrb[0].mxu0
    %4488 = vdwg.mxu0
    %v4489 = vld [vmem:[#allocation2 + $0x2] sm:$0xff]
    %v4490 = vld [vmem:[#allocation2 + $0xa] sm:$0x3]
    %v4491 = vpack.c.bf16 %v4490, %v4489
    %s4492 = scalar_lea.vmem %s8, 128
    %v4493 = vld [vmem:[%s4492] sm:$0xf]
    %v4494 = vld [vmem:[%s4492 + $0x4] sm:$0xf]
    %v4495 = vld [vmem:[%s4492 + $0x8] sm:$0xf]
    %v4496 = vld [vmem:[%s4492 + $0xc] sm:$0xf]
    %v4497 = vld [vmem:[%s4492 + $0x10] sm:$0xf]
    %v4498 = vld [vmem:[%s4492 + $0x14] sm:$0xf]
    %v4499 = vld [vmem:[%s4492 + $0x18] sm:$0xf]
    %v4500 = vld [vmem:[%s4492 + $0x1c] sm:$0xf]
    %v4501 = vld [vmem:[%s4492 + $0x20] sm:$0xf]
    %v4502 = vld [vmem:[%s4492 + $0x24] sm:$0xf]
    %v4503 = vld [vmem:[%s4492 + $0x28] sm:$0xf]
    %v4504 = vld [vmem:[%s4492 + $0x2c] sm:$0xf]
    %v4505 = vld [vmem:[%s4492 + $0x30] sm:$0xf]
    %v4506 = vld [vmem:[%s4492 + $0x34] sm:$0xf]
    %v4507 = vld [vmem:[%s4492 + $0x38] sm:$0xf]
    %v4508 = vld [vmem:[%s4492 + $0x3c] sm:$0xf]
    %v4525 = vunpack.c.l.b16 %v4493
    %v4526 = vunpack.c.l.b16 %v4494
    %v4527 = vunpack.c.l.b16 %v4495
    %v4528 = vunpack.c.l.b16 %v4496
    %v4529 = vunpack.c.l.b16 %v4497
    %v4530 = vunpack.c.l.b16 %v4498
    %v4531 = vunpack.c.l.b16 %v4499
    %v4532 = vunpack.c.l.b16 %v4500
    %v4533 = vunpack.c.l.b16 %v4501
    %v4534 = vunpack.c.l.b16 %v4502
    %v4535 = vunpack.c.l.b16 %v4503
    %v4536 = vunpack.c.l.b16 %v4504
    %v4537 = vunpack.c.l.b16 %v4505
    %v4538 = vunpack.c.l.b16 %v4506
    %v4539 = vunpack.c.l.b16 %v4507
    %v4540 = vunpack.c.l.b16 %v4508
    %v4541 = vpack.c.b16 %v4526, %v4525
    %v4542 = vpack.c.b16 %v4528, %v4527
    %v4543 = vpack.c.b16 %v4530, %v4529
    %v4544 = vpack.c.b16 %v4532, %v4531
    %v4545 = vpack.c.b16 %v4534, %v4533
    %v4546 = vpack.c.b16 %v4536, %v4535
    %v4547 = vpack.c.b16 %v4538, %v4537
    %v4548 = vpack.c.b16 %v4540, %v4539
    %4557 = vmatprep.subr.bf16.mxu0 0
    %4558 = vmatpush1.bf16.msra.mxu0 %v4541
    %4559 = vmatprep.subr.bf16.mxu0 0
    %4560 = vmatpush1.bf16.msra.mxu0 %v4542
    %4561 = vmatprep.subr.bf16.mxu0 0
    %4562 = vmatpush1.bf16.msra.mxu0 %v4543
    %4563 = vmatprep.subr.bf16.mxu0 0
    %4564 = vmatpush1.bf16.msra.mxu0 %v4544
    %4565 = vmatprep.subr.bf16.mxu0 0
    %4566 = vmatpush1.bf16.msra.mxu0 %v4545
    %4567 = vmatprep.subr.bf16.mxu0 0
    %4568 = vmatpush1.bf16.msra.mxu0 %v4546
    %4569 = vmatprep.subr.bf16.mxu0 0
    %4570 = vmatpush1.bf16.msra.mxu0 %v4547
    %4571 = vmatprep.subr.bf16.mxu0 0
    %4572 = vmatpush1.bf16.msra.mxu0 %v4548
    %4573 = vmatprep.subr.bf16.mxu0 0
    %4574 = vmatpush1.bf16.msra.mxu0 0
    %4575 = vmatprep.subr.bf16.mxu0 0
    %4576 = vmatpush1.bf16.msra.mxu0 0
    %4577 = vmatprep.subr.bf16.mxu0 0
    %4578 = vmatpush1.bf16.msra.mxu0 0
    %4579 = vmatprep.subr.bf16.mxu0 0
    %4580 = vmatpush1.bf16.msra.mxu0 0
    %4581 = vmatprep.subr.bf16.mxu0 0
    %4582 = vmatpush1.bf16.msra.mxu0 0
    %4583 = vmatprep.subr.bf16.mxu0 0
    %4584 = vmatpush1.bf16.msra.mxu0 0
    %4585 = vmatprep.subr.bf16.mxu0 0
    %4586 = vmatpush1.bf16.msra.mxu0 0
    %4587 = vmatprep.subr.bf16.mxu0 0
    %4588 = vmatpush1.bf16.msra.mxu0 0
    %4589 = vmatprep.mubr.bf16.mxu0 0
    %4590 = vmatmul.mubr.bf16.gmra.mrb[0].mxu0 %v4491
    %v4591 = vpop.f32.mrb[0].mxu0
    %v4592 = vadd.f32 0.0, %v4591
    %v4593 = vpop.f32.mrb[0].mxu0
    %v4594 = vpop.f32.mrb[0].mxu0
    %v4595 = vadd.f32 0.0, %v4594
    %v4596 = vpop.f32.mrb[0].mxu0
    %4597 = vdwg.mxu0
    %v4598 = vadd.f32 %v4483, %v4592
    %v4599 = vadd.f32 %v4486, %v4595
    %v4600 = vld [vmem:[%s17] sm:$0x1]
    %v4602 = vlaneseq
    %v4603 = vshrl.u32 %v4602, 7
    %v4604 = vsub.s32 0, %v4603
    %v4605 = vrot.slane %v4600, %v4604
    %v4607 = vadd.f32 %v4598, %v4605
    %v4608 = vadd.f32 %v4599, %v4605
    %v4609 = vadd.f32 %v4607, %v4291
    %v4610 = vadd.f32 %v4608, %v4292
    %v4611 = vmax.f32 %v4609, 0.0
    %v4612 = vmax.f32 %v4610, 0.0
    %4613 = vst [vmem:[#allocation3] sm:$0xff] 0.0
    %4614 = vst [vmem:[#allocation3] sm:$0xf] %v4611
    %4615 = vst [vmem:[#allocation3 - $0x2] sm:$0xc0] %v4611
    %4616 = vst [vmem:[#allocation3 + $0x6] sm:$0x3] %v4612
    %v4617 = vld [vmem:[#allocation3] sm:$0x3f]
    %v4618 = vpack.c.bf16 %v4617, %v4617
    %v4619 = vld [vmem:[%s9] sm:$0xf]
    %v4620 = vld [vmem:[%s9 + $0x4] sm:$0xf]
    %v4621 = vld [vmem:[%s9 + $0x8] sm:$0xf]
    %v4622 = vld [vmem:[%s9 + $0xc] sm:$0xf]
    %v4623 = vld [vmem:[%s9 + $0x10] sm:$0xf]
    %v4624 = vld [vmem:[%s9 + $0x14] sm:$0xf]
    %v4625 = vld [vmem:[%s9 + $0x18] sm:$0xf]
    %v4626 = vld [vmem:[%s9 + $0x1c] sm:$0xf]
    %v4627 = vld [vmem:[%s9 + $0x20] sm:$0xf]
    %v4628 = vld [vmem:[%s9 + $0x24] sm:$0xf]
    %v4629 = vld [vmem:[%s9 + $0x28] sm:$0xf]
    %v4630 = vld [vmem:[%s9 + $0x2c] sm:$0xf]
    %v4631 = vld [vmem:[%s9 + $0x30] sm:$0xf]
    %v4632 = vld [vmem:[%s9 + $0x34] sm:$0xf]
    %v4633 = vld [vmem:[%s9 + $0x38] sm:$0xf]
    %v4634 = vld [vmem:[%s9 + $0x3c] sm:$0xf]
    %v4635 = vld [vmem:[#allocation3 + $0x1] sm:$0x3f]
    %v4636 = vpack.c.bf16 %v4635, %v4635
    %s4637 = scalar_lea.vmem %s9, 64
    %v4638 = vld [vmem:[%s4637] sm:$0xf]
    %v4639 = vld [vmem:[%s4637 + $0x4] sm:$0xf]
    %v4640 = vld [vmem:[%s4637 + $0x8] sm:$0xf]
    %v4641 = vld [vmem:[%s4637 + $0xc] sm:$0xf]
    %v4642 = vld [vmem:[%s4637 + $0x10] sm:$0xf]
    %v4643 = vld [vmem:[%s4637 + $0x14] sm:$0xf]
    %v4644 = vld [vmem:[%s4637 + $0x18] sm:$0xf]
    %v4645 = vld [vmem:[%s4637 + $0x1c] sm:$0xf]
    %v4646 = vld [vmem:[%s4637 + $0x20] sm:$0xf]
    %v4647 = vld [vmem:[%s4637 + $0x24] sm:$0xf]
    %v4648 = vld [vmem:[%s4637 + $0x28] sm:$0xf]
    %v4649 = vld [vmem:[%s4637 + $0x2c] sm:$0xf]
    %v4650 = vld [vmem:[%s4637 + $0x30] sm:$0xf]
    %v4651 = vld [vmem:[%s4637 + $0x34] sm:$0xf]
    %v4652 = vld [vmem:[%s4637 + $0x38] sm:$0xf]
    %v4653 = vld [vmem:[%s4637 + $0x3c] sm:$0xf]
    %v4670 = vunpack.c.l.b16 %v4638
    %v4671 = vunpack.c.l.b16 %v4639
    %v4672 = vunpack.c.l.b16 %v4640
    %v4673 = vunpack.c.l.b16 %v4641
    %v4674 = vunpack.c.l.b16 %v4642
    %v4675 = vunpack.c.l.b16 %v4643
    %v4676 = vunpack.c.l.b16 %v4644
    %v4677 = vunpack.c.l.b16 %v4645
    %v4678 = vunpack.c.l.b16 %v4646
    %v4679 = vunpack.c.l.b16 %v4647
    %v4680 = vunpack.c.l.b16 %v4648
    %v4681 = vunpack.c.l.b16 %v4649
    %v4682 = vunpack.c.l.b16 %v4650
    %v4683 = vunpack.c.l.b16 %v4651
    %v4684 = vunpack.c.l.b16 %v4652
    %v4685 = vunpack.c.l.b16 %v4653
    %v4686 = vpack.c.b16 %v4671, %v4670
    %v4687 = vpack.c.b16 %v4673, %v4672
    %v4688 = vpack.c.b16 %v4675, %v4674
    %v4689 = vpack.c.b16 %v4677, %v4676
    %v4690 = vpack.c.b16 %v4679, %v4678
    %v4691 = vpack.c.b16 %v4681, %v4680
    %v4692 = vpack.c.b16 %v4683, %v4682
    %v4693 = vpack.c.b16 %v4685, %v4684
    %4702 = vmatprep.subr.bf16.mxu0 0
    %4703 = vmatpush1.bf16.msra.mxu0 %v4686
    %4704 = vmatprep.subr.bf16.mxu0 0
    %4705 = vmatpush1.bf16.msra.mxu0 %v4687
    %4706 = vmatprep.subr.bf16.mxu0 0
    %4707 = vmatpush1.bf16.msra.mxu0 %v4688
    %4708 = vmatprep.subr.bf16.mxu0 0
    %4709 = vmatpush1.bf16.msra.mxu0 %v4689
    %4710 = vmatprep.subr.bf16.mxu0 0
    %4711 = vmatpush1.bf16.msra.mxu0 %v4690
    %4712 = vmatprep.subr.bf16.mxu0 0
    %4713 = vmatpush1.bf16.msra.mxu0 %v4691
    %4714 = vmatprep.subr.bf16.mxu0 0
    %4715 = vmatpush1.bf16.msra.mxu0 %v4692
    %4716 = vmatprep.subr.bf16.mxu0 0
    %4717 = vmatpush1.bf16.msra.mxu0 %v4693
    %4718 = vmatprep.subr.bf16.mxu0 0
    %4719 = vmatpush1.bf16.msra.mxu0 0
    %4720 = vmatprep.subr.bf16.mxu0 0
    %4721 = vmatpush1.bf16.msra.mxu0 0
    %4722 = vmatprep.subr.bf16.mxu0 0
    %4723 = vmatpush1.bf16.msra.mxu0 0
    %4724 = vmatprep.subr.bf16.mxu0 0
    %4725 = vmatpush1.bf16.msra.mxu0 0
    %4726 = vmatprep.subr.bf16.mxu0 0
    %4727 = vmatpush1.bf16.msra.mxu0 0
    %4728 = vmatprep.subr.bf16.mxu0 0
    %4729 = vmatpush1.bf16.msra.mxu0 0
    %4730 = vmatprep.subr.bf16.mxu0 0
    %4731 = vmatpush1.bf16.msra.mxu0 0
    %4732 = vmatprep.subr.bf16.mxu0 0
    %4733 = vmatpush1.bf16.msra.mxu0 0
    %4734 = vmatprep.mubr.bf16.mxu0 0
    %4735 = vmatmul.mubr.bf16.gmra.mrb[0].mxu0 %v4636
    %v4736 = vpop.f32.mrb[0].mxu0
    %v4737 = vadd.f32 0.0, %v4736
    %v4738 = vpop.f32.mrb[0].mxu0
    %v4739 = vpop.f32.mrb[0].mxu0
    %v4740 = vpop.f32.mrb[0].mxu0
    %4741 = vdwg.mxu0
    %v4758 = vunpack.c.l.b16 %v4619
    %v4759 = vunpack.c.l.b16 %v4620
    %v4760 = vunpack.c.l.b16 %v4621
    %v4761 = vunpack.c.l.b16 %v4622
    %v4762 = vunpack.c.l.b16 %v4623
    %v4763 = vunpack.c.l.b16 %v4624
    %v4764 = vunpack.c.l.b16 %v4625
    %v4765 = vunpack.c.l.b16 %v4626
    %v4766 = vunpack.c.l.b16 %v4627
    %v4767 = vunpack.c.l.b16 %v4628
    %v4768 = vunpack.c.l.b16 %v4629
    %v4769 = vunpack.c.l.b16 %v4630
    %v4770 = vunpack.c.l.b16 %v4631
    %v4771 = vunpack.c.l.b16 %v4632
    %v4772 = vunpack.c.l.b16 %v4633
    %v4773 = vunpack.c.l.b16 %v4634
    %v4774 = vpack.c.b16 %v4759, %v4758
    %v4775 = vpack.c.b16 %v4761, %v4760
    %v4776 = vpack.c.b16 %v4763, %v4762
    %v4777 = vpack.c.b16 %v4765, %v4764
    %v4778 = vpack.c.b16 %v4767, %v4766
    %v4779 = vpack.c.b16 %v4769, %v4768
    %v4780 = vpack.c.b16 %v4771, %v4770
    %v4781 = vpack.c.b16 %v4773, %v4772
    %4790 = vmatprep.subr.bf16.mxu0 0
    %4791 = vmatpush1.bf16.msra.mxu0 %v4774
    %4792 = vmatprep.subr.bf16.mxu0 0
    %4793 = vmatpush1.bf16.msra.mxu0 %v4775
    %4794 = vmatprep.subr.bf16.mxu0 0
    %4795 = vmatpush1.bf16.msra.mxu0 %v4776
    %4796 = vmatprep.subr.bf16.mxu0 0
    %4797 = vmatpush1.bf16.msra.mxu0 %v4777
    %4798 = vmatprep.subr.bf16.mxu0 0
    %4799 = vmatpush1.bf16.msra.mxu0 %v4778
    %4800 = vmatprep.subr.bf16.mxu0 0
    %4801 = vmatpush1.bf16.msra.mxu0 %v4779
    %4802 = vmatprep.subr.bf16.mxu0 0
    %4803 = vmatpush1.bf16.msra.mxu0 %v4780
    %4804 = vmatprep.subr.bf16.mxu0 0
    %4805 = vmatpush1.bf16.msra.mxu0 %v4781
    %4806 = vmatprep.subr.bf16.mxu0 0
    %4807 = vmatpush1.bf16.msra.mxu0 0
    %4808 = vmatprep.subr.bf16.mxu0 0
    %4809 = vmatpush1.bf16.msra.mxu0 0
    %4810 = vmatprep.subr.bf16.mxu0 0
    %4811 = vmatpush1.bf16.msra.mxu0 0
    %4812 = vmatprep.subr.bf16.mxu0 0
    %4813 = vmatpush1.bf16.msra.mxu0 0
    %4814 = vmatprep.subr.bf16.mxu0 0
    %4815 = vmatpush1.bf16.msra.mxu0 0
    %4816 = vmatprep.subr.bf16.mxu0 0
    %4817 = vmatpush1.bf16.msra.mxu0 0
    %4818 = vmatprep.subr.bf16.mxu0 0
    %4819 = vmatpush1.bf16.msra.mxu0 0
    %4820 = vmatprep.subr.bf16.mxu0 0
    %4821 = vmatpush1.bf16.msra.mxu0 0
    %4822 = vmatprep.mubr.bf16.mxu0 0
    %4823 = vmatmul.mubr.bf16.gmra.mrb[0].mxu0 %v4618
    %v4824 = vpop.f32.mrb[0].mxu0
    %v4825 = vadd.f32 %v4737, %v4824
    %v4826 = vpop.f32.mrb[0].mxu0
    %v4827 = vpop.f32.mrb[0].mxu0
    %v4828 = vpop.f32.mrb[0].mxu0
    %4829 = vdwg.mxu0
    %v4830 = vld [vmem:[#allocation3 + $0x2] sm:$0x3f]
    %v4831 = vpack.c.bf16 %v4830, %v4830
    %s4832 = scalar_lea.vmem %s9, 128
    %v4833 = vld [vmem:[%s4832] sm:$0xf]
    %v4834 = vld [vmem:[%s4832 + $0x4] sm:$0xf]
    %v4835 = vld [vmem:[%s4832 + $0x8] sm:$0xf]
    %v4836 = vld [vmem:[%s4832 + $0xc] sm:$0xf]
    %v4837 = vld [vmem:[%s4832 + $0x10] sm:$0xf]
    %v4838 = vld [vmem:[%s4832 + $0x14] sm:$0xf]
    %v4839 = vld [vmem:[%s4832 + $0x18] sm:$0xf]
    %v4840 = vld [vmem:[%s4832 + $0x1c] sm:$0xf]
    %v4841 = vld [vmem:[%s4832 + $0x20] sm:$0xf]
    %v4842 = vld [vmem:[%s4832 + $0x24] sm:$0xf]
    %v4843 = vld [vmem:[%s4832 + $0x28] sm:$0xf]
    %v4844 = vld [vmem:[%s4832 + $0x2c] sm:$0xf]
    %v4845 = vld [vmem:[%s4832 + $0x30] sm:$0xf]
    %v4846 = vld [vmem:[%s4832 + $0x34] sm:$0xf]
    %v4847 = vld [vmem:[%s4832 + $0x38] sm:$0xf]
    %v4848 = vld [vmem:[%s4832 + $0x3c] sm:$0xf]
    %v4865 = vunpack.c.l.b16 %v4833
    %v4866 = vunpack.c.l.b16 %v4834
    %v4867 = vunpack.c.l.b16 %v4835
    %v4868 = vunpack.c.l.b16 %v4836
    %v4869 = vunpack.c.l.b16 %v4837
    %v4870 = vunpack.c.l.b16 %v4838
    %v4871 = vunpack.c.l.b16 %v4839
    %v4872 = vunpack.c.l.b16 %v4840
    %v4873 = vunpack.c.l.b16 %v4841
    %v4874 = vunpack.c.l.b16 %v4842
    %v4875 = vunpack.c.l.b16 %v4843
    %v4876 = vunpack.c.l.b16 %v4844
    %v4877 = vunpack.c.l.b16 %v4845
    %v4878 = vunpack.c.l.b16 %v4846
    %v4879 = vunpack.c.l.b16 %v4847
    %v4880 = vunpack.c.l.b16 %v4848
    %v4881 = vpack.c.b16 %v4866, %v4865
    %v4882 = vpack.c.b16 %v4868, %v4867
    %v4883 = vpack.c.b16 %v4870, %v4869
    %v4884 = vpack.c.b16 %v4872, %v4871
    %v4885 = vpack.c.b16 %v4874, %v4873
    %v4886 = vpack.c.b16 %v4876, %v4875
    %v4887 = vpack.c.b16 %v4878, %v4877
    %v4888 = vpack.c.b16 %v4880, %v4879
    %4897 = vmatprep.subr.bf16.mxu0 0
    %4898 = vmatpush1.bf16.msra.mxu0 %v4881
    %4899 = vmatprep.subr.bf16.mxu0 0
    %4900 = vmatpush1.bf16.msra.mxu0 %v4882
    %4901 = vmatprep.subr.bf16.mxu0 0
    %4902 = vmatpush1.bf16.msra.mxu0 %v4883
    %4903 = vmatprep.subr.bf16.mxu0 0
    %4904 = vmatpush1.bf16.msra.mxu0 %v4884
    %4905 = vmatprep.subr.bf16.mxu0 0
    %4906 = vmatpush1.bf16.msra.mxu0 %v4885
    %4907 = vmatprep.subr.bf16.mxu0 0
    %4908 = vmatpush1.bf16.msra.mxu0 %v4886
    %4909 = vmatprep.subr.bf16.mxu0 0
    %4910 = vmatpush1.bf16.msra.mxu0 %v4887
    %4911 = vmatprep.subr.bf16.mxu0 0
    %4912 = vmatpush1.bf16.msra.mxu0 %v4888
    %4913 = vmatprep.subr.bf16.mxu0 0
    %4914 = vmatpush1.bf16.msra.mxu0 0
    %4915 = vmatprep.subr.bf16.mxu0 0
    %4916 = vmatpush1.bf16.msra.mxu0 0
    %4917 = vmatprep.subr.bf16.mxu0 0
    %4918 = vmatpush1.bf16.msra.mxu0 0
    %4919 = vmatprep.subr.bf16.mxu0 0
    %4920 = vmatpush1.bf16.msra.mxu0 0
    %4921 = vmatprep.subr.bf16.mxu0 0
    %4922 = vmatpush1.bf16.msra.mxu0 0
    %4923 = vmatprep.subr.bf16.mxu0 0
    %4924 = vmatpush1.bf16.msra.mxu0 0
    %4925 = vmatprep.subr.bf16.mxu0 0
    %4926 = vmatpush1.bf16.msra.mxu0 0
    %4927 = vmatprep.subr.bf16.mxu0 0
    %4928 = vmatpush1.bf16.msra.mxu0 0
    %4929 = vmatprep.mubr.bf16.mxu0 0
    %4930 = vmatmul.mubr.bf16.gmra.mrb[0].mxu0 %v4831
    %v4931 = vpop.f32.mrb[0].mxu0
    %v4932 = vadd.f32 0.0, %v4931
    %v4933 = vpop.f32.mrb[0].mxu0
    %v4934 = vpop.f32.mrb[0].mxu0
    %v4935 = vpop.f32.mrb[0].mxu0
    %4936 = vdwg.mxu0
    %v4937 = vadd.f32 %v4825, %v4932
    %v4938 = vld [vmem:[%s18] sm:$0x1]
    %v4940 = vlaneseq
    %v4941 = vshrl.u32 %v4940, 7
    %v4942 = vsub.s32 0, %v4941
    %v4943 = vrot.slane %v4938, %v4942
    %v4945 = vadd.f32 %v4937, %v4943
    %v4946 = vmax.f32 %v4945, 0.0
    %4947 = vst [vmem:[#allocation4] sm:$0x3] %v4946
    %s4948 = scalar_lea.vmem [#allocation4], 2
    %4949 = vst [vmem:[%s4948 - $0x4] sm:$0x30] %v4946
    // Predicated region
    $region78: #{audio_encoder_w2v_impl.1} parent=1 // pred_check
      _
    $region79: #{audio_encoder_w2v_impl.1} parent=1 // pred_check_branch
      %4951 = sbr.rel (0) target = $region81
    $region80: #{audio_encoder_w2v_impl.1} parent=1 // pred_region
      %s4953 = ssub.s32 64, 64
      %4954 = vsyncadd [#allocation5], %s4953
      %s4955 = sshll.u32 [#allocation4], 4
      %s4956 = int_to_ptr.vmem [resolvable:$true] %s4955
      %4961 = dma.vmem_to_hbm [thread:$0]  %s4956, 64, %s19, [#allocation5], 32, 32, 2
    $region81: #{audio_encoder_w2v_impl.1} parent=1 // pred_fallthru
      _
    // Predicated region
    $region82: #{audio_encoder_w2v_impl.1} parent=1 // pred_check
      _
    $region83: #{audio_encoder_w2v_impl.1} parent=1 // pred_check_branch
      %4963 = sbr.rel (0) target = $region85
    $region84: #{audio_encoder_w2v_impl.1} parent=1 // pred_region
      %4964 = dma.done [#allocation5], 64
    $region85: #{audio_encoder_w2v_impl.1} parent=1 // pred_fallthru
      _
    %4965 = vsyncpa [#allocation5], 1

</llo_original>
